<compile_context>
chip_gen: v5e
topology: v5e:2x2
jax: 0.10.0
libtpu: 0.0.40
codegen_flags: <defaults>
</compile_context>

<pallas_src>
import functools
import math

import jax
import jax.numpy as jnp
import numpy as np
from jax import lax
from jax.experimental import pallas as pl
from jax.experimental.pallas import tpu as pltpu

EPS = 1e-5  # PyTorch BatchNorm default eps


# --------------------------------------------------------------------------
# Fused GEMM kernel: out = act(x @ w + bias [+ residual])
# x, w, residual: bf16; accumulation & epilogue: f32; out: bf16 or f32.
# --------------------------------------------------------------------------
def _mm_kernel(x_ref, w_ref, b_ref, o_ref, *, activation):
    y = jnp.dot(x_ref[...], w_ref[...], preferred_element_type=jnp.float32)
    y = y + b_ref[...]
    if activation == "relu":
        y = jnp.maximum(y, 0.0)
    o_ref[...] = y.astype(o_ref.dtype)


def _mm_res_kernel(x_ref, w_ref, b_ref, r_ref, o_ref, *, activation):
    y = jnp.dot(x_ref[...], w_ref[...], preferred_element_type=jnp.float32)
    y = y + b_ref[...] + r_ref[...].astype(jnp.float32)
    if activation == "relu":
        y = jnp.maximum(y, 0.0)
    o_ref[...] = y.astype(o_ref.dtype)


def matmul_bias_act(x, w, b, residual=None, activation="none",
                    out_dtype=jnp.bfloat16):
    """out = act(x @ w + b [+ residual]); x:(M,K), w:(K,N), b:(N,)."""
    M, K = x.shape
    K2, N = w.shape
    assert K == K2

    # MXU-shaped M tiles (multiple of 128 for all generations); K and N stay whole
    # per tile so the weight block is fetched once and the x slab is never re-read.
    if M % 256 == 0:
        tm = 256
    elif M % 128 == 0:
        tm = 128
    else:
        tm = min(M, 256)
    M_pad = ((M + tm - 1) // tm) * tm
    if M_pad % 8 != 0:                    # sublane alignment for a single small tile
        M_pad = ((M_pad + 7) // 8) * 8
        tm = M_pad

    x = x.astype(jnp.bfloat16)
    if M_pad != M:
        x = jnp.pad(x, ((0, M_pad - M), (0, 0)))
    w = w.astype(jnp.bfloat16)
    b2 = b.reshape(1, N).astype(jnp.float32)

    args = [x, w, b2]
    in_specs = [
        pl.BlockSpec((tm, K), lambda i: (i, 0)),
        pl.BlockSpec((K, N), lambda i: (0, 0)),
        pl.BlockSpec((1, N), lambda i: (0, 0)),
    ]
    if residual is not None:
        r = residual.astype(jnp.bfloat16)
        if M_pad != M:
            r = jnp.pad(r, ((0, M_pad - M), (0, 0)))
        args.append(r)
        in_specs.append(pl.BlockSpec((tm, N), lambda i: (i, 0)))
        kernel = functools.partial(_mm_res_kernel, activation=activation)
    else:
        kernel = functools.partial(_mm_kernel, activation=activation)

    out = pl.pallas_call(
        kernel,
        out_shape=jax.ShapeDtypeStruct((M_pad, N), out_dtype),
        grid=(M_pad // tm,),
        in_specs=in_specs,
        out_specs=pl.BlockSpec((tm, N), lambda i: (i, 0)),
        compiler_params=pltpu.CompilerParams(
            dimension_semantics=("parallel",),
            vmem_limit_bytes=32 * 1024 * 1024),
    )(*args)
    return out[:M] if M_pad != M else out


# --------------------------------------------------------------------------
# JAX glue: BN folding, 3-D im2col, conv / transposed-conv wrappers
# --------------------------------------------------------------------------
def fold_bn(w_mat, bias, gamma, beta, mean, var):
    """Fold inference BatchNorm following a linear op into (w_mat:(K,N), bias:(N,))."""
    scale = gamma / jnp.sqrt(var + EPS)
    return w_mat * scale[None, :], (bias - mean) * scale + beta


def im2col_3d(xp, out_spatial, stride):
    """xp: already-padded (B, Dp, Hp, Wp, C) -> (B*Do*Ho*Wo, 27*C), tap-major / channel-minor."""
    B, Dp, Hp, Wp, C = xp.shape
    Do, Ho, Wo = out_spatial
    cols = []
    for kd in range(3):
        for kh in range(3):
            for kw in range(3):
                cols.append(xp[:, kd:kd + (Do - 1) * stride + 1:stride,
                                  kh:kh + (Ho - 1) * stride + 1:stride,
                                  kw:kw + (Wo - 1) * stride + 1:stride, :])
    patches = jnp.concatenate(cols, axis=-1)
    return patches.reshape(B * Do * Ho * Wo, 27 * C)


def conv3d_bn_act(x, w_t, bn, stride, activation, residual=None,
                  out_dtype=jnp.bfloat16):
    """Conv3d(k=3, pad=1, bias=False) + folded BN3d + activation.
    x: (B, D, H, W, C) bf16;  w_t: torch layout (Cout, Cin, 3, 3, 3)."""
    B, Di, Hi, Wi, C = x.shape
    Cout = w_t.shape[0]
    Do, Ho, Wo = (Di - 1) // stride + 1, (Hi - 1) // stride + 1, (Wi - 1) // stride + 1
    xp = jnp.pad(x, ((0, 0), (1, 1), (1, 1), (1, 1), (0, 0)))
    patches = im2col_3d(xp, (Do, Ho, Wo), stride)                     # bf16
    wmat = jnp.transpose(w_t, (2, 3, 4, 1, 0)).reshape(27 * C, Cout)  # (kd,kh,kw,Cin)->Cout
    wmat, bias = fold_bn(wmat, jnp.zeros((Cout,), jnp.float32), **bn)
    r = None if residual is None else residual.reshape(-1, Cout)
    out = matmul_bias_act(patches, wmat, bias, residual=r,
                          activation=activation, out_dtype=out_dtype)
    return out.reshape(B, Do, Ho, Wo, Cout)


def convT3d_bn_act(x, w_t, bn, activation="none", residual=None,
                   out_dtype=jnp.bfloat16):
    """ConvTranspose3d(k=3, stride=2, pad=1, output_padding=1, bias=False) + folded BN3d.
    x: (B, D, H, W, C) bf16;  w_t: torch layout (Cin, Cout, 3, 3, 3).  Output spatial = 2x."""
    B, Di, Hi, Wi, C = x.shape
    Cout = w_t.shape[1]
    Do, Ho, Wo = 2 * Di, 2 * Hi, 2 * Wi
    # zero-dilate by stride 2, pad (lo=1, hi=1+output_padding=2), then regular conv
    # with the spatially-flipped kernel.
    xd = jnp.zeros((B, 2 * Di - 1, 2 * Hi - 1, 2 * Wi - 1, C), x.dtype)
    xd = xd.at[:, ::2, ::2, ::2, :].set(x)
    xp = jnp.pad(xd, ((0, 0), (1, 2), (1, 2), (1, 2), (0, 0)))
    patches = im2col_3d(xp, (Do, Ho, Wo), 1)
    wf = jnp.flip(w_t, axis=(2, 3, 4))
    wmat = jnp.transpose(wf, (2, 3, 4, 0, 1)).reshape(27 * C, Cout)
    wmat, bias = fold_bn(wmat, jnp.zeros((Cout,), jnp.float32), **bn)
    r = None if residual is None else residual.reshape(-1, Cout)
    out = matmul_bias_act(patches, wmat, bias, residual=r,
                          activation=activation, out_dtype=out_dtype)
    return out.reshape(B, Do, Ho, Wo, Cout)


# --------------------------------------------------------------------------
# Parameters (deterministic, mirroring the module __init__ shapes / init rules)
# --------------------------------------------------------------------------
def init_params(key, hg=True):
    keys = iter(jax.random.split(key, 16))

    def conv_w(cout, cin):           # Conv3d: N(0, sqrt(2/n)), n = 3*3*3*out_channels
        n = 27 * cout
        return jax.random.normal(next(keys), (cout, cin, 3, 3, 3), jnp.float32) * math.sqrt(2.0 / n)

    def convT_w(cin, cout):          # ConvTranspose3d weight layout (Cin, Cout, 3,3,3)
        n = 27 * cout
        return jax.random.normal(next(keys), (cin, cout, 3, 3, 3), jnp.float32) * math.sqrt(2.0 / n)

    def bn(c):                       # BatchNorm3d: gamma=1, beta=0, running mean=0, var=1
        return dict(gamma=jnp.ones((c,), jnp.float32), beta=jnp.zeros((c,), jnp.float32),
                    mean=jnp.zeros((c,), jnp.float32), var=jnp.ones((c,), jnp.float32))

    p = {}
    if hg:
        p["w1a"] = conv_w(64, 96);    p["bn1a"] = bn(64)
        p["w1b"] = conv_w(128, 64);   p["bn1b"] = bn(128)
        p["w2a"] = conv_w(128, 128);  p["bn2a"] = bn(128)
        p["w2b"] = conv_w(128, 128);  p["bn2b"] = bn(128)
        p["w3"] = convT_w(128, 128);  p["bn3"] = bn(128)
        p["w4"] = convT_w(128, 64);   p["bn4"] = bn(64)
    else:
        p["w1a"] = conv_w(64, 96);    p["bn1a"] = bn(64)
        p["w1b"] = conv_w(64, 64);    p["bn1b"] = bn(64)
        p["w2a"] = conv_w(64, 64);    p["bn2a"] = bn(64)
        p["w2b"] = conv_w(64, 64);    p["bn2b"] = bn(64)
    return p


# --------------------------------------------------------------------------
# cost_volume.forward  (Pallas kernels for all conv GEMMs)
# --------------------------------------------------------------------------
def cost_volume_forward(params, cost, hg=True):
    # cost: (B, 96, D, H, W) NCDHW f32  (as in PyTorch)
    x = jnp.transpose(cost, (0, 2, 3, 4, 1)).astype(jnp.bfloat16)   # channel-last
    if hg:
        c = conv3d_bn_act(x, params["w1a"], params["bn1a"], 1, "relu")
        cost0 = conv3d_bn_act(c, params["w1b"], params["bn1b"], 2, "relu")     # dres1
        c = conv3d_bn_act(cost0, params["w2a"], params["bn2a"], 2, "relu")
        c = conv3d_bn_act(c, params["w2b"], params["bn2b"], 1, "relu")         # dres2
        # dres3(cost) + cost0 : residual add fused into the transposed-conv epilogue
        c = convT3d_bn_act(c, params["w3"], params["bn3"], "none", residual=cost0)
        c = convT3d_bn_act(c, params["w4"], params["bn4"], "none",
                           out_dtype=jnp.float32)                              # dres4
    else:
        c = conv3d_bn_act(x, params["w1a"], params["bn1a"], 1, "relu")
        c = conv3d_bn_act(c, params["w1b"], params["bn1b"], 2, "relu")         # dres1
        c = conv3d_bn_act(c, params["w2a"], params["bn2a"], 2, "relu")
        c = conv3d_bn_act(c, params["w2b"], params["bn2b"], 1, "none",
                          out_dtype=jnp.float32)                               # dres2 (no ReLU)
    return jnp.transpose(c, (0, 4, 1, 2, 3))                                   # back to NCDHW


# --------------------------------------------------------------------------
# Pure-JAX f32 reference for correctness checking
# --------------------------------------------------------------------------
def reference_forward(params, cost, hg=True):
    def bn(y, p):
        return (y - p["mean"]) / jnp.sqrt(p["var"] + EPS) * p["gamma"] + p["beta"]

    hi = lax.Precision.HIGHEST
    dn = ("NDHWC", "DHWIO", "NDHWC")

    def conv(x, w_t, stride):
        w = jnp.transpose(w_t, (2, 3, 4, 1, 0))
        return lax.conv_general_dilated(x, w, (stride,) * 3, [(1, 1)] * 3,
                                        dimension_numbers=dn, precision=hi)

    def convT(x, w_t):
        wf = jnp.transpose(jnp.flip(w_t, (2, 3, 4)), (2, 3, 4, 0, 1))
        return lax.conv_general_dilated(x, wf, (1, 1, 1), [(1, 2)] * 3,
                                        lhs_dilation=(2, 2, 2),
                                        dimension_numbers=dn, precision=hi)

    x = jnp.transpose(cost, (0, 2, 3, 4, 1))
    if hg:
        c = jax.nn.relu(bn(conv(x, params["w1a"], 1), params["bn1a"]))
        cost0 = jax.nn.relu(bn(conv(c, params["w1b"], 2), params["bn1b"]))
        c = jax.nn.relu(bn(conv(cost0, params["w2a"], 2), params["bn2a"]))
        c = jax.nn.relu(bn(conv(c, params["w2b"], 1), params["bn2b"]))
        c = bn(convT(c, params["w3"]), params["bn3"]) + cost0
        c = bn(convT(c, params["w4"]), params["bn4"])
    else:
        c = jax.nn.relu(bn(conv(x, params["w1a"], 1), params["bn1a"]))
        c = jax.nn.relu(bn(conv(c, params["w1b"], 2), params["bn1b"]))
        c = jax.nn.relu(bn(conv(c, params["w2a"], 2), params["bn2a"]))
        c = bn(conv(c, params["w2b"], 1), params["bn2b"])
    return jnp.transpose(c, (0, 4, 1, 2, 3))


if __name__ == "__main__":
    key = jax.random.PRNGKey(0)
    B, Cin, D, H, W = 2, 96, 8, 8, 8
    pkey, xkey = jax.random.split(key)
    cost = jax.random.normal(xkey, (B, Cin, D, H, W), jnp.float32)

    for hg in (True, False):
        params = init_params(jax.random.fold_in(pkey, int(hg)), hg=hg)
        out = jax.block_until_ready(cost_volume_forward(params, cost, hg=hg))
        ref = jax.block_until_ready(reference_forward(params, cost, hg=hg))
        np.testing.assert_allclose(np.asarray(out), np.asarray(ref),
                                   rtol=3e-2, atol=3e-2)
        expected = (B, 64, D, H, W) if hg else (B, 64, D // 4, H // 4, W // 4)
        assert out.shape == expected, (out.shape, expected)

    print("KERNEL_OK")
</pallas_src>

<mosaic_0001>
module attributes {stable_mosaic.version = 11 : i64} {
  func.func @_mm_kernel(%arg0: i32, %arg1: memref<256x2592xbf16, #tpu.memory_space<vmem>>, %arg2: memref<2592x64xbf16, #tpu.memory_space<vmem>>, %arg3: memref<1x64xf32, #tpu.memory_space<vmem>>, %arg4: memref<256x64xbf16, #tpu.memory_space<vmem>>) attributes {dimension_semantics = [#tpu.dimension_semantics<parallel>], iteration_bounds = array<i64: 4>, scalar_prefetch = 0 : i64, scratch_operands = 0 : i64, tpu.core_type = #tpu.core_type<tc>, window_params = [{transform_indices = @transform_0, window_bounds = array<i64: 256, 2592>}, {pipeline_mode = #tpu.pipeline_mode<synchronous>, transform_indices = @transform_1, window_bounds = array<i64: 2592, 64>}, {pipeline_mode = #tpu.pipeline_mode<synchronous>, transform_indices = @transform_2, window_bounds = array<i64: 1, 64>}, {transform_indices = @transform_3, window_bounds = array<i64: 256, 64>}]} {
    %c0 = arith.constant 0 : index
    %c0_0 = arith.constant 0 : index
    %0 = vector.load %arg1[%c0, %c0_0] : memref<256x2592xbf16, #tpu.memory_space<vmem>>, vector<256x2592xbf16>
    %c0_1 = arith.constant 0 : index
    %c0_2 = arith.constant 0 : index
    %1 = vector.load %arg2[%c0_1, %c0_2] : memref<2592x64xbf16, #tpu.memory_space<vmem>>, vector<2592x64xbf16>
    %cst = arith.constant dense<0.000000e+00> : vector<256x64xf32>
    %2 = tpu.matmul %0, %1, %cst {dimension_numbers = #tpu.dot_dimension_numbers<[1], [0], [0], [1], [0, 0, 1, 1], [], []>} : vector<256x2592xbf16>, vector<2592x64xbf16>, vector<256x64xf32> -> vector<256x64xf32>
    %c0_3 = arith.constant 0 : index
    %c0_4 = arith.constant 0 : index
    %3 = vector.load %arg3[%c0_3, %c0_4] : memref<1x64xf32, #tpu.memory_space<vmem>>, vector<1x64xf32>
    %4 = vector.broadcast %3 : vector<1x64xf32> to vector<256x64xf32>
    %5 = arith.addf %2, %4 : vector<256x64xf32>
    %cst_5 = arith.constant 0.000000e+00 : f32
    %6 = vector.broadcast %cst_5 : f32 to vector<256x64xf32>
    %7 = arith.maximumf %5, %6 : vector<256x64xf32>
    %8 = arith.truncf %7 : vector<256x64xf32> to vector<256x64xbf16>
    %c0_6 = arith.constant 0 : index
    %c0_7 = arith.constant 0 : index
    %9 = vector.load %arg4[%c0_6, %c0_7] : memref<256x64xbf16, #tpu.memory_space<vmem>>, vector<256x64xbf16>
    tpu.vector_store %arg4[%c0_6, %c0_7], %8 {strides = array<i32>} : memref<256x64xbf16, #tpu.memory_space<vmem>>, vector<256x64xbf16>,
    return
  }
  func.func @transform_0(%arg0: i32) -> (i32, i32) {
    %c0_i32 = arith.constant 0 : i32
    %c0_i32_0 = arith.constant 0 : i32
    return %arg0, %c0_i32 : i32, i32
  }
  func.func @transform_1(%arg0: i32) -> (i32, i32) {
    %c0_i32 = arith.constant 0 : i32
    %c0_i32_0 = arith.constant 0 : i32
    %c0_i32_1 = arith.constant 0 : i32
    return %c0_i32, %c0_i32_0 : i32, i32
  }
  func.func @transform_2(%arg0: i32) -> (i32, i32) {
    %c0_i32 = arith.constant 0 : i32
    %c0_i32_0 = arith.constant 0 : i32
    %c0_i32_1 = arith.constant 0 : i32
    return %c0_i32, %c0_i32_0 : i32, i32
  }
  func.func @transform_3(%arg0: i32) -> (i32, i32) {
    %c0_i32 = arith.constant 0 : i32
    %c0_i32_0 = arith.constant 0 : i32
    return %arg0, %c0_i32 : i32, i32
  }
}

</mosaic_0001>

<llo_original>
// kernel: tpu_custom_call.1
$region0: #{tpu_custom_call.1}
  #allocation0 [shape = 'u32[]', space=smem, size = 0x4, offset = 0x4, fixed_abs, tag = 'smem constant byte address 0x4 - core index']
  #allocation1 [shape = 'u32[72,128]{1,0:T(1,128)}', space=vmem, size = 0x9000, scoped, tag = 'internal scratch']
  %s0 = inlined_call_operand.vmem [shape: bf16[1024,2592], index: 0, kind: input, shape index: {}]
  %s1 = inlined_call_operand.vmem [shape: bf16[2592,64], index: 1, kind: input, shape index: {}]
  %s2 = inlined_call_operand.vmem [shape: f32[1,64], index: 2, kind: input, shape index: {}]
  %s3 = inlined_call_operand.vmem [shape: bf16[1024,64], index: 3, kind: output, shape index: {}]
  %s4 = sld [smem:[#allocation0]]
  $region45: #{tpu_custom_call.1} parent=0
    _
  %s6 = ssub.s32 1, %s4
  %s7 = scalar_select 0, %s6, %s4
  loop: start=0, step=1, limit=6
  $region2: #{tpu_custom_call.1} parent=0 // loop_pre_header
    _
  $region3: #{tpu_custom_call.1} parent=0 // loop_header
    %s9 = sphi 0, %s13
    %p10 = scmp.ge.s32.totalorder %s9, 6
    %s19 = sphi 0, %s21
    %s22 = sphi 0, %s19
    %s23 = sphi 0, %s22
    %s39 = sphi 0, %s23
    %s43 = sphi 0, %s43
    %s45 = sphi 0, %s43
    %s46 = sphi 0, %s45
    %s60 = sphi 0, %s46
    %s64 = sphi 0, %s64
    %s66 = sphi 0, %s64
    %s67 = sphi 0, %s66
    %s81 = sphi 0, %s67
    %s87 = sphi 0, %s89
    %s90 = sphi 0, %s87
    %s91 = sphi 0, %s90
    %s107 = sphi 0, %s91
  $region4: #{tpu_custom_call.1} parent=0 // loop_header_branch
    %12 = sbr.rel (%p10) target = $region8
  $region5: #{tpu_custom_call.1} parent=0 // loop_body
    %s14 = ssub.s32 %s9, 1
    %s15 = ssub.s32 %s9, 2
    %s16 = sadd.s32 %s9, 1
    %s17 = ssub.s32 %s9, %s16
    %p18 = scmp.eq.s32.totalorder %s17, 0
    %s20 = sadd.s32 %s19, 1
    %s21 = scalar_select %p18, %s19, %s20
    %p24 = pneg %p18
    %p25 = scmp.eq.s32.totalorder %s9, 3
    %p26 = por %p24, %p25
    %p27 = scmp.ne.s32.totalorder %s19, %s22
    %p28 = scmp.eq.s32.totalorder %s9, 0
    %p29 = por %p27, %p28
    %p30 = scmp.ne.s32.totalorder %s19, %s22
    %p31 = scmp.eq.s32.totalorder %s14, 3
    %p32 = por %p30, %p31
    %p33 = scmp.ne.s32.totalorder %s22, %s23
    %p34 = scmp.eq.s32.totalorder %s14, 0
    %p35 = por %p33, %p34
    %p36 = scmp.ne.s32.totalorder %s22, %s23
    %p37 = scmp.eq.s32.totalorder %s15, 3
    %p38 = por %p36, %p37
    %p40 = scmp.ne.s32.totalorder %s23, %s39
    %p41 = scmp.eq.s32.totalorder %s15, 0
    %p42 = por %p40, %p41
    %s44 = sadd.s32 %s43, 1
    %p47 = scmp.eq.s32.totalorder %s9, 3
    %p48 = scmp.ne.s32.totalorder %s43, %s45
    %p49 = scmp.eq.s32.totalorder %s9, 0
    %p50 = por %p48, %p49
    %p51 = scmp.ne.s32.totalorder %s43, %s45
    %p52 = scmp.eq.s32.totalorder %s14, 3
    %p53 = por %p51, %p52
    %p54 = scmp.ne.s32.totalorder %s45, %s46
    %p55 = scmp.eq.s32.totalorder %s14, 0
    %p56 = por %p54, %p55
    %p57 = scmp.ne.s32.totalorder %s45, %s46
    %p58 = scmp.eq.s32.totalorder %s15, 3
    %p59 = por %p57, %p58
    %p61 = scmp.ne.s32.totalorder %s46, %s60
    %p62 = scmp.eq.s32.totalorder %s15, 0
    %p63 = por %p61, %p62
    %s65 = sadd.s32 %s64, 1
    %p68 = scmp.eq.s32.totalorder %s9, 3
    %p69 = scmp.ne.s32.totalorder %s64, %s66
    %p70 = scmp.eq.s32.totalorder %s9, 0
    %p71 = por %p69, %p70
    %p72 = scmp.ne.s32.totalorder %s64, %s66
    %p73 = scmp.eq.s32.totalorder %s14, 3
    %p74 = por %p72, %p73
    %p75 = scmp.ne.s32.totalorder %s66, %s67
    %p76 = scmp.eq.s32.totalorder %s14, 0
    %p77 = por %p75, %p76
    %p78 = scmp.ne.s32.totalorder %s66, %s67
    %p79 = scmp.eq.s32.totalorder %s15, 3
    %p80 = por %p78, %p79
    %p82 = scmp.ne.s32.totalorder %s67, %s81
    %p83 = scmp.eq.s32.totalorder %s15, 0
    %p84 = por %p82, %p83
    %s85 = ssub.s32 %s9, %s16
    %p86 = scmp.eq.s32.totalorder %s85, 0
    %s88 = sadd.s32 %s87, 1
    %s89 = scalar_select %p86, %s87, %s88
    %p92 = pneg %p86
    %p93 = scmp.eq.s32.totalorder %s9, 3
    %p94 = por %p92, %p93
    %p95 = scmp.ne.s32.totalorder %s87, %s90
    %p96 = scmp.eq.s32.totalorder %s9, 0
    %p97 = por %p95, %p96
    %p98 = scmp.ne.s32.totalorder %s87, %s90
    %p99 = scmp.eq.s32.totalorder %s14, 3
    %p100 = por %p98, %p99
    %p101 = scmp.ne.s32.totalorder %s90, %s91
    %p102 = scmp.eq.s32.totalorder %s14, 0
    %p103 = por %p101, %p102
    %p104 = scmp.ne.s32.totalorder %s90, %s91
    %p105 = scmp.eq.s32.totalorder %s15, 3
    %p106 = por %p104, %p105
    %p108 = scmp.ne.s32.totalorder %s91, %s107
    %p109 = scmp.eq.s32.totalorder %s15, 0
    %p110 = por %p108, %p109
    %p111 = scmp.le.s32.totalorder 1, %s9
    %p112 = scmp.lt.s32.totalorder %s9, 5
    %p113 = pnand %p111, %p112
    %p114 = pneg %p113
    // Predicated region
    $region9: #{tpu_custom_call.1} parent=5 // pred_check
      _
    $region10: #{tpu_custom_call.1} parent=5 // pred_check_branch
      %116 = sbr.rel (%p113) target = $region12
    $region11: #{tpu_custom_call.1} parent=5 // pred_region
      %s117 = ssub.s32 %s9, 1
      // Predicated region
      $region13: #{tpu_custom_call.1} parent=11 // pred_check
        %p118 = pneg %p56
      $region14: #{tpu_custom_call.1} parent=11 // pred_check_branch
        %120 = sbr.rel (%p118) target = $region16
      $region15: #{tpu_custom_call.1} parent=11 // pred_region
        _
      $region16: #{tpu_custom_call.1} parent=11 // pred_fallthru
        _
      // Predicated region
      $region17: #{tpu_custom_call.1} parent=11 // pred_check
        %p121 = pneg %p77
      $region18: #{tpu_custom_call.1} parent=11 // pred_check_branch
        %123 = sbr.rel (%p121) target = $region20
      $region19: #{tpu_custom_call.1} parent=11 // pred_region
        _
      $region20: #{tpu_custom_call.1} parent=11 // pred_fallthru
        _
    $region12: #{tpu_custom_call.1} parent=5 // pred_fallthru
      _
    %p124 = scmp.lt.s32.totalorder %s9, 4
    // Predicated region
    $region21: #{tpu_custom_call.1} parent=5 // pred_check
      %p125 = pneg %p124
    $region22: #{tpu_custom_call.1} parent=5 // pred_check_branch
      %127 = sbr.rel (%p125) target = $region24
    $region23: #{tpu_custom_call.1} parent=5 // pred_region
      // Predicated region
      $region25: #{tpu_custom_call.1} parent=23 // pred_check
        %p128 = pneg %p29
      $region26: #{tpu_custom_call.1} parent=23 // pred_check_branch
        %130 = sbr.rel (%p128) target = $region28
      $region27: #{tpu_custom_call.1} parent=23 // pred_region
        %s131 = smul.u32 32, %s9
        %p132 = scmp.lt.s32.totalorder %s131, 127
        %s133 = scalar_select %p132, %s131, 127
        %s134 = smul.addr %s133, 21
        %s135 = smul.addr %s134, 4
        %s136 = scalar_lea.vmem %s0, %s135
        %s137 = smul.u32 32, %s9
      $region28: #{tpu_custom_call.1} parent=23 // pred_fallthru
        _
    $region24: #{tpu_custom_call.1} parent=5 // pred_fallthru
      _
    %p138 = scmp.le.s32.totalorder 1, %s9
    %p139 = scmp.lt.s32.totalorder %s9, 5
    %p140 = pnand %p138, %p139
    %p141 = pneg %p140
    // Predicated region
    $region29: #{tpu_custom_call.1} parent=5 // pred_check
      _
    $region30: #{tpu_custom_call.1} parent=5 // pred_check_branch
      %143 = sbr.rel (%p140) target = $region32
    $region31: #{tpu_custom_call.1} parent=5 // pred_region
      %s144 = ssub.s32 %s9, 1
      %s145 = smul.u32 32, %s14
      %p146 = scmp.lt.s32.totalorder %s145, 127
      %s147 = scalar_select %p146, %s145, 127
      %s148 = smul.addr %s147, 21
      %s149 = smul.addr %s148, 4
      %s150 = scalar_lea.vmem %s0, %s149
      %p151 = pneg %p35
      %p152 = pneg %p32
      %p153 = pneg %p56
      %p154 = pneg %p53
      %p155 = pneg %p77
      %p156 = pneg %p74
      %p157 = pneg %p103
      %p158 = pneg %p100
      %s159 = smul.u32 32, %s14
      %p160 = scmp.lt.s32.totalorder %s159, 127
      %s161 = scalar_select %p160, %s159, 127
      %s162 = smul.addr %s161, 4
      %s163 = scalar_lea.vmem %s3, %s162
      %s164 = smul.u32 32, %s14
      %p165 = scmp.lt.s32.totalorder %s164, 127
      %s166 = scalar_select %p165, %s164, 127
      %s167 = smul.addr %s166, 21
      %s168 = smul.addr %s167, 4
      %s169 = scalar_lea.vmem %s0, %s168
      %s170 = smul.u32 32, %s14
      %s171 = smul.u32 32, %s14
      %p172 = scmp.lt.s32.totalorder %s171, 127
      %s173 = scalar_select %p172, %s171, 127
      %s174 = smul.addr %s173, 4
      %s175 = scalar_lea.vmem %s3, %s174
      %s176 = smul.u32 32, %s14
      %v178 = vld [vmem:[%s169] sm:$0xff]
      %v179 = vld [vmem:[%s169 + $0x8] sm:$0xff]
      %v180 = vld [vmem:[%s169 + $0x10] sm:$0xff]
      %v181 = vld [vmem:[%s169 + $0x18] sm:$0xff]
      %v182 = vld [vmem:[%s169 + $0x20] sm:$0xff]
      %v183 = vld [vmem:[%s169 + $0x28] sm:$0xff]
      %v184 = vld [vmem:[%s169 + $0x30] sm:$0xff]
      %v185 = vld [vmem:[%s169 + $0x38] sm:$0xff]
      %v186 = vld [vmem:[%s169 + $0x40] sm:$0xff]
      %v187 = vld [vmem:[%s169 + $0x48] sm:$0xff]
      %v188 = vld [vmem:[%s169 + $0x50] sm:$0xf]
      %v189 = vld [vmem:[%s169 + $0x54] sm:$0xff]
      %v190 = vld [vmem:[%s169 + $0x5c] sm:$0xff]
      %v191 = vld [vmem:[%s169 + $0x64] sm:$0xff]
      %v192 = vld [vmem:[%s169 + $0x6c] sm:$0xff]
      %v193 = vld [vmem:[%s169 + $0x74] sm:$0xff]
      %v194 = vld [vmem:[%s169 + $0x7c] sm:$0xff]
      %v195 = vld [vmem:[%s169 + $0x84] sm:$0xff]
      %v196 = vld [vmem:[%s169 + $0x8c] sm:$0xff]
      %v197 = vld [vmem:[%s169 + $0x94] sm:$0xff]
      %v198 = vld [vmem:[%s169 + $0x9c] sm:$0xff]
      %v199 = vld [vmem:[%s169 + $0xa4] sm:$0xf]
      %v200 = vld [vmem:[%s169 + $0xa8] sm:$0xff]
      %v201 = vld [vmem:[%s169 + $0xb0] sm:$0xff]
      %v202 = vld [vmem:[%s169 + $0xb8] sm:$0xff]
      %v203 = vld [vmem:[%s169 + $0xc0] sm:$0xff]
      %v204 = vld [vmem:[%s169 + $0xc8] sm:$0xff]
      %v205 = vld [vmem:[%s169 + $0xd0] sm:$0xff]
      %v206 = vld [vmem:[%s169 + $0xd8] sm:$0xff]
      %v207 = vld [vmem:[%s169 + $0xe0] sm:$0xff]
      %v208 = vld [vmem:[%s169 + $0xe8] sm:$0xff]
      %v209 = vld [vmem:[%s169 + $0xf0] sm:$0xff]
      %v210 = vld [vmem:[%s169 + $0xf8] sm:$0xf]
      %v211 = vld [vmem:[%s169 + $0xfc] sm:$0xff]
      %v212 = vld [vmem:[%s169 + $0x104] sm:$0xff]
      %v213 = vld [vmem:[%s169 + $0x10c] sm:$0xff]
      %v214 = vld [vmem:[%s169 + $0x114] sm:$0xff]
      %v215 = vld [vmem:[%s169 + $0x11c] sm:$0xff]
      %v216 = vld [vmem:[%s169 + $0x124] sm:$0xff]
      %v217 = vld [vmem:[%s169 + $0x12c] sm:$0xff]
      %v218 = vld [vmem:[%s169 + $0x134] sm:$0xff]
      %v219 = vld [vmem:[%s169 + $0x13c] sm:$0xff]
      %v220 = vld [vmem:[%s169 + $0x144] sm:$0xff]
      %v221 = vld [vmem:[%s169 + $0x14c] sm:$0xf]
      %v222 = vld [vmem:[%s169 + $0x150] sm:$0xff]
      %v223 = vld [vmem:[%s169 + $0x158] sm:$0xff]
      %v224 = vld [vmem:[%s169 + $0x160] sm:$0xff]
      %v225 = vld [vmem:[%s169 + $0x168] sm:$0xff]
      %v226 = vld [vmem:[%s169 + $0x170] sm:$0xff]
      %v227 = vld [vmem:[%s169 + $0x178] sm:$0xff]
      %v228 = vld [vmem:[%s169 + $0x180] sm:$0xff]
      %v229 = vld [vmem:[%s169 + $0x188] sm:$0xff]
      %v230 = vld [vmem:[%s169 + $0x190] sm:$0xff]
      %v231 = vld [vmem:[%s169 + $0x198] sm:$0xff]
      %v232 = vld [vmem:[%s169 + $0x1a0] sm:$0xf]
      %v233 = vld [vmem:[%s169 + $0x1a4] sm:$0xff]
      %v234 = vld [vmem:[%s169 + $0x1ac] sm:$0xff]
      %v235 = vld [vmem:[%s169 + $0x1b4] sm:$0xff]
      %v236 = vld [vmem:[%s169 + $0x1bc] sm:$0xff]
      %v237 = vld [vmem:[%s169 + $0x1c4] sm:$0xff]
      %v238 = vld [vmem:[%s169 + $0x1cc] sm:$0xff]
      %v239 = vld [vmem:[%s169 + $0x1d4] sm:$0xff]
      %v240 = vld [vmem:[%s169 + $0x1dc] sm:$0xff]
      %v241 = vld [vmem:[%s169 + $0x1e4] sm:$0xff]
      %v242 = vld [vmem:[%s169 + $0x1ec] sm:$0xff]
      %v243 = vld [vmem:[%s169 + $0x1f4] sm:$0xf]
      %v244 = vld [vmem:[%s169 + $0x1f8] sm:$0xff]
      %v245 = vld [vmem:[%s169 + $0x200] sm:$0xff]
      %v246 = vld [vmem:[%s169 + $0x208] sm:$0xff]
      %v247 = vld [vmem:[%s169 + $0x210] sm:$0xff]
      %v248 = vld [vmem:[%s169 + $0x218] sm:$0xff]
      %v249 = vld [vmem:[%s169 + $0x220] sm:$0xff]
      %v250 = vld [vmem:[%s169 + $0x228] sm:$0xff]
      %v251 = vld [vmem:[%s169 + $0x230] sm:$0xff]
      %v252 = vld [vmem:[%s169 + $0x238] sm:$0xff]
      %v253 = vld [vmem:[%s169 + $0x240] sm:$0xff]
      %v254 = vld [vmem:[%s169 + $0x248] sm:$0xf]
      %v255 = vld [vmem:[%s169 + $0x24c] sm:$0xff]
      %v256 = vld [vmem:[%s169 + $0x254] sm:$0xff]
      %v257 = vld [vmem:[%s169 + $0x25c] sm:$0xff]
      %v258 = vld [vmem:[%s169 + $0x264] sm:$0xff]
      %v259 = vld [vmem:[%s169 + $0x26c] sm:$0xff]
      %v260 = vld [vmem:[%s169 + $0x274] sm:$0xff]
      %v261 = vld [vmem:[%s169 + $0x27c] sm:$0xff]
      %v262 = vld [vmem:[%s169 + $0x284] sm:$0xff]
      %v263 = vld [vmem:[%s169 + $0x28c] sm:$0xff]
      %v264 = vld [vmem:[%s169 + $0x294] sm:$0xff]
      %v265 = vld [vmem:[%s169 + $0x29c] sm:$0xf]
      %v266 = vld [vmem:[%s169 + $0x2a0] sm:$0xff]
      %v267 = vld [vmem:[%s169 + $0x2a8] sm:$0xff]
      %v268 = vld [vmem:[%s169 + $0x2b0] sm:$0xff]
      %v269 = vld [vmem:[%s169 + $0x2b8] sm:$0xff]
      %v270 = vld [vmem:[%s169 + $0x2c0] sm:$0xff]
      %v271 = vld [vmem:[%s169 + $0x2c8] sm:$0xff]
      %v272 = vld [vmem:[%s169 + $0x2d0] sm:$0xff]
      %v273 = vld [vmem:[%s169 + $0x2d8] sm:$0xff]
      %v274 = vld [vmem:[%s169 + $0x2e0] sm:$0xff]
      %v275 = vld [vmem:[%s169 + $0x2e8] sm:$0xff]
      %v276 = vld [vmem:[%s169 + $0x2f0] sm:$0xf]
      %v277 = vld [vmem:[%s169 + $0x2f4] sm:$0xff]
      %v278 = vld [vmem:[%s169 + $0x2fc] sm:$0xff]
      %v279 = vld [vmem:[%s169 + $0x304] sm:$0xff]
      %v280 = vld [vmem:[%s169 + $0x30c] sm:$0xff]
      %v281 = vld [vmem:[%s169 + $0x314] sm:$0xff]
      %v282 = vld [vmem:[%s169 + $0x31c] sm:$0xff]
      %v283 = vld [vmem:[%s169 + $0x324] sm:$0xff]
      %v284 = vld [vmem:[%s169 + $0x32c] sm:$0xff]
      %v285 = vld [vmem:[%s169 + $0x334] sm:$0xff]
      %v286 = vld [vmem:[%s169 + $0x33c] sm:$0xff]
      %v287 = vld [vmem:[%s169 + $0x344] sm:$0xf]
      %v288 = vld [vmem:[%s169 + $0x348] sm:$0xff]
      %v289 = vld [vmem:[%s169 + $0x350] sm:$0xff]
      %v290 = vld [vmem:[%s169 + $0x358] sm:$0xff]
      %v291 = vld [vmem:[%s169 + $0x360] sm:$0xff]
      %v292 = vld [vmem:[%s169 + $0x368] sm:$0xff]
      %v293 = vld [vmem:[%s169 + $0x370] sm:$0xff]
      %v294 = vld [vmem:[%s169 + $0x378] sm:$0xff]
      %v295 = vld [vmem:[%s169 + $0x380] sm:$0xff]
      %v296 = vld [vmem:[%s169 + $0x388] sm:$0xff]
      %v297 = vld [vmem:[%s169 + $0x390] sm:$0xff]
      %v298 = vld [vmem:[%s169 + $0x398] sm:$0xf]
      %v299 = vld [vmem:[%s169 + $0x39c] sm:$0xff]
      %v300 = vld [vmem:[%s169 + $0x3a4] sm:$0xff]
      %v301 = vld [vmem:[%s169 + $0x3ac] sm:$0xff]
      %v302 = vld [vmem:[%s169 + $0x3b4] sm:$0xff]
      %v303 = vld [vmem:[%s169 + $0x3bc] sm:$0xff]
      %v304 = vld [vmem:[%s169 + $0x3c4] sm:$0xff]
      %v305 = vld [vmem:[%s169 + $0x3cc] sm:$0xff]
      %v306 = vld [vmem:[%s169 + $0x3d4] sm:$0xff]
      %v307 = vld [vmem:[%s169 + $0x3dc] sm:$0xff]
      %v308 = vld [vmem:[%s169 + $0x3e4] sm:$0xff]
      %v309 = vld [vmem:[%s169 + $0x3ec] sm:$0xf]
      %v310 = vld [vmem:[%s169 + $0x3f0] sm:$0xff]
      %v311 = vld [vmem:[%s169 + $0x3f8] sm:$0xff]
      %v312 = vld [vmem:[%s169 + $0x400] sm:$0xff]
      %v313 = vld [vmem:[%s169 + $0x408] sm:$0xff]
      %v314 = vld [vmem:[%s169 + $0x410] sm:$0xff]
      %v315 = vld [vmem:[%s169 + $0x418] sm:$0xff]
      %v316 = vld [vmem:[%s169 + $0x420] sm:$0xff]
      %v317 = vld [vmem:[%s169 + $0x428] sm:$0xff]
      %v318 = vld [vmem:[%s169 + $0x430] sm:$0xff]
      %v319 = vld [vmem:[%s169 + $0x438] sm:$0xff]
      %v320 = vld [vmem:[%s169 + $0x440] sm:$0xf]
      %v321 = vld [vmem:[%s169 + $0x444] sm:$0xff]
      %v322 = vld [vmem:[%s169 + $0x44c] sm:$0xff]
      %v323 = vld [vmem:[%s169 + $0x454] sm:$0xff]
      %v324 = vld [vmem:[%s169 + $0x45c] sm:$0xff]
      %v325 = vld [vmem:[%s169 + $0x464] sm:$0xff]
      %v326 = vld [vmem:[%s169 + $0x46c] sm:$0xff]
      %v327 = vld [vmem:[%s169 + $0x474] sm:$0xff]
      %v328 = vld [vmem:[%s169 + $0x47c] sm:$0xff]
      %v329 = vld [vmem:[%s169 + $0x484] sm:$0xff]
      %v330 = vld [vmem:[%s169 + $0x48c] sm:$0xff]
      %v331 = vld [vmem:[%s169 + $0x494] sm:$0xf]
      %v332 = vld [vmem:[%s169 + $0x498] sm:$0xff]
      %v333 = vld [vmem:[%s169 + $0x4a0] sm:$0xff]
      %v334 = vld [vmem:[%s169 + $0x4a8] sm:$0xff]
      %v335 = vld [vmem:[%s169 + $0x4b0] sm:$0xff]
      %v336 = vld [vmem:[%s169 + $0x4b8] sm:$0xff]
      %v337 = vld [vmem:[%s169 + $0x4c0] sm:$0xff]
      %v338 = vld [vmem:[%s169 + $0x4c8] sm:$0xff]
      %v339 = vld [vmem:[%s169 + $0x4d0] sm:$0xff]
      %v340 = vld [vmem:[%s169 + $0x4d8] sm:$0xff]
      %v341 = vld [vmem:[%s169 + $0x4e0] sm:$0xff]
      %v342 = vld [vmem:[%s169 + $0x4e8] sm:$0xf]
      %v343 = vld [vmem:[%s169 + $0x4ec] sm:$0xff]
      %v344 = vld [vmem:[%s169 + $0x4f4] sm:$0xff]
      %v345 = vld [vmem:[%s169 + $0x4fc] sm:$0xff]
      %v346 = vld [vmem:[%s169 + $0x504] sm:$0xff]
      %v347 = vld [vmem:[%s169 + $0x50c] sm:$0xff]
      %v348 = vld [vmem:[%s169 + $0x514] sm:$0xff]
      %v349 = vld [vmem:[%s169 + $0x51c] sm:$0xff]
      %v350 = vld [vmem:[%s169 + $0x524] sm:$0xff]
      %v351 = vld [vmem:[%s169 + $0x52c] sm:$0xff]
      %v352 = vld [vmem:[%s169 + $0x534] sm:$0xff]
      %v353 = vld [vmem:[%s169 + $0x53c] sm:$0xf]
      %v354 = vld [vmem:[%s169 + $0x540] sm:$0xff]
      %v355 = vld [vmem:[%s169 + $0x548] sm:$0xff]
      %v356 = vld [vmem:[%s169 + $0x550] sm:$0xff]
      %v357 = vld [vmem:[%s169 + $0x558] sm:$0xff]
      %v358 = vld [vmem:[%s169 + $0x560] sm:$0xff]
      %v359 = vld [vmem:[%s169 + $0x568] sm:$0xff]
      %v360 = vld [vmem:[%s169 + $0x570] sm:$0xff]
      %v361 = vld [vmem:[%s169 + $0x578] sm:$0xff]
      %v362 = vld [vmem:[%s169 + $0x580] sm:$0xff]
      %v363 = vld [vmem:[%s169 + $0x588] sm:$0xff]
      %v364 = vld [vmem:[%s169 + $0x590] sm:$0xf]
      %v365 = vld [vmem:[%s169 + $0x594] sm:$0xff]
      %v366 = vld [vmem:[%s169 + $0x59c] sm:$0xff]
      %v367 = vld [vmem:[%s169 + $0x5a4] sm:$0xff]
      %v368 = vld [vmem:[%s169 + $0x5ac] sm:$0xff]
      %v369 = vld [vmem:[%s169 + $0x5b4] sm:$0xff]
      %v370 = vld [vmem:[%s169 + $0x5bc] sm:$0xff]
      %v371 = vld [vmem:[%s169 + $0x5c4] sm:$0xff]
      %v372 = vld [vmem:[%s169 + $0x5cc] sm:$0xff]
      %v373 = vld [vmem:[%s169 + $0x5d4] sm:$0xff]
      %v374 = vld [vmem:[%s169 + $0x5dc] sm:$0xff]
      %v375 = vld [vmem:[%s169 + $0x5e4] sm:$0xf]
      %v376 = vld [vmem:[%s169 + $0x5e8] sm:$0xff]
      %v377 = vld [vmem:[%s169 + $0x5f0] sm:$0xff]
      %v378 = vld [vmem:[%s169 + $0x5f8] sm:$0xff]
      %v379 = vld [vmem:[%s169 + $0x600] sm:$0xff]
      %v380 = vld [vmem:[%s169 + $0x608] sm:$0xff]
      %v381 = vld [vmem:[%s169 + $0x610] sm:$0xff]
      %v382 = vld [vmem:[%s169 + $0x618] sm:$0xff]
      %v383 = vld [vmem:[%s169 + $0x620] sm:$0xff]
      %v384 = vld [vmem:[%s169 + $0x628] sm:$0xff]
      %v385 = vld [vmem:[%s169 + $0x630] sm:$0xff]
      %v386 = vld [vmem:[%s169 + $0x638] sm:$0xf]
      %v387 = vld [vmem:[%s169 + $0x63c] sm:$0xff]
      %v388 = vld [vmem:[%s169 + $0x644] sm:$0xff]
      %v389 = vld [vmem:[%s169 + $0x64c] sm:$0xff]
      %v390 = vld [vmem:[%s169 + $0x654] sm:$0xff]
      %v391 = vld [vmem:[%s169 + $0x65c] sm:$0xff]
      %v392 = vld [vmem:[%s169 + $0x664] sm:$0xff]
      %v393 = vld [vmem:[%s169 + $0x66c] sm:$0xff]
      %v394 = vld [vmem:[%s169 + $0x674] sm:$0xff]
      %v395 = vld [vmem:[%s169 + $0x67c] sm:$0xff]
      %v396 = vld [vmem:[%s169 + $0x684] sm:$0xff]
      %v397 = vld [vmem:[%s169 + $0x68c] sm:$0xf]
      %v398 = vld [vmem:[%s169 + $0x690] sm:$0xff]
      %v399 = vld [vmem:[%s169 + $0x698] sm:$0xff]
      %v400 = vld [vmem:[%s169 + $0x6a0] sm:$0xff]
      %v401 = vld [vmem:[%s169 + $0x6a8] sm:$0xff]
      %v402 = vld [vmem:[%s169 + $0x6b0] sm:$0xff]
      %v403 = vld [vmem:[%s169 + $0x6b8] sm:$0xff]
      %v404 = vld [vmem:[%s169 + $0x6c0] sm:$0xff]
      %v405 = vld [vmem:[%s169 + $0x6c8] sm:$0xff]
      %v406 = vld [vmem:[%s169 + $0x6d0] sm:$0xff]
      %v407 = vld [vmem:[%s169 + $0x6d8] sm:$0xff]
      %v408 = vld [vmem:[%s169 + $0x6e0] sm:$0xf]
      %v409 = vld [vmem:[%s169 + $0x6e4] sm:$0xff]
      %v410 = vld [vmem:[%s169 + $0x6ec] sm:$0xff]
      %v411 = vld [vmem:[%s169 + $0x6f4] sm:$0xff]
      %v412 = vld [vmem:[%s169 + $0x6fc] sm:$0xff]
      %v413 = vld [vmem:[%s169 + $0x704] sm:$0xff]
      %v414 = vld [vmem:[%s169 + $0x70c] sm:$0xff]
      %v415 = vld [vmem:[%s169 + $0x714] sm:$0xff]
      %v416 = vld [vmem:[%s169 + $0x71c] sm:$0xff]
      %v417 = vld [vmem:[%s169 + $0x724] sm:$0xff]
      %v418 = vld [vmem:[%s169 + $0x72c] sm:$0xff]
      %v419 = vld [vmem:[%s169 + $0x734] sm:$0xf]
      %v420 = vld [vmem:[%s169 + $0x738] sm:$0xff]
      %v421 = vld [vmem:[%s169 + $0x740] sm:$0xff]
      %v422 = vld [vmem:[%s169 + $0x748] sm:$0xff]
      %v423 = vld [vmem:[%s169 + $0x750] sm:$0xff]
      %v424 = vld [vmem:[%s169 + $0x758] sm:$0xff]
      %v425 = vld [vmem:[%s169 + $0x760] sm:$0xff]
      %v426 = vld [vmem:[%s169 + $0x768] sm:$0xff]
      %v427 = vld [vmem:[%s169 + $0x770] sm:$0xff]
      %v428 = vld [vmem:[%s169 + $0x778] sm:$0xff]
      %v429 = vld [vmem:[%s169 + $0x780] sm:$0xff]
      %v430 = vld [vmem:[%s169 + $0x788] sm:$0xf]
      %v431 = vld [vmem:[%s169 + $0x78c] sm:$0xff]
      %v432 = vld [vmem:[%s169 + $0x794] sm:$0xff]
      %v433 = vld [vmem:[%s169 + $0x79c] sm:$0xff]
      %v434 = vld [vmem:[%s169 + $0x7a4] sm:$0xff]
      %v435 = vld [vmem:[%s169 + $0x7ac] sm:$0xff]
      %v436 = vld [vmem:[%s169 + $0x7b4] sm:$0xff]
      %v437 = vld [vmem:[%s169 + $0x7bc] sm:$0xff]
      %v438 = vld [vmem:[%s169 + $0x7c4] sm:$0xff]
      %v439 = vld [vmem:[%s169 + $0x7cc] sm:$0xff]
      %v440 = vld [vmem:[%s169 + $0x7d4] sm:$0xff]
      %v441 = vld [vmem:[%s169 + $0x7dc] sm:$0xf]
      %v442 = vld [vmem:[%s169 + $0x7e0] sm:$0xff]
      %v443 = vld [vmem:[%s169 + $0x7e8] sm:$0xff]
      %v444 = vld [vmem:[%s169 + $0x7f0] sm:$0xff]
      %v445 = vld [vmem:[%s169 + $0x7f8] sm:$0xff]
      %v446 = vld [vmem:[%s169 + $0x800] sm:$0xff]
      %v447 = vld [vmem:[%s169 + $0x808] sm:$0xff]
      %v448 = vld [vmem:[%s169 + $0x810] sm:$0xff]
      %v449 = vld [vmem:[%s169 + $0x818] sm:$0xff]
      %v450 = vld [vmem:[%s169 + $0x820] sm:$0xff]
      %v451 = vld [vmem:[%s169 + $0x828] sm:$0xff]
      %v452 = vld [vmem:[%s169 + $0x830] sm:$0xf]
      %v453 = vld [vmem:[%s169 + $0x834] sm:$0xff]
      %v454 = vld [vmem:[%s169 + $0x83c] sm:$0xff]
      %v455 = vld [vmem:[%s169 + $0x844] sm:$0xff]
      %v456 = vld [vmem:[%s169 + $0x84c] sm:$0xff]
      %v457 = vld [vmem:[%s169 + $0x854] sm:$0xff]
      %v458 = vld [vmem:[%s169 + $0x85c] sm:$0xff]
      %v459 = vld [vmem:[%s169 + $0x864] sm:$0xff]
      %v460 = vld [vmem:[%s169 + $0x86c] sm:$0xff]
      %v461 = vld [vmem:[%s169 + $0x874] sm:$0xff]
      %v462 = vld [vmem:[%s169 + $0x87c] sm:$0xff]
      %v463 = vld [vmem:[%s169 + $0x884] sm:$0xf]
      %v464 = vld [vmem:[%s169 + $0x888] sm:$0xff]
      %v465 = vld [vmem:[%s169 + $0x890] sm:$0xff]
      %v466 = vld [vmem:[%s169 + $0x898] sm:$0xff]
      %v467 = vld [vmem:[%s169 + $0x8a0] sm:$0xff]
      %v468 = vld [vmem:[%s169 + $0x8a8] sm:$0xff]
      %v469 = vld [vmem:[%s169 + $0x8b0] sm:$0xff]
      %v470 = vld [vmem:[%s169 + $0x8b8] sm:$0xff]
      %v471 = vld [vmem:[%s169 + $0x8c0] sm:$0xff]
      %v472 = vld [vmem:[%s169 + $0x8c8] sm:$0xff]
      %v473 = vld [vmem:[%s169 + $0x8d0] sm:$0xff]
      %v474 = vld [vmem:[%s169 + $0x8d8] sm:$0xf]
      %v475 = vld [vmem:[%s169 + $0x8dc] sm:$0xff]
      %v476 = vld [vmem:[%s169 + $0x8e4] sm:$0xff]
      %v477 = vld [vmem:[%s169 + $0x8ec] sm:$0xff]
      %v478 = vld [vmem:[%s169 + $0x8f4] sm:$0xff]
      %v479 = vld [vmem:[%s169 + $0x8fc] sm:$0xff]
      %v480 = vld [vmem:[%s169 + $0x904] sm:$0xff]
      %v481 = vld [vmem:[%s169 + $0x90c] sm:$0xff]
      %v482 = vld [vmem:[%s169 + $0x914] sm:$0xff]
      %v483 = vld [vmem:[%s169 + $0x91c] sm:$0xff]
      %v484 = vld [vmem:[%s169 + $0x924] sm:$0xff]
      %v485 = vld [vmem:[%s169 + $0x92c] sm:$0xf]
      %v486 = vld [vmem:[%s169 + $0x930] sm:$0xff]
      %v487 = vld [vmem:[%s169 + $0x938] sm:$0xff]
      %v488 = vld [vmem:[%s169 + $0x940] sm:$0xff]
      %v489 = vld [vmem:[%s169 + $0x948] sm:$0xff]
      %v490 = vld [vmem:[%s169 + $0x950] sm:$0xff]
      %v491 = vld [vmem:[%s169 + $0x958] sm:$0xff]
      %v492 = vld [vmem:[%s169 + $0x960] sm:$0xff]
      %v493 = vld [vmem:[%s169 + $0x968] sm:$0xff]
      %v494 = vld [vmem:[%s169 + $0x970] sm:$0xff]
      %v495 = vld [vmem:[%s169 + $0x978] sm:$0xff]
      %v496 = vld [vmem:[%s169 + $0x980] sm:$0xf]
      %v497 = vld [vmem:[%s169 + $0x984] sm:$0xff]
      %v498 = vld [vmem:[%s169 + $0x98c] sm:$0xff]
      %v499 = vld [vmem:[%s169 + $0x994] sm:$0xff]
      %v500 = vld [vmem:[%s169 + $0x99c] sm:$0xff]
      %v501 = vld [vmem:[%s169 + $0x9a4] sm:$0xff]
      %v502 = vld [vmem:[%s169 + $0x9ac] sm:$0xff]
      %v503 = vld [vmem:[%s169 + $0x9b4] sm:$0xff]
      %v504 = vld [vmem:[%s169 + $0x9bc] sm:$0xff]
      %v505 = vld [vmem:[%s169 + $0x9c4] sm:$0xff]
      %v506 = vld [vmem:[%s169 + $0x9cc] sm:$0xff]
      %v507 = vld [vmem:[%s169 + $0x9d4] sm:$0xf]
      %v508 = vld [vmem:[%s169 + $0x9d8] sm:$0xff]
      %v509 = vld [vmem:[%s169 + $0x9e0] sm:$0xff]
      %v510 = vld [vmem:[%s169 + $0x9e8] sm:$0xff]
      %v511 = vld [vmem:[%s169 + $0x9f0] sm:$0xff]
      %v512 = vld [vmem:[%s169 + $0x9f8] sm:$0xff]
      %v513 = vld [vmem:[%s169 + $0xa00] sm:$0xff]
      %v514 = vld [vmem:[%s169 + $0xa08] sm:$0xff]
      %v515 = vld [vmem:[%s169 + $0xa10] sm:$0xff]
      %v516 = vld [vmem:[%s169 + $0xa18] sm:$0xff]
      %v517 = vld [vmem:[%s169 + $0xa20] sm:$0xff]
      %v518 = vld [vmem:[%s169 + $0xa28] sm:$0xf]
      %v519 = vld [vmem:[%s169 + $0xa2c] sm:$0xff]
      %v520 = vld [vmem:[%s169 + $0xa34] sm:$0xff]
      %v521 = vld [vmem:[%s169 + $0xa3c] sm:$0xff]
      %v522 = vld [vmem:[%s169 + $0xa44] sm:$0xff]
      %v523 = vld [vmem:[%s169 + $0xa4c] sm:$0xff]
      %v524 = vld [vmem:[%s169 + $0xa54] sm:$0xff]
      %v525 = vld [vmem:[%s169 + $0xa5c] sm:$0xff]
      %v526 = vld [vmem:[%s169 + $0xa64] sm:$0xff]
      %v527 = vld [vmem:[%s169 + $0xa6c] sm:$0xff]
      %v528 = vld [vmem:[%s169 + $0xa74] sm:$0xff]
      %v529 = vld [vmem:[%s169 + $0xa7c] sm:$0xf]
      %v530 = vld [vmem:[%s1] sm:$0xf]
      %v531 = vld [vmem:[%s1 + $0x4] sm:$0xf]
      %v532 = vld [vmem:[%s1 + $0x8] sm:$0xf]
      %v533 = vld [vmem:[%s1 + $0xc] sm:$0xf]
      %v534 = vld [vmem:[%s1 + $0x10] sm:$0xf]
      %v535 = vld [vmem:[%s1 + $0x14] sm:$0xf]
      %v536 = vld [vmem:[%s1 + $0x18] sm:$0xf]
      %v537 = vld [vmem:[%s1 + $0x1c] sm:$0xf]
      %v538 = vld [vmem:[%s1 + $0x20] sm:$0xf]
      %v539 = vld [vmem:[%s1 + $0x24] sm:$0xf]
      %v540 = vld [vmem:[%s1 + $0x28] sm:$0xf]
      %v541 = vld [vmem:[%s1 + $0x2c] sm:$0xf]
      %v542 = vld [vmem:[%s1 + $0x30] sm:$0xf]
      %v543 = vld [vmem:[%s1 + $0x34] sm:$0xf]
      %v544 = vld [vmem:[%s1 + $0x38] sm:$0xf]
      %v545 = vld [vmem:[%s1 + $0x3c] sm:$0xf]
      %v546 = vld [vmem:[%s1 + $0x40] sm:$0xf]
      %v547 = vld [vmem:[%s1 + $0x44] sm:$0xf]
      %v548 = vld [vmem:[%s1 + $0x48] sm:$0xf]
      %v549 = vld [vmem:[%s1 + $0x4c] sm:$0xf]
      %v550 = vld [vmem:[%s1 + $0x50] sm:$0xf]
      %v551 = vld [vmem:[%s1 + $0x54] sm:$0xf]
      %v552 = vld [vmem:[%s1 + $0x58] sm:$0xf]
      %v553 = vld [vmem:[%s1 + $0x5c] sm:$0xf]
      %v554 = vld [vmem:[%s1 + $0x60] sm:$0xf]
      %v555 = vld [vmem:[%s1 + $0x64] sm:$0xf]
      %v556 = vld [vmem:[%s1 + $0x68] sm:$0xf]
      %v557 = vld [vmem:[%s1 + $0x6c] sm:$0xf]
      %v558 = vld [vmem:[%s1 + $0x70] sm:$0xf]
      %v559 = vld [vmem:[%s1 + $0x74] sm:$0xf]
      %v560 = vld [vmem:[%s1 + $0x78] sm:$0xf]
      %v561 = vld [vmem:[%s1 + $0x7c] sm:$0xf]
      %v562 = vld [vmem:[%s1 + $0x80] sm:$0xf]
      %v563 = vld [vmem:[%s1 + $0x84] sm:$0xf]
      %v564 = vld [vmem:[%s1 + $0x88] sm:$0xf]
      %v565 = vld [vmem:[%s1 + $0x8c] sm:$0xf]
      %v566 = vld [vmem:[%s1 + $0x90] sm:$0xf]
      %v567 = vld [vmem:[%s1 + $0x94] sm:$0xf]
      %v568 = vld [vmem:[%s1 + $0x98] sm:$0xf]
      %v569 = vld [vmem:[%s1 + $0x9c] sm:$0xf]
      %v570 = vld [vmem:[%s1 + $0xa0] sm:$0xf]
      %v571 = vld [vmem:[%s1 + $0xa4] sm:$0xf]
      %v572 = vld [vmem:[%s1 + $0xa8] sm:$0xf]
      %v573 = vld [vmem:[%s1 + $0xac] sm:$0xf]
      %v574 = vld [vmem:[%s1 + $0xb0] sm:$0xf]
      %v575 = vld [vmem:[%s1 + $0xb4] sm:$0xf]
      %v576 = vld [vmem:[%s1 + $0xb8] sm:$0xf]
      %v577 = vld [vmem:[%s1 + $0xbc] sm:$0xf]
      %v578 = vld [vmem:[%s1 + $0xc0] sm:$0xf]
      %v579 = vld [vmem:[%s1 + $0xc4] sm:$0xf]
      %v580 = vld [vmem:[%s1 + $0xc8] sm:$0xf]
      %v581 = vld [vmem:[%s1 + $0xcc] sm:$0xf]
      %v582 = vld [vmem:[%s1 + $0xd0] sm:$0xf]
      %v583 = vld [vmem:[%s1 + $0xd4] sm:$0xf]
      %v584 = vld [vmem:[%s1 + $0xd8] sm:$0xf]
      %v585 = vld [vmem:[%s1 + $0xdc] sm:$0xf]
      %v586 = vld [vmem:[%s1 + $0xe0] sm:$0xf]
      %v587 = vld [vmem:[%s1 + $0xe4] sm:$0xf]
      %v588 = vld [vmem:[%s1 + $0xe8] sm:$0xf]
      %v589 = vld [vmem:[%s1 + $0xec] sm:$0xf]
      %v590 = vld [vmem:[%s1 + $0xf0] sm:$0xf]
      %v591 = vld [vmem:[%s1 + $0xf4] sm:$0xf]
      %v592 = vld [vmem:[%s1 + $0xf8] sm:$0xf]
      %v593 = vld [vmem:[%s1 + $0xfc] sm:$0xf]
      %v594 = vld [vmem:[%s1 + $0x100] sm:$0xf]
      %v595 = vld [vmem:[%s1 + $0x104] sm:$0xf]
      %v596 = vld [vmem:[%s1 + $0x108] sm:$0xf]
      %v597 = vld [vmem:[%s1 + $0x10c] sm:$0xf]
      %v598 = vld [vmem:[%s1 + $0x110] sm:$0xf]
      %v599 = vld [vmem:[%s1 + $0x114] sm:$0xf]
      %v600 = vld [vmem:[%s1 + $0x118] sm:$0xf]
      %v601 = vld [vmem:[%s1 + $0x11c] sm:$0xf]
      %v602 = vld [vmem:[%s1 + $0x120] sm:$0xf]
      %v603 = vld [vmem:[%s1 + $0x124] sm:$0xf]
      %v604 = vld [vmem:[%s1 + $0x128] sm:$0xf]
      %v605 = vld [vmem:[%s1 + $0x12c] sm:$0xf]
      %v606 = vld [vmem:[%s1 + $0x130] sm:$0xf]
      %v607 = vld [vmem:[%s1 + $0x134] sm:$0xf]
      %v608 = vld [vmem:[%s1 + $0x138] sm:$0xf]
      %v609 = vld [vmem:[%s1 + $0x13c] sm:$0xf]
      %v610 = vld [vmem:[%s1 + $0x140] sm:$0xf]
      %v611 = vld [vmem:[%s1 + $0x144] sm:$0xf]
      %v612 = vld [vmem:[%s1 + $0x148] sm:$0xf]
      %v613 = vld [vmem:[%s1 + $0x14c] sm:$0xf]
      %v614 = vld [vmem:[%s1 + $0x150] sm:$0xf]
      %v615 = vld [vmem:[%s1 + $0x154] sm:$0xf]
      %v616 = vld [vmem:[%s1 + $0x158] sm:$0xf]
      %v617 = vld [vmem:[%s1 + $0x15c] sm:$0xf]
      %v618 = vld [vmem:[%s1 + $0x160] sm:$0xf]
      %v619 = vld [vmem:[%s1 + $0x164] sm:$0xf]
      %v620 = vld [vmem:[%s1 + $0x168] sm:$0xf]
      %v621 = vld [vmem:[%s1 + $0x16c] sm:$0xf]
      %v622 = vld [vmem:[%s1 + $0x170] sm:$0xf]
      %v623 = vld [vmem:[%s1 + $0x174] sm:$0xf]
      %v624 = vld [vmem:[%s1 + $0x178] sm:$0xf]
      %v625 = vld [vmem:[%s1 + $0x17c] sm:$0xf]
      %v626 = vld [vmem:[%s1 + $0x180] sm:$0xf]
      %v627 = vld [vmem:[%s1 + $0x184] sm:$0xf]
      %v628 = vld [vmem:[%s1 + $0x188] sm:$0xf]
      %v629 = vld [vmem:[%s1 + $0x18c] sm:$0xf]
      %v630 = vld [vmem:[%s1 + $0x190] sm:$0xf]
      %v631 = vld [vmem:[%s1 + $0x194] sm:$0xf]
      %v632 = vld [vmem:[%s1 + $0x198] sm:$0xf]
      %v633 = vld [vmem:[%s1 + $0x19c] sm:$0xf]
      %v634 = vld [vmem:[%s1 + $0x1a0] sm:$0xf]
      %v635 = vld [vmem:[%s1 + $0x1a4] sm:$0xf]
      %v636 = vld [vmem:[%s1 + $0x1a8] sm:$0xf]
      %v637 = vld [vmem:[%s1 + $0x1ac] sm:$0xf]
      %v638 = vld [vmem:[%s1 + $0x1b0] sm:$0xf]
      %v639 = vld [vmem:[%s1 + $0x1b4] sm:$0xf]
      %v640 = vld [vmem:[%s1 + $0x1b8] sm:$0xf]
      %v641 = vld [vmem:[%s1 + $0x1bc] sm:$0xf]
      %v642 = vld [vmem:[%s1 + $0x1c0] sm:$0xf]
      %v643 = vld [vmem:[%s1 + $0x1c4] sm:$0xf]
      %v644 = vld [vmem:[%s1 + $0x1c8] sm:$0xf]
      %v645 = vld [vmem:[%s1 + $0x1cc] sm:$0xf]
      %v646 = vld [vmem:[%s1 + $0x1d0] sm:$0xf]
      %v647 = vld [vmem:[%s1 + $0x1d4] sm:$0xf]
      %v648 = vld [vmem:[%s1 + $0x1d8] sm:$0xf]
      %v649 = vld [vmem:[%s1 + $0x1dc] sm:$0xf]
      %v650 = vld [vmem:[%s1 + $0x1e0] sm:$0xf]
      %v651 = vld [vmem:[%s1 + $0x1e4] sm:$0xf]
      %v652 = vld [vmem:[%s1 + $0x1e8] sm:$0xf]
      %v653 = vld [vmem:[%s1 + $0x1ec] sm:$0xf]
      %v654 = vld [vmem:[%s1 + $0x1f0] sm:$0xf]
      %v655 = vld [vmem:[%s1 + $0x1f4] sm:$0xf]
      %v656 = vld [vmem:[%s1 + $0x1f8] sm:$0xf]
      %v657 = vld [vmem:[%s1 + $0x1fc] sm:$0xf]
      %v658 = vld [vmem:[%s1 + $0x200] sm:$0xf]
      %v659 = vld [vmem:[%s1 + $0x204] sm:$0xf]
      %v660 = vld [vmem:[%s1 + $0x208] sm:$0xf]
      %v661 = vld [vmem:[%s1 + $0x20c] sm:$0xf]
      %v662 = vld [vmem:[%s1 + $0x210] sm:$0xf]
      %v663 = vld [vmem:[%s1 + $0x214] sm:$0xf]
      %v664 = vld [vmem:[%s1 + $0x218] sm:$0xf]
      %v665 = vld [vmem:[%s1 + $0x21c] sm:$0xf]
      %v666 = vld [vmem:[%s1 + $0x220] sm:$0xf]
      %v667 = vld [vmem:[%s1 + $0x224] sm:$0xf]
      %v668 = vld [vmem:[%s1 + $0x228] sm:$0xf]
      %v669 = vld [vmem:[%s1 + $0x22c] sm:$0xf]
      %v670 = vld [vmem:[%s1 + $0x230] sm:$0xf]
      %v671 = vld [vmem:[%s1 + $0x234] sm:$0xf]
      %v672 = vld [vmem:[%s1 + $0x238] sm:$0xf]
      %v673 = vld [vmem:[%s1 + $0x23c] sm:$0xf]
      %v674 = vld [vmem:[%s1 + $0x240] sm:$0xf]
      %v675 = vld [vmem:[%s1 + $0x244] sm:$0xf]
      %v676 = vld [vmem:[%s1 + $0x248] sm:$0xf]
      %v677 = vld [vmem:[%s1 + $0x24c] sm:$0xf]
      %v678 = vld [vmem:[%s1 + $0x250] sm:$0xf]
      %v679 = vld [vmem:[%s1 + $0x254] sm:$0xf]
      %v680 = vld [vmem:[%s1 + $0x258] sm:$0xf]
      %v681 = vld [vmem:[%s1 + $0x25c] sm:$0xf]
      %v682 = vld [vmem:[%s1 + $0x260] sm:$0xf]
      %v683 = vld [vmem:[%s1 + $0x264] sm:$0xf]
      %v684 = vld [vmem:[%s1 + $0x268] sm:$0xf]
      %v685 = vld [vmem:[%s1 + $0x26c] sm:$0xf]
      %v686 = vld [vmem:[%s1 + $0x270] sm:$0xf]
      %v687 = vld [vmem:[%s1 + $0x274] sm:$0xf]
      %v688 = vld [vmem:[%s1 + $0x278] sm:$0xf]
      %v689 = vld [vmem:[%s1 + $0x27c] sm:$0xf]
      %v690 = vld [vmem:[%s1 + $0x280] sm:$0xf]
      %v691 = vld [vmem:[%s1 + $0x284] sm:$0xf]
      %v692 = vld [vmem:[%s1 + $0x288] sm:$0xf]
      %v693 = vld [vmem:[%s1 + $0x28c] sm:$0xf]
      %v694 = vld [vmem:[%s1 + $0x290] sm:$0xf]
      %v695 = vld [vmem:[%s1 + $0x294] sm:$0xf]
      %v696 = vld [vmem:[%s1 + $0x298] sm:$0xf]
      %v697 = vld [vmem:[%s1 + $0x29c] sm:$0xf]
      %v698 = vld [vmem:[%s1 + $0x2a0] sm:$0xf]
      %v699 = vld [vmem:[%s1 + $0x2a4] sm:$0xf]
      %v700 = vld [vmem:[%s1 + $0x2a8] sm:$0xf]
      %v701 = vld [vmem:[%s1 + $0x2ac] sm:$0xf]
      %v702 = vld [vmem:[%s1 + $0x2b0] sm:$0xf]
      %v703 = vld [vmem:[%s1 + $0x2b4] sm:$0xf]
      %v704 = vld [vmem:[%s1 + $0x2b8] sm:$0xf]
      %v705 = vld [vmem:[%s1 + $0x2bc] sm:$0xf]
      %v706 = vld [vmem:[%s1 + $0x2c0] sm:$0xf]
      %v707 = vld [vmem:[%s1 + $0x2c4] sm:$0xf]
      %v708 = vld [vmem:[%s1 + $0x2c8] sm:$0xf]
      %v709 = vld [vmem:[%s1 + $0x2cc] sm:$0xf]
      %v710 = vld [vmem:[%s1 + $0x2d0] sm:$0xf]
      %v711 = vld [vmem:[%s1 + $0x2d4] sm:$0xf]
      %v712 = vld [vmem:[%s1 + $0x2d8] sm:$0xf]
      %v713 = vld [vmem:[%s1 + $0x2dc] sm:$0xf]
      %v714 = vld [vmem:[%s1 + $0x2e0] sm:$0xf]
      %v715 = vld [vmem:[%s1 + $0x2e4] sm:$0xf]
      %v716 = vld [vmem:[%s1 + $0x2e8] sm:$0xf]
      %v717 = vld [vmem:[%s1 + $0x2ec] sm:$0xf]
      %v718 = vld [vmem:[%s1 + $0x2f0] sm:$0xf]
      %v719 = vld [vmem:[%s1 + $0x2f4] sm:$0xf]
      %v720 = vld [vmem:[%s1 + $0x2f8] sm:$0xf]
      %v721 = vld [vmem:[%s1 + $0x2fc] sm:$0xf]
      %v722 = vld [vmem:[%s1 + $0x300] sm:$0xf]
      %v723 = vld [vmem:[%s1 + $0x304] sm:$0xf]
      %v724 = vld [vmem:[%s1 + $0x308] sm:$0xf]
      %v725 = vld [vmem:[%s1 + $0x30c] sm:$0xf]
      %v726 = vld [vmem:[%s1 + $0x310] sm:$0xf]
      %v727 = vld [vmem:[%s1 + $0x314] sm:$0xf]
      %v728 = vld [vmem:[%s1 + $0x318] sm:$0xf]
      %v729 = vld [vmem:[%s1 + $0x31c] sm:$0xf]
      %v730 = vld [vmem:[%s1 + $0x320] sm:$0xf]
      %v731 = vld [vmem:[%s1 + $0x324] sm:$0xf]
      %v732 = vld [vmem:[%s1 + $0x328] sm:$0xf]
      %v733 = vld [vmem:[%s1 + $0x32c] sm:$0xf]
      %v734 = vld [vmem:[%s1 + $0x330] sm:$0xf]
      %v735 = vld [vmem:[%s1 + $0x334] sm:$0xf]
      %v736 = vld [vmem:[%s1 + $0x338] sm:$0xf]
      %v737 = vld [vmem:[%s1 + $0x33c] sm:$0xf]
      %v738 = vld [vmem:[%s1 + $0x340] sm:$0xf]
      %v739 = vld [vmem:[%s1 + $0x344] sm:$0xf]
      %v740 = vld [vmem:[%s1 + $0x348] sm:$0xf]
      %v741 = vld [vmem:[%s1 + $0x34c] sm:$0xf]
      %v742 = vld [vmem:[%s1 + $0x350] sm:$0xf]
      %v743 = vld [vmem:[%s1 + $0x354] sm:$0xf]
      %v744 = vld [vmem:[%s1 + $0x358] sm:$0xf]
      %v745 = vld [vmem:[%s1 + $0x35c] sm:$0xf]
      %v746 = vld [vmem:[%s1 + $0x360] sm:$0xf]
      %v747 = vld [vmem:[%s1 + $0x364] sm:$0xf]
      %v748 = vld [vmem:[%s1 + $0x368] sm:$0xf]
      %v749 = vld [vmem:[%s1 + $0x36c] sm:$0xf]
      %v750 = vld [vmem:[%s1 + $0x370] sm:$0xf]
      %v751 = vld [vmem:[%s1 + $0x374] sm:$0xf]
      %v752 = vld [vmem:[%s1 + $0x378] sm:$0xf]
      %v753 = vld [vmem:[%s1 + $0x37c] sm:$0xf]
      %v754 = vld [vmem:[%s1 + $0x380] sm:$0xf]
      %v755 = vld [vmem:[%s1 + $0x384] sm:$0xf]
      %v756 = vld [vmem:[%s1 + $0x388] sm:$0xf]
      %v757 = vld [vmem:[%s1 + $0x38c] sm:$0xf]
      %v758 = vld [vmem:[%s1 + $0x390] sm:$0xf]
      %v759 = vld [vmem:[%s1 + $0x394] sm:$0xf]
      %v760 = vld [vmem:[%s1 + $0x398] sm:$0xf]
      %v761 = vld [vmem:[%s1 + $0x39c] sm:$0xf]
      %v762 = vld [vmem:[%s1 + $0x3a0] sm:$0xf]
      %v763 = vld [vmem:[%s1 + $0x3a4] sm:$0xf]
      %v764 = vld [vmem:[%s1 + $0x3a8] sm:$0xf]
      %v765 = vld [vmem:[%s1 + $0x3ac] sm:$0xf]
      %v766 = vld [vmem:[%s1 + $0x3b0] sm:$0xf]
      %v767 = vld [vmem:[%s1 + $0x3b4] sm:$0xf]
      %v768 = vld [vmem:[%s1 + $0x3b8] sm:$0xf]
      %v769 = vld [vmem:[%s1 + $0x3bc] sm:$0xf]
      %v770 = vld [vmem:[%s1 + $0x3c0] sm:$0xf]
      %v771 = vld [vmem:[%s1 + $0x3c4] sm:$0xf]
      %v772 = vld [vmem:[%s1 + $0x3c8] sm:$0xf]
      %v773 = vld [vmem:[%s1 + $0x3cc] sm:$0xf]
      %v774 = vld [vmem:[%s1 + $0x3d0] sm:$0xf]
      %v775 = vld [vmem:[%s1 + $0x3d4] sm:$0xf]
      %v776 = vld [vmem:[%s1 + $0x3d8] sm:$0xf]
      %v777 = vld [vmem:[%s1 + $0x3dc] sm:$0xf]
      %v778 = vld [vmem:[%s1 + $0x3e0] sm:$0xf]
      %v779 = vld [vmem:[%s1 + $0x3e4] sm:$0xf]
      %v780 = vld [vmem:[%s1 + $0x3e8] sm:$0xf]
      %v781 = vld [vmem:[%s1 + $0x3ec] sm:$0xf]
      %v782 = vld [vmem:[%s1 + $0x3f0] sm:$0xf]
      %v783 = vld [vmem:[%s1 + $0x3f4] sm:$0xf]
      %v784 = vld [vmem:[%s1 + $0x3f8] sm:$0xf]
      %v785 = vld [vmem:[%s1 + $0x3fc] sm:$0xf]
      %v786 = vld [vmem:[%s1 + $0x400] sm:$0xf]
      %v787 = vld [vmem:[%s1 + $0x404] sm:$0xf]
      %v788 = vld [vmem:[%s1 + $0x408] sm:$0xf]
      %v789 = vld [vmem:[%s1 + $0x40c] sm:$0xf]
      %v790 = vld [vmem:[%s1 + $0x410] sm:$0xf]
      %v791 = vld [vmem:[%s1 + $0x414] sm:$0xf]
      %v792 = vld [vmem:[%s1 + $0x418] sm:$0xf]
      %v793 = vld [vmem:[%s1 + $0x41c] sm:$0xf]
      %v794 = vld [vmem:[%s1 + $0x420] sm:$0xf]
      %v795 = vld [vmem:[%s1 + $0x424] sm:$0xf]
      %v796 = vld [vmem:[%s1 + $0x428] sm:$0xf]
      %v797 = vld [vmem:[%s1 + $0x42c] sm:$0xf]
      %v798 = vld [vmem:[%s1 + $0x430] sm:$0xf]
      %v799 = vld [vmem:[%s1 + $0x434] sm:$0xf]
      %v800 = vld [vmem:[%s1 + $0x438] sm:$0xf]
      %v801 = vld [vmem:[%s1 + $0x43c] sm:$0xf]
      %v802 = vld [vmem:[%s1 + $0x440] sm:$0xf]
      %v803 = vld [vmem:[%s1 + $0x444] sm:$0xf]
      %v804 = vld [vmem:[%s1 + $0x448] sm:$0xf]
      %v805 = vld [vmem:[%s1 + $0x44c] sm:$0xf]
      %v806 = vld [vmem:[%s1 + $0x450] sm:$0xf]
      %v807 = vld [vmem:[%s1 + $0x454] sm:$0xf]
      %v808 = vld [vmem:[%s1 + $0x458] sm:$0xf]
      %v809 = vld [vmem:[%s1 + $0x45c] sm:$0xf]
      %v810 = vld [vmem:[%s1 + $0x460] sm:$0xf]
      %v811 = vld [vmem:[%s1 + $0x464] sm:$0xf]
      %v812 = vld [vmem:[%s1 + $0x468] sm:$0xf]
      %v813 = vld [vmem:[%s1 + $0x46c] sm:$0xf]
      %v814 = vld [vmem:[%s1 + $0x470] sm:$0xf]
      %v815 = vld [vmem:[%s1 + $0x474] sm:$0xf]
      %v816 = vld [vmem:[%s1 + $0x478] sm:$0xf]
      %v817 = vld [vmem:[%s1 + $0x47c] sm:$0xf]
      %v818 = vld [vmem:[%s1 + $0x480] sm:$0xf]
      %v819 = vld [vmem:[%s1 + $0x484] sm:$0xf]
      %v820 = vld [vmem:[%s1 + $0x488] sm:$0xf]
      %v821 = vld [vmem:[%s1 + $0x48c] sm:$0xf]
      %v822 = vld [vmem:[%s1 + $0x490] sm:$0xf]
      %v823 = vld [vmem:[%s1 + $0x494] sm:$0xf]
      %v824 = vld [vmem:[%s1 + $0x498] sm:$0xf]
      %v825 = vld [vmem:[%s1 + $0x49c] sm:$0xf]
      %v826 = vld [vmem:[%s1 + $0x4a0] sm:$0xf]
      %v827 = vld [vmem:[%s1 + $0x4a4] sm:$0xf]
      %v828 = vld [vmem:[%s1 + $0x4a8] sm:$0xf]
      %v829 = vld [vmem:[%s1 + $0x4ac] sm:$0xf]
      %v830 = vld [vmem:[%s1 + $0x4b0] sm:$0xf]
      %v831 = vld [vmem:[%s1 + $0x4b4] sm:$0xf]
      %v832 = vld [vmem:[%s1 + $0x4b8] sm:$0xf]
      %v833 = vld [vmem:[%s1 + $0x4bc] sm:$0xf]
      %v834 = vld [vmem:[%s1 + $0x4c0] sm:$0xf]
      %v835 = vld [vmem:[%s1 + $0x4c4] sm:$0xf]
      %v836 = vld [vmem:[%s1 + $0x4c8] sm:$0xf]
      %v837 = vld [vmem:[%s1 + $0x4cc] sm:$0xf]
      %v838 = vld [vmem:[%s1 + $0x4d0] sm:$0xf]
      %v839 = vld [vmem:[%s1 + $0x4d4] sm:$0xf]
      %v840 = vld [vmem:[%s1 + $0x4d8] sm:$0xf]
      %v841 = vld [vmem:[%s1 + $0x4dc] sm:$0xf]
      %v842 = vld [vmem:[%s1 + $0x4e0] sm:$0xf]
      %v843 = vld [vmem:[%s1 + $0x4e4] sm:$0xf]
      %v844 = vld [vmem:[%s1 + $0x4e8] sm:$0xf]
      %v845 = vld [vmem:[%s1 + $0x4ec] sm:$0xf]
      %v846 = vld [vmem:[%s1 + $0x4f0] sm:$0xf]
      %v847 = vld [vmem:[%s1 + $0x4f4] sm:$0xf]
      %v848 = vld [vmem:[%s1 + $0x4f8] sm:$0xf]
      %v849 = vld [vmem:[%s1 + $0x4fc] sm:$0xf]
      %v850 = vld [vmem:[%s1 + $0x500] sm:$0xf]
      %v851 = vld [vmem:[%s1 + $0x504] sm:$0xf]
      %v852 = vld [vmem:[%s1 + $0x508] sm:$0xf]
      %v853 = vld [vmem:[%s1 + $0x50c] sm:$0xf]
      %v854 = vld [vmem:[%s2] sm:$0x1]
      %v856 = vperm.slane %v854, 0
      %v1210 = vunpack.c.l.b16 %v178
      %v1211 = vunpack.c.h.b16 %v178
      %v1212 = vunpack.c.l.b16 %v179
      %v1213 = vunpack.c.h.b16 %v179
      %v1214 = vunpack.c.l.b16 %v180
      %v1215 = vunpack.c.h.b16 %v180
      %v1216 = vunpack.c.l.b16 %v181
      %v1217 = vunpack.c.h.b16 %v181
      %v1218 = vunpack.c.l.b16 %v182
      %v1219 = vunpack.c.h.b16 %v182
      %v1220 = vunpack.c.l.b16 %v183
      %v1221 = vunpack.c.h.b16 %v183
      %v1222 = vunpack.c.l.b16 %v184
      %v1223 = vunpack.c.h.b16 %v184
      %v1224 = vunpack.c.l.b16 %v185
      %v1225 = vunpack.c.h.b16 %v185
      %v1226 = vunpack.c.l.b16 %v186
      %v1227 = vunpack.c.h.b16 %v186
      %v1228 = vunpack.c.l.b16 %v187
      %v1229 = vunpack.c.h.b16 %v187
      %v1230 = vunpack.c.l.b16 %v188
      %v1231 = vunpack.c.l.b16 %v189
      %v1232 = vunpack.c.h.b16 %v189
      %v1233 = vunpack.c.l.b16 %v190
      %v1234 = vunpack.c.h.b16 %v190
      %v1235 = vunpack.c.l.b16 %v191
      %v1236 = vunpack.c.h.b16 %v191
      %v1237 = vunpack.c.l.b16 %v192
      %v1238 = vunpack.c.h.b16 %v192
      %v1239 = vunpack.c.l.b16 %v193
      %v1240 = vunpack.c.h.b16 %v193
      %v1241 = vunpack.c.l.b16 %v194
      %v1242 = vunpack.c.h.b16 %v194
      %v1243 = vunpack.c.l.b16 %v195
      %v1244 = vunpack.c.h.b16 %v195
      %v1245 = vunpack.c.l.b16 %v196
      %v1246 = vunpack.c.h.b16 %v196
      %v1247 = vunpack.c.l.b16 %v197
      %v1248 = vunpack.c.h.b16 %v197
      %v1249 = vunpack.c.l.b16 %v198
      %v1250 = vunpack.c.h.b16 %v198
      %v1251 = vunpack.c.l.b16 %v199
      %v1252 = vunpack.c.l.b16 %v200
      %v1253 = vunpack.c.h.b16 %v200
      %v1254 = vunpack.c.l.b16 %v201
      %v1255 = vunpack.c.h.b16 %v201
      %v1256 = vunpack.c.l.b16 %v202
      %v1257 = vunpack.c.h.b16 %v202
      %v1258 = vunpack.c.l.b16 %v203
      %v1259 = vunpack.c.h.b16 %v203
      %v1260 = vunpack.c.l.b16 %v204
      %v1261 = vunpack.c.h.b16 %v204
      %v1262 = vunpack.c.l.b16 %v205
      %v1263 = vunpack.c.h.b16 %v205
      %v1264 = vunpack.c.l.b16 %v206
      %v1265 = vunpack.c.h.b16 %v206
      %v1266 = vunpack.c.l.b16 %v207
      %v1267 = vunpack.c.h.b16 %v207
      %v1268 = vunpack.c.l.b16 %v208
      %v1269 = vunpack.c.h.b16 %v208
      %v1270 = vunpack.c.l.b16 %v209
      %v1271 = vunpack.c.h.b16 %v209
      %v1272 = vunpack.c.l.b16 %v210
      %v1273 = vunpack.c.l.b16 %v211
      %v1274 = vunpack.c.h.b16 %v211
      %v1275 = vunpack.c.l.b16 %v212
      %v1276 = vunpack.c.h.b16 %v212
      %v1277 = vunpack.c.l.b16 %v213
      %v1278 = vunpack.c.h.b16 %v213
      %v1279 = vunpack.c.l.b16 %v214
      %v1280 = vunpack.c.h.b16 %v214
      %v1281 = vunpack.c.l.b16 %v215
      %v1282 = vunpack.c.h.b16 %v215
      %v1283 = vunpack.c.l.b16 %v216
      %v1284 = vunpack.c.h.b16 %v216
      %v1285 = vunpack.c.l.b16 %v217
      %v1286 = vunpack.c.h.b16 %v217
      %v1287 = vunpack.c.l.b16 %v218
      %v1288 = vunpack.c.h.b16 %v218
      %v1289 = vunpack.c.l.b16 %v219
      %v1290 = vunpack.c.h.b16 %v219
      %v1291 = vunpack.c.l.b16 %v220
      %v1292 = vunpack.c.h.b16 %v220
      %v1293 = vunpack.c.l.b16 %v221
      %v1294 = vunpack.c.l.b16 %v222
      %v1295 = vunpack.c.h.b16 %v222
      %v1296 = vunpack.c.l.b16 %v223
      %v1297 = vunpack.c.h.b16 %v223
      %v1298 = vunpack.c.l.b16 %v224
      %v1299 = vunpack.c.h.b16 %v224
      %v1300 = vunpack.c.l.b16 %v225
      %v1301 = vunpack.c.h.b16 %v225
      %v1302 = vunpack.c.l.b16 %v226
      %v1303 = vunpack.c.h.b16 %v226
      %v1304 = vunpack.c.l.b16 %v227
      %v1305 = vunpack.c.h.b16 %v227
      %v1306 = vunpack.c.l.b16 %v228
      %v1307 = vunpack.c.h.b16 %v228
      %v1308 = vunpack.c.l.b16 %v229
      %v1309 = vunpack.c.h.b16 %v229
      %v1310 = vunpack.c.l.b16 %v230
      %v1311 = vunpack.c.h.b16 %v230
      %v1312 = vunpack.c.l.b16 %v231
      %v1313 = vunpack.c.h.b16 %v231
      %v1314 = vunpack.c.l.b16 %v232
      %v1315 = vunpack.c.l.b16 %v233
      %v1316 = vunpack.c.h.b16 %v233
      %v1317 = vunpack.c.l.b16 %v234
      %v1318 = vunpack.c.h.b16 %v234
      %v1319 = vunpack.c.l.b16 %v235
      %v1320 = vunpack.c.h.b16 %v235
      %v1321 = vunpack.c.l.b16 %v236
      %v1322 = vunpack.c.h.b16 %v236
      %v1323 = vunpack.c.l.b16 %v237
      %v1324 = vunpack.c.h.b16 %v237
      %v1325 = vunpack.c.l.b16 %v238
      %v1326 = vunpack.c.h.b16 %v238
      %v1327 = vunpack.c.l.b16 %v239
      %v1328 = vunpack.c.h.b16 %v239
      %v1329 = vunpack.c.l.b16 %v240
      %v1330 = vunpack.c.h.b16 %v240
      %v1331 = vunpack.c.l.b16 %v241
      %v1332 = vunpack.c.h.b16 %v241
      %v1333 = vunpack.c.l.b16 %v242
      %v1334 = vunpack.c.h.b16 %v242
      %v1335 = vunpack.c.l.b16 %v243
      %v1336 = vunpack.c.l.b16 %v244
      %v1337 = vunpack.c.h.b16 %v244
      %v1338 = vunpack.c.l.b16 %v245
      %v1339 = vunpack.c.h.b16 %v245
      %v1340 = vunpack.c.l.b16 %v246
      %v1341 = vunpack.c.h.b16 %v246
      %v1342 = vunpack.c.l.b16 %v247
      %v1343 = vunpack.c.h.b16 %v247
      %v1344 = vunpack.c.l.b16 %v248
      %v1345 = vunpack.c.h.b16 %v248
      %v1346 = vunpack.c.l.b16 %v249
      %v1347 = vunpack.c.h.b16 %v249
      %v1348 = vunpack.c.l.b16 %v250
      %v1349 = vunpack.c.h.b16 %v250
      %v1350 = vunpack.c.l.b16 %v251
      %v1351 = vunpack.c.h.b16 %v251
      %v1352 = vunpack.c.l.b16 %v252
      %v1353 = vunpack.c.h.b16 %v252
      %v1354 = vunpack.c.l.b16 %v253
      %v1355 = vunpack.c.h.b16 %v253
      %v1356 = vunpack.c.l.b16 %v254
      %v1357 = vunpack.c.l.b16 %v255
      %v1358 = vunpack.c.h.b16 %v255
      %v1359 = vunpack.c.l.b16 %v256
      %v1360 = vunpack.c.h.b16 %v256
      %v1361 = vunpack.c.l.b16 %v257
      %v1362 = vunpack.c.h.b16 %v257
      %v1363 = vunpack.c.l.b16 %v258
      %v1364 = vunpack.c.h.b16 %v258
      %v1365 = vunpack.c.l.b16 %v259
      %v1366 = vunpack.c.h.b16 %v259
      %v1367 = vunpack.c.l.b16 %v260
      %v1368 = vunpack.c.h.b16 %v260
      %v1369 = vunpack.c.l.b16 %v261
      %v1370 = vunpack.c.h.b16 %v261
      %v1371 = vunpack.c.l.b16 %v262
      %v1372 = vunpack.c.h.b16 %v262
      %v1373 = vunpack.c.l.b16 %v263
      %v1374 = vunpack.c.h.b16 %v263
      %v1375 = vunpack.c.l.b16 %v264
      %v1376 = vunpack.c.h.b16 %v264
      %v1377 = vunpack.c.l.b16 %v265
      %v1378 = vunpack.c.l.b16 %v266
      %v1379 = vunpack.c.h.b16 %v266
      %v1380 = vunpack.c.l.b16 %v267
      %v1381 = vunpack.c.h.b16 %v267
      %v1382 = vunpack.c.l.b16 %v268
      %v1383 = vunpack.c.h.b16 %v268
      %v1384 = vunpack.c.l.b16 %v269
      %v1385 = vunpack.c.h.b16 %v269
      %v1386 = vunpack.c.l.b16 %v270
      %v1387 = vunpack.c.h.b16 %v270
      %v1388 = vunpack.c.l.b16 %v271
      %v1389 = vunpack.c.h.b16 %v271
      %v1390 = vunpack.c.l.b16 %v272
      %v1391 = vunpack.c.h.b16 %v272
      %v1392 = vunpack.c.l.b16 %v273
      %v1393 = vunpack.c.h.b16 %v273
      %v1394 = vunpack.c.l.b16 %v274
      %v1395 = vunpack.c.h.b16 %v274
      %v1396 = vunpack.c.l.b16 %v275
      %v1397 = vunpack.c.h.b16 %v275
      %v1398 = vunpack.c.l.b16 %v276
      %v1399 = vunpack.c.l.b16 %v277
      %v1400 = vunpack.c.h.b16 %v277
      %v1401 = vunpack.c.l.b16 %v278
      %v1402 = vunpack.c.h.b16 %v278
      %v1403 = vunpack.c.l.b16 %v279
      %v1404 = vunpack.c.h.b16 %v279
      %v1405 = vunpack.c.l.b16 %v280
      %v1406 = vunpack.c.h.b16 %v280
      %v1407 = vunpack.c.l.b16 %v281
      %v1408 = vunpack.c.h.b16 %v281
      %v1409 = vunpack.c.l.b16 %v282
      %v1410 = vunpack.c.h.b16 %v282
      %v1411 = vunpack.c.l.b16 %v283
      %v1412 = vunpack.c.h.b16 %v283
      %v1413 = vunpack.c.l.b16 %v284
      %v1414 = vunpack.c.h.b16 %v284
      %v1415 = vunpack.c.l.b16 %v285
      %v1416 = vunpack.c.h.b16 %v285
      %v1417 = vunpack.c.l.b16 %v286
      %v1418 = vunpack.c.h.b16 %v286
      %v1419 = vunpack.c.l.b16 %v287
      %v1420 = vunpack.c.l.b16 %v288
      %v1421 = vunpack.c.h.b16 %v288
      %v1422 = vunpack.c.l.b16 %v289
      %v1423 = vunpack.c.h.b16 %v289
      %v1424 = vunpack.c.l.b16 %v290
      %v1425 = vunpack.c.h.b16 %v290
      %v1426 = vunpack.c.l.b16 %v291
      %v1427 = vunpack.c.h.b16 %v291
      %v1428 = vunpack.c.l.b16 %v292
      %v1429 = vunpack.c.h.b16 %v292
      %v1430 = vunpack.c.l.b16 %v293
      %v1431 = vunpack.c.h.b16 %v293
      %v1432 = vunpack.c.l.b16 %v294
      %v1433 = vunpack.c.h.b16 %v294
      %v1434 = vunpack.c.l.b16 %v295
      %v1435 = vunpack.c.h.b16 %v295
      %v1436 = vunpack.c.l.b16 %v296
      %v1437 = vunpack.c.h.b16 %v296
      %v1438 = vunpack.c.l.b16 %v297
      %v1439 = vunpack.c.h.b16 %v297
      %v1440 = vunpack.c.l.b16 %v298
      %v1441 = vunpack.c.l.b16 %v299
      %v1442 = vunpack.c.h.b16 %v299
      %v1443 = vunpack.c.l.b16 %v300
      %v1444 = vunpack.c.h.b16 %v300
      %v1445 = vunpack.c.l.b16 %v301
      %v1446 = vunpack.c.h.b16 %v301
      %v1447 = vunpack.c.l.b16 %v302
      %v1448 = vunpack.c.h.b16 %v302
      %v1449 = vunpack.c.l.b16 %v303
      %v1450 = vunpack.c.h.b16 %v303
      %v1451 = vunpack.c.l.b16 %v304
      %v1452 = vunpack.c.h.b16 %v304
      %v1453 = vunpack.c.l.b16 %v305
      %v1454 = vunpack.c.h.b16 %v305
      %v1455 = vunpack.c.l.b16 %v306
      %v1456 = vunpack.c.h.b16 %v306
      %v1457 = vunpack.c.l.b16 %v307
      %v1458 = vunpack.c.h.b16 %v307
      %v1459 = vunpack.c.l.b16 %v308
      %v1460 = vunpack.c.h.b16 %v308
      %v1461 = vunpack.c.l.b16 %v309
      %v1462 = vunpack.c.l.b16 %v310
      %v1463 = vunpack.c.h.b16 %v310
      %v1464 = vunpack.c.l.b16 %v311
      %v1465 = vunpack.c.h.b16 %v311
      %v1466 = vunpack.c.l.b16 %v312
      %v1467 = vunpack.c.h.b16 %v312
      %v1468 = vunpack.c.l.b16 %v313
      %v1469 = vunpack.c.h.b16 %v313
      %v1470 = vunpack.c.l.b16 %v314
      %v1471 = vunpack.c.h.b16 %v314
      %v1472 = vunpack.c.l.b16 %v315
      %v1473 = vunpack.c.h.b16 %v315
      %v1474 = vunpack.c.l.b16 %v316
      %v1475 = vunpack.c.h.b16 %v316
      %v1476 = vunpack.c.l.b16 %v317
      %v1477 = vunpack.c.h.b16 %v317
      %v1478 = vunpack.c.l.b16 %v318
      %v1479 = vunpack.c.h.b16 %v318
      %v1480 = vunpack.c.l.b16 %v319
      %v1481 = vunpack.c.h.b16 %v319
      %v1482 = vunpack.c.l.b16 %v320
      %v1483 = vunpack.c.l.b16 %v321
      %v1484 = vunpack.c.h.b16 %v321
      %v1485 = vunpack.c.l.b16 %v322
      %v1486 = vunpack.c.h.b16 %v322
      %v1487 = vunpack.c.l.b16 %v323
      %v1488 = vunpack.c.h.b16 %v323
      %v1489 = vunpack.c.l.b16 %v324
      %v1490 = vunpack.c.h.b16 %v324
      %v1491 = vunpack.c.l.b16 %v325
      %v1492 = vunpack.c.h.b16 %v325
      %v1493 = vunpack.c.l.b16 %v326
      %v1494 = vunpack.c.h.b16 %v326
      %v1495 = vunpack.c.l.b16 %v327
      %v1496 = vunpack.c.h.b16 %v327
      %v1497 = vunpack.c.l.b16 %v328
      %v1498 = vunpack.c.h.b16 %v328
      %v1499 = vunpack.c.l.b16 %v329
      %v1500 = vunpack.c.h.b16 %v329
      %v1501 = vunpack.c.l.b16 %v330
      %v1502 = vunpack.c.h.b16 %v330
      %v1503 = vunpack.c.l.b16 %v331
      %v1504 = vunpack.c.l.b16 %v332
      %v1505 = vunpack.c.h.b16 %v332
      %v1506 = vunpack.c.l.b16 %v333
      %v1507 = vunpack.c.h.b16 %v333
      %v1508 = vunpack.c.l.b16 %v334
      %v1509 = vunpack.c.h.b16 %v334
      %v1510 = vunpack.c.l.b16 %v335
      %v1511 = vunpack.c.h.b16 %v335
      %v1512 = vunpack.c.l.b16 %v336
      %v1513 = vunpack.c.h.b16 %v336
      %v1514 = vunpack.c.l.b16 %v337
      %v1515 = vunpack.c.h.b16 %v337
      %v1516 = vunpack.c.l.b16 %v338
      %v1517 = vunpack.c.h.b16 %v338
      %v1518 = vunpack.c.l.b16 %v339
      %v1519 = vunpack.c.h.b16 %v339
      %v1520 = vunpack.c.l.b16 %v340
      %v1521 = vunpack.c.h.b16 %v340
      %v1522 = vunpack.c.l.b16 %v341
      %v1523 = vunpack.c.h.b16 %v341
      %v1524 = vunpack.c.l.b16 %v342
      %v1525 = vunpack.c.l.b16 %v343
      %v1526 = vunpack.c.h.b16 %v343
      %v1527 = vunpack.c.l.b16 %v344
      %v1528 = vunpack.c.h.b16 %v344
      %v1529 = vunpack.c.l.b16 %v345
      %v1530 = vunpack.c.h.b16 %v345
      %v1531 = vunpack.c.l.b16 %v346
      %v1532 = vunpack.c.h.b16 %v346
      %v1533 = vunpack.c.l.b16 %v347
      %v1534 = vunpack.c.h.b16 %v347
      %v1535 = vunpack.c.l.b16 %v348
      %v1536 = vunpack.c.h.b16 %v348
      %v1537 = vunpack.c.l.b16 %v349
      %v1538 = vunpack.c.h.b16 %v349
      %v1539 = vunpack.c.l.b16 %v350
      %v1540 = vunpack.c.h.b16 %v350
      %v1541 = vunpack.c.l.b16 %v351
      %v1542 = vunpack.c.h.b16 %v351
      %v1543 = vunpack.c.l.b16 %v352
      %v1544 = vunpack.c.h.b16 %v352
      %v1545 = vunpack.c.l.b16 %v353
      %v1546 = vunpack.c.l.b16 %v354
      %v1547 = vunpack.c.h.b16 %v354
      %v1548 = vunpack.c.l.b16 %v355
      %v1549 = vunpack.c.h.b16 %v355
      %v1550 = vunpack.c.l.b16 %v356
      %v1551 = vunpack.c.h.b16 %v356
      %v1552 = vunpack.c.l.b16 %v357
      %v1553 = vunpack.c.h.b16 %v357
      %v1554 = vunpack.c.l.b16 %v358
      %v1555 = vunpack.c.h.b16 %v358
      %v1556 = vunpack.c.l.b16 %v359
      %v1557 = vunpack.c.h.b16 %v359
      %v1558 = vunpack.c.l.b16 %v360
      %v1559 = vunpack.c.h.b16 %v360
      %v1560 = vunpack.c.l.b16 %v361
      %v1561 = vunpack.c.h.b16 %v361
      %v1562 = vunpack.c.l.b16 %v362
      %v1563 = vunpack.c.h.b16 %v362
      %v1564 = vunpack.c.l.b16 %v363
      %v1565 = vunpack.c.h.b16 %v363
      %v1566 = vunpack.c.l.b16 %v364
      %v1567 = vunpack.c.l.b16 %v365
      %v1568 = vunpack.c.h.b16 %v365
      %v1569 = vunpack.c.l.b16 %v366
      %v1570 = vunpack.c.h.b16 %v366
      %v1571 = vunpack.c.l.b16 %v367
      %v1572 = vunpack.c.h.b16 %v367
      %v1573 = vunpack.c.l.b16 %v368
      %v1574 = vunpack.c.h.b16 %v368
      %v1575 = vunpack.c.l.b16 %v369
      %v1576 = vunpack.c.h.b16 %v369
      %v1577 = vunpack.c.l.b16 %v370
      %v1578 = vunpack.c.h.b16 %v370
      %v1579 = vunpack.c.l.b16 %v371
      %v1580 = vunpack.c.h.b16 %v371
      %v1581 = vunpack.c.l.b16 %v372
      %v1582 = vunpack.c.h.b16 %v372
      %v1583 = vunpack.c.l.b16 %v373
      %v1584 = vunpack.c.h.b16 %v373
      %v1585 = vunpack.c.l.b16 %v374
      %v1586 = vunpack.c.h.b16 %v374
      %v1587 = vunpack.c.l.b16 %v375
      %v1588 = vunpack.c.l.b16 %v376
      %v1589 = vunpack.c.h.b16 %v376
      %v1590 = vunpack.c.l.b16 %v377
      %v1591 = vunpack.c.h.b16 %v377
      %v1592 = vunpack.c.l.b16 %v378
      %v1593 = vunpack.c.h.b16 %v378
      %v1594 = vunpack.c.l.b16 %v379
      %v1595 = vunpack.c.h.b16 %v379
      %v1596 = vunpack.c.l.b16 %v380
      %v1597 = vunpack.c.h.b16 %v380
      %v1598 = vunpack.c.l.b16 %v381
      %v1599 = vunpack.c.h.b16 %v381
      %v1600 = vunpack.c.l.b16 %v382
      %v1601 = vunpack.c.h.b16 %v382
      %v1602 = vunpack.c.l.b16 %v383
      %v1603 = vunpack.c.h.b16 %v383
      %v1604 = vunpack.c.l.b16 %v384
      %v1605 = vunpack.c.h.b16 %v384
      %v1606 = vunpack.c.l.b16 %v385
      %v1607 = vunpack.c.h.b16 %v385
      %v1608 = vunpack.c.l.b16 %v386
      %v1609 = vunpack.c.l.b16 %v387
      %v1610 = vunpack.c.h.b16 %v387
      %v1611 = vunpack.c.l.b16 %v388
      %v1612 = vunpack.c.h.b16 %v388
      %v1613 = vunpack.c.l.b16 %v389
      %v1614 = vunpack.c.h.b16 %v389
      %v1615 = vunpack.c.l.b16 %v390
      %v1616 = vunpack.c.h.b16 %v390
      %v1617 = vunpack.c.l.b16 %v391
      %v1618 = vunpack.c.h.b16 %v391
      %v1619 = vunpack.c.l.b16 %v392
      %v1620 = vunpack.c.h.b16 %v392
      %v1621 = vunpack.c.l.b16 %v393
      %v1622 = vunpack.c.h.b16 %v393
      %v1623 = vunpack.c.l.b16 %v394
      %v1624 = vunpack.c.h.b16 %v394
      %v1625 = vunpack.c.l.b16 %v395
      %v1626 = vunpack.c.h.b16 %v395
      %v1627 = vunpack.c.l.b16 %v396
      %v1628 = vunpack.c.h.b16 %v396
      %v1629 = vunpack.c.l.b16 %v397
      %v1630 = vunpack.c.l.b16 %v398
      %v1631 = vunpack.c.h.b16 %v398
      %v1632 = vunpack.c.l.b16 %v399
      %v1633 = vunpack.c.h.b16 %v399
      %v1634 = vunpack.c.l.b16 %v400
      %v1635 = vunpack.c.h.b16 %v400
      %v1636 = vunpack.c.l.b16 %v401
      %v1637 = vunpack.c.h.b16 %v401
      %v1638 = vunpack.c.l.b16 %v402
      %v1639 = vunpack.c.h.b16 %v402
      %v1640 = vunpack.c.l.b16 %v403
      %v1641 = vunpack.c.h.b16 %v403
      %v1642 = vunpack.c.l.b16 %v404
      %v1643 = vunpack.c.h.b16 %v404
      %v1644 = vunpack.c.l.b16 %v405
      %v1645 = vunpack.c.h.b16 %v405
      %v1646 = vunpack.c.l.b16 %v406
      %v1647 = vunpack.c.h.b16 %v406
      %v1648 = vunpack.c.l.b16 %v407
      %v1649 = vunpack.c.h.b16 %v407
      %v1650 = vunpack.c.l.b16 %v408
      %v1651 = vunpack.c.l.b16 %v409
      %v1652 = vunpack.c.h.b16 %v409
      %v1653 = vunpack.c.l.b16 %v410
      %v1654 = vunpack.c.h.b16 %v410
      %v1655 = vunpack.c.l.b16 %v411
      %v1656 = vunpack.c.h.b16 %v411
      %v1657 = vunpack.c.l.b16 %v412
      %v1658 = vunpack.c.h.b16 %v412
      %v1659 = vunpack.c.l.b16 %v413
      %v1660 = vunpack.c.h.b16 %v413
      %v1661 = vunpack.c.l.b16 %v414
      %v1662 = vunpack.c.h.b16 %v414
      %v1663 = vunpack.c.l.b16 %v415
      %v1664 = vunpack.c.h.b16 %v415
      %v1665 = vunpack.c.l.b16 %v416
      %v1666 = vunpack.c.h.b16 %v416
      %v1667 = vunpack.c.l.b16 %v417
      %v1668 = vunpack.c.h.b16 %v417
      %v1669 = vunpack.c.l.b16 %v418
      %v1670 = vunpack.c.h.b16 %v418
      %v1671 = vunpack.c.l.b16 %v419
      %v1672 = vunpack.c.l.b16 %v420
      %v1673 = vunpack.c.h.b16 %v420
      %v1674 = vunpack.c.l.b16 %v421
      %v1675 = vunpack.c.h.b16 %v421
      %v1676 = vunpack.c.l.b16 %v422
      %v1677 = vunpack.c.h.b16 %v422
      %v1678 = vunpack.c.l.b16 %v423
      %v1679 = vunpack.c.h.b16 %v423
      %v1680 = vunpack.c.l.b16 %v424
      %v1681 = vunpack.c.h.b16 %v424
      %v1682 = vunpack.c.l.b16 %v425
      %v1683 = vunpack.c.h.b16 %v425
      %v1684 = vunpack.c.l.b16 %v426
      %v1685 = vunpack.c.h.b16 %v426
      %v1686 = vunpack.c.l.b16 %v427
      %v1687 = vunpack.c.h.b16 %v427
      %v1688 = vunpack.c.l.b16 %v428
      %v1689 = vunpack.c.h.b16 %v428
      %v1690 = vunpack.c.l.b16 %v429
      %v1691 = vunpack.c.h.b16 %v429
      %v1692 = vunpack.c.l.b16 %v430
      %v1693 = vunpack.c.l.b16 %v431
      %v1694 = vunpack.c.h.b16 %v431
      %v1695 = vunpack.c.l.b16 %v432
      %v1696 = vunpack.c.h.b16 %v432
      %v1697 = vunpack.c.l.b16 %v433
      %v1698 = vunpack.c.h.b16 %v433
      %v1699 = vunpack.c.l.b16 %v434
      %v1700 = vunpack.c.h.b16 %v434
      %v1701 = vunpack.c.l.b16 %v435
      %v1702 = vunpack.c.h.b16 %v435
      %v1703 = vunpack.c.l.b16 %v436
      %v1704 = vunpack.c.h.b16 %v436
      %v1705 = vunpack.c.l.b16 %v437
      %v1706 = vunpack.c.h.b16 %v437
      %v1707 = vunpack.c.l.b16 %v438
      %v1708 = vunpack.c.h.b16 %v438
      %v1709 = vunpack.c.l.b16 %v439
      %v1710 = vunpack.c.h.b16 %v439
      %v1711 = vunpack.c.l.b16 %v440
      %v1712 = vunpack.c.h.b16 %v440
      %v1713 = vunpack.c.l.b16 %v441
      %v1714 = vunpack.c.l.b16 %v442
      %v1715 = vunpack.c.h.b16 %v442
      %v1716 = vunpack.c.l.b16 %v443
      %v1717 = vunpack.c.h.b16 %v443
      %v1718 = vunpack.c.l.b16 %v444
      %v1719 = vunpack.c.h.b16 %v444
      %v1720 = vunpack.c.l.b16 %v445
      %v1721 = vunpack.c.h.b16 %v445
      %v1722 = vunpack.c.l.b16 %v446
      %v1723 = vunpack.c.h.b16 %v446
      %v1724 = vunpack.c.l.b16 %v447
      %v1725 = vunpack.c.h.b16 %v447
      %v1726 = vunpack.c.l.b16 %v448
      %v1727 = vunpack.c.h.b16 %v448
      %v1728 = vunpack.c.l.b16 %v449
      %v1729 = vunpack.c.h.b16 %v449
      %v1730 = vunpack.c.l.b16 %v450
      %v1731 = vunpack.c.h.b16 %v450
      %v1732 = vunpack.c.l.b16 %v451
      %v1733 = vunpack.c.h.b16 %v451
      %v1734 = vunpack.c.l.b16 %v452
      %v1735 = vunpack.c.l.b16 %v453
      %v1736 = vunpack.c.h.b16 %v453
      %v1737 = vunpack.c.l.b16 %v454
      %v1738 = vunpack.c.h.b16 %v454
      %v1739 = vunpack.c.l.b16 %v455
      %v1740 = vunpack.c.h.b16 %v455
      %v1741 = vunpack.c.l.b16 %v456
      %v1742 = vunpack.c.h.b16 %v456
      %v1743 = vunpack.c.l.b16 %v457
      %v1744 = vunpack.c.h.b16 %v457
      %v1745 = vunpack.c.l.b16 %v458
      %v1746 = vunpack.c.h.b16 %v458
      %v1747 = vunpack.c.l.b16 %v459
      %v1748 = vunpack.c.h.b16 %v459
      %v1749 = vunpack.c.l.b16 %v460
      %v1750 = vunpack.c.h.b16 %v460
      %v1751 = vunpack.c.l.b16 %v461
      %v1752 = vunpack.c.h.b16 %v461
      %v1753 = vunpack.c.l.b16 %v462
      %v1754 = vunpack.c.h.b16 %v462
      %v1755 = vunpack.c.l.b16 %v463
      %v1756 = vunpack.c.l.b16 %v464
      %v1757 = vunpack.c.h.b16 %v464
      %v1758 = vunpack.c.l.b16 %v465
      %v1759 = vunpack.c.h.b16 %v465
      %v1760 = vunpack.c.l.b16 %v466
      %v1761 = vunpack.c.h.b16 %v466
      %v1762 = vunpack.c.l.b16 %v467
      %v1763 = vunpack.c.h.b16 %v467
      %v1764 = vunpack.c.l.b16 %v468
      %v1765 = vunpack.c.h.b16 %v468
      %v1766 = vunpack.c.l.b16 %v469
      %v1767 = vunpack.c.h.b16 %v469
      %v1768 = vunpack.c.l.b16 %v470
      %v1769 = vunpack.c.h.b16 %v470
      %v1770 = vunpack.c.l.b16 %v471
      %v1771 = vunpack.c.h.b16 %v471
      %v1772 = vunpack.c.l.b16 %v472
      %v1773 = vunpack.c.h.b16 %v472
      %v1774 = vunpack.c.l.b16 %v473
      %v1775 = vunpack.c.h.b16 %v473
      %v1776 = vunpack.c.l.b16 %v474
      %v1777 = vunpack.c.l.b16 %v475
      %v1778 = vunpack.c.h.b16 %v475
      %v1779 = vunpack.c.l.b16 %v476
      %v1780 = vunpack.c.h.b16 %v476
      %v1781 = vunpack.c.l.b16 %v477
      %v1782 = vunpack.c.h.b16 %v477
      %v1783 = vunpack.c.l.b16 %v478
      %v1784 = vunpack.c.h.b16 %v478
      %v1785 = vunpack.c.l.b16 %v479
      %v1786 = vunpack.c.h.b16 %v479
      %v1787 = vunpack.c.l.b16 %v480
      %v1788 = vunpack.c.h.b16 %v480
      %v1789 = vunpack.c.l.b16 %v481
      %v1790 = vunpack.c.h.b16 %v481
      %v1791 = vunpack.c.l.b16 %v482
      %v1792 = vunpack.c.h.b16 %v482
      %v1793 = vunpack.c.l.b16 %v483
      %v1794 = vunpack.c.h.b16 %v483
      %v1795 = vunpack.c.l.b16 %v484
      %v1796 = vunpack.c.h.b16 %v484
      %v1797 = vunpack.c.l.b16 %v485
      %v1798 = vunpack.c.l.b16 %v486
      %v1799 = vunpack.c.h.b16 %v486
      %v1800 = vunpack.c.l.b16 %v487
      %v1801 = vunpack.c.h.b16 %v487
      %v1802 = vunpack.c.l.b16 %v488
      %v1803 = vunpack.c.h.b16 %v488
      %v1804 = vunpack.c.l.b16 %v489
      %v1805 = vunpack.c.h.b16 %v489
      %v1806 = vunpack.c.l.b16 %v490
      %v1807 = vunpack.c.h.b16 %v490
      %v1808 = vunpack.c.l.b16 %v491
      %v1809 = vunpack.c.h.b16 %v491
      %v1810 = vunpack.c.l.b16 %v492
      %v1811 = vunpack.c.h.b16 %v492
      %v1812 = vunpack.c.l.b16 %v493
      %v1813 = vunpack.c.h.b16 %v493
      %v1814 = vunpack.c.l.b16 %v494
      %v1815 = vunpack.c.h.b16 %v494
      %v1816 = vunpack.c.l.b16 %v495
      %v1817 = vunpack.c.h.b16 %v495
      %v1818 = vunpack.c.l.b16 %v496
      %v1819 = vunpack.c.l.b16 %v497
      %v1820 = vunpack.c.h.b16 %v497
      %v1821 = vunpack.c.l.b16 %v498
      %v1822 = vunpack.c.h.b16 %v498
      %v1823 = vunpack.c.l.b16 %v499
      %v1824 = vunpack.c.h.b16 %v499
      %v1825 = vunpack.c.l.b16 %v500
      %v1826 = vunpack.c.h.b16 %v500
      %v1827 = vunpack.c.l.b16 %v501
      %v1828 = vunpack.c.h.b16 %v501
      %v1829 = vunpack.c.l.b16 %v502
      %v1830 = vunpack.c.h.b16 %v502
      %v1831 = vunpack.c.l.b16 %v503
      %v1832 = vunpack.c.h.b16 %v503
      %v1833 = vunpack.c.l.b16 %v504
      %v1834 = vunpack.c.h.b16 %v504
      %v1835 = vunpack.c.l.b16 %v505
      %v1836 = vunpack.c.h.b16 %v505
      %v1837 = vunpack.c.l.b16 %v506
      %v1838 = vunpack.c.h.b16 %v506
      %v1839 = vunpack.c.l.b16 %v507
      %v1840 = vunpack.c.l.b16 %v508
      %v1841 = vunpack.c.h.b16 %v508
      %v1842 = vunpack.c.l.b16 %v509
      %v1843 = vunpack.c.h.b16 %v509
      %v1844 = vunpack.c.l.b16 %v510
      %v1845 = vunpack.c.h.b16 %v510
      %v1846 = vunpack.c.l.b16 %v511
      %v1847 = vunpack.c.h.b16 %v511
      %v1848 = vunpack.c.l.b16 %v512
      %v1849 = vunpack.c.h.b16 %v512
      %v1850 = vunpack.c.l.b16 %v513
      %v1851 = vunpack.c.h.b16 %v513
      %v1852 = vunpack.c.l.b16 %v514
      %v1853 = vunpack.c.h.b16 %v514
      %v1854 = vunpack.c.l.b16 %v515
      %v1855 = vunpack.c.h.b16 %v515
      %v1856 = vunpack.c.l.b16 %v516
      %v1857 = vunpack.c.h.b16 %v516
      %v1858 = vunpack.c.l.b16 %v517
      %v1859 = vunpack.c.h.b16 %v517
      %v1860 = vunpack.c.l.b16 %v518
      %v1861 = vunpack.c.l.b16 %v519
      %v1862 = vunpack.c.h.b16 %v519
      %v1863 = vunpack.c.l.b16 %v520
      %v1864 = vunpack.c.h.b16 %v520
      %v1865 = vunpack.c.l.b16 %v521
      %v1866 = vunpack.c.h.b16 %v521
      %v1867 = vunpack.c.l.b16 %v522
      %v1868 = vunpack.c.h.b16 %v522
      %v1869 = vunpack.c.l.b16 %v523
      %v1870 = vunpack.c.h.b16 %v523
      %v1871 = vunpack.c.l.b16 %v524
      %v1872 = vunpack.c.h.b16 %v524
      %v1873 = vunpack.c.l.b16 %v525
      %v1874 = vunpack.c.h.b16 %v525
      %v1875 = vunpack.c.l.b16 %v526
      %v1876 = vunpack.c.h.b16 %v526
      %v1877 = vunpack.c.l.b16 %v527
      %v1878 = vunpack.c.h.b16 %v527
      %v1879 = vunpack.c.l.b16 %v528
      %v1880 = vunpack.c.h.b16 %v528
      %v1881 = vunpack.c.l.b16 %v529
      %v1882 = vpack.c.b16 %v1231, %v1210
      %v1883 = vpack.c.b16 %v1232, %v1211
      %v1884 = vpack.c.b16 %v1233, %v1212
      %v1885 = vpack.c.b16 %v1234, %v1213
      %v1886 = vpack.c.b16 %v1235, %v1214
      %v1887 = vpack.c.b16 %v1236, %v1215
      %v1888 = vpack.c.b16 %v1237, %v1216
      %v1889 = vpack.c.b16 %v1238, %v1217
      %v1890 = vpack.c.b16 %v1239, %v1218
      %v1891 = vpack.c.b16 %v1240, %v1219
      %v1892 = vpack.c.b16 %v1241, %v1220
      %v1893 = vpack.c.b16 %v1242, %v1221
      %v1894 = vpack.c.b16 %v1243, %v1222
      %v1895 = vpack.c.b16 %v1244, %v1223
      %v1896 = vpack.c.b16 %v1245, %v1224
      %v1897 = vpack.c.b16 %v1246, %v1225
      %v1898 = vpack.c.b16 %v1247, %v1226
      %v1899 = vpack.c.b16 %v1248, %v1227
      %v1900 = vpack.c.b16 %v1249, %v1228
      %v1901 = vpack.c.b16 %v1250, %v1229
      %v1902 = vpack.c.b16 %v1251, %v1230
      %v1903 = vpack.c.b16 %v1273, %v1252
      %v1904 = vpack.c.b16 %v1274, %v1253
      %v1905 = vpack.c.b16 %v1275, %v1254
      %v1906 = vpack.c.b16 %v1276, %v1255
      %v1907 = vpack.c.b16 %v1277, %v1256
      %v1908 = vpack.c.b16 %v1278, %v1257
      %v1909 = vpack.c.b16 %v1279, %v1258
      %v1910 = vpack.c.b16 %v1280, %v1259
      %v1911 = vpack.c.b16 %v1281, %v1260
      %v1912 = vpack.c.b16 %v1282, %v1261
      %v1913 = vpack.c.b16 %v1283, %v1262
      %v1914 = vpack.c.b16 %v1284, %v1263
      %v1915 = vpack.c.b16 %v1285, %v1264
      %v1916 = vpack.c.b16 %v1286, %v1265
      %v1917 = vpack.c.b16 %v1287, %v1266
      %v1918 = vpack.c.b16 %v1288, %v1267
      %v1919 = vpack.c.b16 %v1289, %v1268
      %v1920 = vpack.c.b16 %v1290, %v1269
      %v1921 = vpack.c.b16 %v1291, %v1270
      %v1922 = vpack.c.b16 %v1292, %v1271
      %v1923 = vpack.c.b16 %v1293, %v1272
      %v1924 = vpack.c.b16 %v1315, %v1294
      %v1925 = vpack.c.b16 %v1316, %v1295
      %v1926 = vpack.c.b16 %v1317, %v1296
      %v1927 = vpack.c.b16 %v1318, %v1297
      %v1928 = vpack.c.b16 %v1319, %v1298
      %v1929 = vpack.c.b16 %v1320, %v1299
      %v1930 = vpack.c.b16 %v1321, %v1300
      %v1931 = vpack.c.b16 %v1322, %v1301
      %v1932 = vpack.c.b16 %v1323, %v1302
      %v1933 = vpack.c.b16 %v1324, %v1303
      %v1934 = vpack.c.b16 %v1325, %v1304
      %v1935 = vpack.c.b16 %v1326, %v1305
      %v1936 = vpack.c.b16 %v1327, %v1306
      %v1937 = vpack.c.b16 %v1328, %v1307
      %v1938 = vpack.c.b16 %v1329, %v1308
      %v1939 = vpack.c.b16 %v1330, %v1309
      %v1940 = vpack.c.b16 %v1331, %v1310
      %v1941 = vpack.c.b16 %v1332, %v1311
      %v1942 = vpack.c.b16 %v1333, %v1312
      %v1943 = vpack.c.b16 %v1334, %v1313
      %v1944 = vpack.c.b16 %v1335, %v1314
      %v1945 = vpack.c.b16 %v1357, %v1336
      %v1946 = vpack.c.b16 %v1358, %v1337
      %v1947 = vpack.c.b16 %v1359, %v1338
      %v1948 = vpack.c.b16 %v1360, %v1339
      %v1949 = vpack.c.b16 %v1361, %v1340
      %v1950 = vpack.c.b16 %v1362, %v1341
      %v1951 = vpack.c.b16 %v1363, %v1342
      %v1952 = vpack.c.b16 %v1364, %v1343
      %v1953 = vpack.c.b16 %v1365, %v1344
      %v1954 = vpack.c.b16 %v1366, %v1345
      %v1955 = vpack.c.b16 %v1367, %v1346
      %v1956 = vpack.c.b16 %v1368, %v1347
      %v1957 = vpack.c.b16 %v1369, %v1348
      %v1958 = vpack.c.b16 %v1370, %v1349
      %v1959 = vpack.c.b16 %v1371, %v1350
      %v1960 = vpack.c.b16 %v1372, %v1351
      %v1961 = vpack.c.b16 %v1373, %v1352
      %v1962 = vpack.c.b16 %v1374, %v1353
      %v1963 = vpack.c.b16 %v1375, %v1354
      %v1964 = vpack.c.b16 %v1376, %v1355
      %v1965 = vpack.c.b16 %v1377, %v1356
      %v1966 = vpack.c.b16 %v1399, %v1378
      %v1967 = vpack.c.b16 %v1400, %v1379
      %v1968 = vpack.c.b16 %v1401, %v1380
      %v1969 = vpack.c.b16 %v1402, %v1381
      %v1970 = vpack.c.b16 %v1403, %v1382
      %v1971 = vpack.c.b16 %v1404, %v1383
      %v1972 = vpack.c.b16 %v1405, %v1384
      %v1973 = vpack.c.b16 %v1406, %v1385
      %v1974 = vpack.c.b16 %v1407, %v1386
      %v1975 = vpack.c.b16 %v1408, %v1387
      %v1976 = vpack.c.b16 %v1409, %v1388
      %v1977 = vpack.c.b16 %v1410, %v1389
      %v1978 = vpack.c.b16 %v1411, %v1390
      %v1979 = vpack.c.b16 %v1412, %v1391
      %v1980 = vpack.c.b16 %v1413, %v1392
      %v1981 = vpack.c.b16 %v1414, %v1393
      %v1982 = vpack.c.b16 %v1415, %v1394
      %v1983 = vpack.c.b16 %v1416, %v1395
      %v1984 = vpack.c.b16 %v1417, %v1396
      %v1985 = vpack.c.b16 %v1418, %v1397
      %v1986 = vpack.c.b16 %v1419, %v1398
      %v1987 = vpack.c.b16 %v1441, %v1420
      %v1988 = vpack.c.b16 %v1442, %v1421
      %v1989 = vpack.c.b16 %v1443, %v1422
      %v1990 = vpack.c.b16 %v1444, %v1423
      %v1991 = vpack.c.b16 %v1445, %v1424
      %v1992 = vpack.c.b16 %v1446, %v1425
      %v1993 = vpack.c.b16 %v1447, %v1426
      %v1994 = vpack.c.b16 %v1448, %v1427
      %v1995 = vpack.c.b16 %v1449, %v1428
      %v1996 = vpack.c.b16 %v1450, %v1429
      %v1997 = vpack.c.b16 %v1451, %v1430
      %v1998 = vpack.c.b16 %v1452, %v1431
      %v1999 = vpack.c.b16 %v1453, %v1432
      %v2000 = vpack.c.b16 %v1454, %v1433
      %v2001 = vpack.c.b16 %v1455, %v1434
      %v2002 = vpack.c.b16 %v1456, %v1435
      %v2003 = vpack.c.b16 %v1457, %v1436
      %v2004 = vpack.c.b16 %v1458, %v1437
      %v2005 = vpack.c.b16 %v1459, %v1438
      %v2006 = vpack.c.b16 %v1460, %v1439
      %v2007 = vpack.c.b16 %v1461, %v1440
      %v2008 = vpack.c.b16 %v1483, %v1462
      %v2009 = vpack.c.b16 %v1484, %v1463
      %v2010 = vpack.c.b16 %v1485, %v1464
      %v2011 = vpack.c.b16 %v1486, %v1465
      %v2012 = vpack.c.b16 %v1487, %v1466
      %v2013 = vpack.c.b16 %v1488, %v1467
      %v2014 = vpack.c.b16 %v1489, %v1468
      %v2015 = vpack.c.b16 %v1490, %v1469
      %v2016 = vpack.c.b16 %v1491, %v1470
      %v2017 = vpack.c.b16 %v1492, %v1471
      %v2018 = vpack.c.b16 %v1493, %v1472
      %v2019 = vpack.c.b16 %v1494, %v1473
      %v2020 = vpack.c.b16 %v1495, %v1474
      %v2021 = vpack.c.b16 %v1496, %v1475
      %v2022 = vpack.c.b16 %v1497, %v1476
      %v2023 = vpack.c.b16 %v1498, %v1477
      %v2024 = vpack.c.b16 %v1499, %v1478
      %v2025 = vpack.c.b16 %v1500, %v1479
      %v2026 = vpack.c.b16 %v1501, %v1480
      %v2027 = vpack.c.b16 %v1502, %v1481
      %v2028 = vpack.c.b16 %v1503, %v1482
      %v2029 = vpack.c.b16 %v1525, %v1504
      %v2030 = vpack.c.b16 %v1526, %v1505
      %v2031 = vpack.c.b16 %v1527, %v1506
      %v2032 = vpack.c.b16 %v1528, %v1507
      %v2033 = vpack.c.b16 %v1529, %v1508
      %v2034 = vpack.c.b16 %v1530, %v1509
      %v2035 = vpack.c.b16 %v1531, %v1510
      %v2036 = vpack.c.b16 %v1532, %v1511
      %v2037 = vpack.c.b16 %v1533, %v1512
      %v2038 = vpack.c.b16 %v1534, %v1513
      %v2039 = vpack.c.b16 %v1535, %v1514
      %v2040 = vpack.c.b16 %v1536, %v1515
      %v2041 = vpack.c.b16 %v1537, %v1516
      %v2042 = vpack.c.b16 %v1538, %v1517
      %v2043 = vpack.c.b16 %v1539, %v1518
      %v2044 = vpack.c.b16 %v1540, %v1519
      %v2045 = vpack.c.b16 %v1541, %v1520
      %v2046 = vpack.c.b16 %v1542, %v1521
      %v2047 = vpack.c.b16 %v1543, %v1522
      %v2048 = vpack.c.b16 %v1544, %v1523
      %v2049 = vpack.c.b16 %v1545, %v1524
      %v2050 = vpack.c.b16 %v1567, %v1546
      %v2051 = vpack.c.b16 %v1568, %v1547
      %v2052 = vpack.c.b16 %v1569, %v1548
      %v2053 = vpack.c.b16 %v1570, %v1549
      %v2054 = vpack.c.b16 %v1571, %v1550
      %v2055 = vpack.c.b16 %v1572, %v1551
      %v2056 = vpack.c.b16 %v1573, %v1552
      %v2057 = vpack.c.b16 %v1574, %v1553
      %v2058 = vpack.c.b16 %v1575, %v1554
      %v2059 = vpack.c.b16 %v1576, %v1555
      %v2060 = vpack.c.b16 %v1577, %v1556
      %v2061 = vpack.c.b16 %v1578, %v1557
      %v2062 = vpack.c.b16 %v1579, %v1558
      %v2063 = vpack.c.b16 %v1580, %v1559
      %v2064 = vpack.c.b16 %v1581, %v1560
      %v2065 = vpack.c.b16 %v1582, %v1561
      %v2066 = vpack.c.b16 %v1583, %v1562
      %v2067 = vpack.c.b16 %v1584, %v1563
      %v2068 = vpack.c.b16 %v1585, %v1564
      %v2069 = vpack.c.b16 %v1586, %v1565
      %v2070 = vpack.c.b16 %v1587, %v1566
      %v2071 = vpack.c.b16 %v1609, %v1588
      %v2072 = vpack.c.b16 %v1610, %v1589
      %v2073 = vpack.c.b16 %v1611, %v1590
      %v2074 = vpack.c.b16 %v1612, %v1591
      %v2075 = vpack.c.b16 %v1613, %v1592
      %v2076 = vpack.c.b16 %v1614, %v1593
      %v2077 = vpack.c.b16 %v1615, %v1594
      %v2078 = vpack.c.b16 %v1616, %v1595
      %v2079 = vpack.c.b16 %v1617, %v1596
      %v2080 = vpack.c.b16 %v1618, %v1597
      %v2081 = vpack.c.b16 %v1619, %v1598
      %v2082 = vpack.c.b16 %v1620, %v1599
      %v2083 = vpack.c.b16 %v1621, %v1600
      %v2084 = vpack.c.b16 %v1622, %v1601
      %v2085 = vpack.c.b16 %v1623, %v1602
      %v2086 = vpack.c.b16 %v1624, %v1603
      %v2087 = vpack.c.b16 %v1625, %v1604
      %v2088 = vpack.c.b16 %v1626, %v1605
      %v2089 = vpack.c.b16 %v1627, %v1606
      %v2090 = vpack.c.b16 %v1628, %v1607
      %v2091 = vpack.c.b16 %v1629, %v1608
      %v2092 = vpack.c.b16 %v1651, %v1630
      %v2093 = vpack.c.b16 %v1652, %v1631
      %v2094 = vpack.c.b16 %v1653, %v1632
      %v2095 = vpack.c.b16 %v1654, %v1633
      %v2096 = vpack.c.b16 %v1655, %v1634
      %v2097 = vpack.c.b16 %v1656, %v1635
      %v2098 = vpack.c.b16 %v1657, %v1636
      %v2099 = vpack.c.b16 %v1658, %v1637
      %v2100 = vpack.c.b16 %v1659, %v1638
      %v2101 = vpack.c.b16 %v1660, %v1639
      %v2102 = vpack.c.b16 %v1661, %v1640
      %v2103 = vpack.c.b16 %v1662, %v1641
      %v2104 = vpack.c.b16 %v1663, %v1642
      %v2105 = vpack.c.b16 %v1664, %v1643
      %v2106 = vpack.c.b16 %v1665, %v1644
      %v2107 = vpack.c.b16 %v1666, %v1645
      %v2108 = vpack.c.b16 %v1667, %v1646
      %v2109 = vpack.c.b16 %v1668, %v1647
      %v2110 = vpack.c.b16 %v1669, %v1648
      %v2111 = vpack.c.b16 %v1670, %v1649
      %v2112 = vpack.c.b16 %v1671, %v1650
      %v2113 = vpack.c.b16 %v1693, %v1672
      %v2114 = vpack.c.b16 %v1694, %v1673
      %v2115 = vpack.c.b16 %v1695, %v1674
      %v2116 = vpack.c.b16 %v1696, %v1675
      %v2117 = vpack.c.b16 %v1697, %v1676
      %v2118 = vpack.c.b16 %v1698, %v1677
      %v2119 = vpack.c.b16 %v1699, %v1678
      %v2120 = vpack.c.b16 %v1700, %v1679
      %v2121 = vpack.c.b16 %v1701, %v1680
      %v2122 = vpack.c.b16 %v1702, %v1681
      %v2123 = vpack.c.b16 %v1703, %v1682
      %v2124 = vpack.c.b16 %v1704, %v1683
      %v2125 = vpack.c.b16 %v1705, %v1684
      %v2126 = vpack.c.b16 %v1706, %v1685
      %v2127 = vpack.c.b16 %v1707, %v1686
      %v2128 = vpack.c.b16 %v1708, %v1687
      %v2129 = vpack.c.b16 %v1709, %v1688
      %v2130 = vpack.c.b16 %v1710, %v1689
      %v2131 = vpack.c.b16 %v1711, %v1690
      %v2132 = vpack.c.b16 %v1712, %v1691
      %v2133 = vpack.c.b16 %v1713, %v1692
      %v2134 = vpack.c.b16 %v1735, %v1714
      %v2135 = vpack.c.b16 %v1736, %v1715
      %v2136 = vpack.c.b16 %v1737, %v1716
      %v2137 = vpack.c.b16 %v1738, %v1717
      %v2138 = vpack.c.b16 %v1739, %v1718
      %v2139 = vpack.c.b16 %v1740, %v1719
      %v2140 = vpack.c.b16 %v1741, %v1720
      %v2141 = vpack.c.b16 %v1742, %v1721
      %v2142 = vpack.c.b16 %v1743, %v1722
      %v2143 = vpack.c.b16 %v1744, %v1723
      %v2144 = vpack.c.b16 %v1745, %v1724
      %v2145 = vpack.c.b16 %v1746, %v1725
      %v2146 = vpack.c.b16 %v1747, %v1726
      %v2147 = vpack.c.b16 %v1748, %v1727
      %v2148 = vpack.c.b16 %v1749, %v1728
      %v2149 = vpack.c.b16 %v1750, %v1729
      %v2150 = vpack.c.b16 %v1751, %v1730
      %v2151 = vpack.c.b16 %v1752, %v1731
      %v2152 = vpack.c.b16 %v1753, %v1732
      %v2153 = vpack.c.b16 %v1754, %v1733
      %v2154 = vpack.c.b16 %v1755, %v1734
      %v2155 = vpack.c.b16 %v1777, %v1756
      %v2156 = vpack.c.b16 %v1778, %v1757
      %v2157 = vpack.c.b16 %v1779, %v1758
      %v2158 = vpack.c.b16 %v1780, %v1759
      %v2159 = vpack.c.b16 %v1781, %v1760
      %v2160 = vpack.c.b16 %v1782, %v1761
      %v2161 = vpack.c.b16 %v1783, %v1762
      %v2162 = vpack.c.b16 %v1784, %v1763
      %v2163 = vpack.c.b16 %v1785, %v1764
      %v2164 = vpack.c.b16 %v1786, %v1765
      %v2165 = vpack.c.b16 %v1787, %v1766
      %v2166 = vpack.c.b16 %v1788, %v1767
      %v2167 = vpack.c.b16 %v1789, %v1768
      %v2168 = vpack.c.b16 %v1790, %v1769
      %v2169 = vpack.c.b16 %v1791, %v1770
      %v2170 = vpack.c.b16 %v1792, %v1771
      %v2171 = vpack.c.b16 %v1793, %v1772
      %v2172 = vpack.c.b16 %v1794, %v1773
      %v2173 = vpack.c.b16 %v1795, %v1774
      %v2174 = vpack.c.b16 %v1796, %v1775
      %v2175 = vpack.c.b16 %v1797, %v1776
      %v2176 = vpack.c.b16 %v1819, %v1798
      %v2177 = vpack.c.b16 %v1820, %v1799
      %v2178 = vpack.c.b16 %v1821, %v1800
      %v2179 = vpack.c.b16 %v1822, %v1801
      %v2180 = vpack.c.b16 %v1823, %v1802
      %v2181 = vpack.c.b16 %v1824, %v1803
      %v2182 = vpack.c.b16 %v1825, %v1804
      %v2183 = vpack.c.b16 %v1826, %v1805
      %v2184 = vpack.c.b16 %v1827, %v1806
      %v2185 = vpack.c.b16 %v1828, %v1807
      %v2186 = vpack.c.b16 %v1829, %v1808
      %v2187 = vpack.c.b16 %v1830, %v1809
      %v2188 = vpack.c.b16 %v1831, %v1810
      %v2189 = vpack.c.b16 %v1832, %v1811
      %v2190 = vpack.c.b16 %v1833, %v1812
      %v2191 = vpack.c.b16 %v1834, %v1813
      %v2192 = vpack.c.b16 %v1835, %v1814
      %v2193 = vpack.c.b16 %v1836, %v1815
      %v2194 = vpack.c.b16 %v1837, %v1816
      %v2195 = vpack.c.b16 %v1838, %v1817
      %v2196 = vpack.c.b16 %v1839, %v1818
      %v2197 = vpack.c.b16 %v1861, %v1840
      %v2198 = vpack.c.b16 %v1862, %v1841
      %v2199 = vpack.c.b16 %v1863, %v1842
      %v2200 = vpack.c.b16 %v1864, %v1843
      %v2201 = vpack.c.b16 %v1865, %v1844
      %v2202 = vpack.c.b16 %v1866, %v1845
      %v2203 = vpack.c.b16 %v1867, %v1846
      %v2204 = vpack.c.b16 %v1868, %v1847
      %v2205 = vpack.c.b16 %v1869, %v1848
      %v2206 = vpack.c.b16 %v1870, %v1849
      %v2207 = vpack.c.b16 %v1871, %v1850
      %v2208 = vpack.c.b16 %v1872, %v1851
      %v2209 = vpack.c.b16 %v1873, %v1852
      %v2210 = vpack.c.b16 %v1874, %v1853
      %v2211 = vpack.c.b16 %v1875, %v1854
      %v2212 = vpack.c.b16 %v1876, %v1855
      %v2213 = vpack.c.b16 %v1877, %v1856
      %v2214 = vpack.c.b16 %v1878, %v1857
      %v2215 = vpack.c.b16 %v1879, %v1858
      %v2216 = vpack.c.b16 %v1880, %v1859
      %v2217 = vpack.c.b16 %v1881, %v1860
      %v2862 = vunpack.c.l.b16 %v530
      %v2863 = vunpack.c.l.b16 %v531
      %v2864 = vunpack.c.l.b16 %v532
      %v2865 = vunpack.c.l.b16 %v533
      %v2866 = vunpack.c.l.b16 %v534
      %v2867 = vunpack.c.l.b16 %v535
      %v2868 = vunpack.c.l.b16 %v536
      %v2869 = vunpack.c.l.b16 %v537
      %v2870 = vunpack.c.l.b16 %v538
      %v2871 = vunpack.c.l.b16 %v539
      %v2872 = vunpack.c.l.b16 %v540
      %v2873 = vunpack.c.l.b16 %v541
      %v2874 = vunpack.c.l.b16 %v542
      %v2875 = vunpack.c.l.b16 %v543
      %v2876 = vunpack.c.l.b16 %v544
      %v2877 = vunpack.c.l.b16 %v545
      %v2878 = vunpack.c.l.b16 %v546
      %v2879 = vunpack.c.l.b16 %v547
      %v2880 = vunpack.c.l.b16 %v548
      %v2881 = vunpack.c.l.b16 %v549
      %v2882 = vunpack.c.l.b16 %v550
      %v2883 = vunpack.c.l.b16 %v551
      %v2884 = vunpack.c.l.b16 %v552
      %v2885 = vunpack.c.l.b16 %v553
      %v2886 = vunpack.c.l.b16 %v554
      %v2887 = vunpack.c.l.b16 %v555
      %v2888 = vunpack.c.l.b16 %v556
      %v2889 = vunpack.c.l.b16 %v557
      %v2890 = vunpack.c.l.b16 %v558
      %v2891 = vunpack.c.l.b16 %v559
      %v2892 = vunpack.c.l.b16 %v560
      %v2893 = vunpack.c.l.b16 %v561
      %v2894 = vunpack.c.l.b16 %v562
      %v2895 = vunpack.c.l.b16 %v563
      %v2896 = vunpack.c.l.b16 %v564
      %v2897 = vunpack.c.l.b16 %v565
      %v2898 = vunpack.c.l.b16 %v566
      %v2899 = vunpack.c.l.b16 %v567
      %v2900 = vunpack.c.l.b16 %v568
      %v2901 = vunpack.c.l.b16 %v569
      %v2902 = vunpack.c.l.b16 %v570
      %v2903 = vunpack.c.l.b16 %v571
      %v2904 = vunpack.c.l.b16 %v572
      %v2905 = vunpack.c.l.b16 %v573
      %v2906 = vunpack.c.l.b16 %v574
      %v2907 = vunpack.c.l.b16 %v575
      %v2908 = vunpack.c.l.b16 %v576
      %v2909 = vunpack.c.l.b16 %v577
      %v2910 = vunpack.c.l.b16 %v578
      %v2911 = vunpack.c.l.b16 %v579
      %v2912 = vunpack.c.l.b16 %v580
      %v2913 = vunpack.c.l.b16 %v581
      %v2914 = vunpack.c.l.b16 %v582
      %v2915 = vunpack.c.l.b16 %v583
      %v2916 = vunpack.c.l.b16 %v584
      %v2917 = vunpack.c.l.b16 %v585
      %v2918 = vunpack.c.l.b16 %v586
      %v2919 = vunpack.c.l.b16 %v587
      %v2920 = vunpack.c.l.b16 %v588
      %v2921 = vunpack.c.l.b16 %v589
      %v2922 = vunpack.c.l.b16 %v590
      %v2923 = vunpack.c.l.b16 %v591
      %v2924 = vunpack.c.l.b16 %v592
      %v2925 = vunpack.c.l.b16 %v593
      %v2926 = vunpack.c.l.b16 %v594
      %v2927 = vunpack.c.l.b16 %v595
      %v2928 = vunpack.c.l.b16 %v596
      %v2929 = vunpack.c.l.b16 %v597
      %v2930 = vunpack.c.l.b16 %v598
      %v2931 = vunpack.c.l.b16 %v599
      %v2932 = vunpack.c.l.b16 %v600
      %v2933 = vunpack.c.l.b16 %v601
      %v2934 = vunpack.c.l.b16 %v602
      %v2935 = vunpack.c.l.b16 %v603
      %v2936 = vunpack.c.l.b16 %v604
      %v2937 = vunpack.c.l.b16 %v605
      %v2938 = vunpack.c.l.b16 %v606
      %v2939 = vunpack.c.l.b16 %v607
      %v2940 = vunpack.c.l.b16 %v608
      %v2941 = vunpack.c.l.b16 %v609
      %v2942 = vunpack.c.l.b16 %v610
      %v2943 = vunpack.c.l.b16 %v611
      %v2944 = vunpack.c.l.b16 %v612
      %v2945 = vunpack.c.l.b16 %v613
      %v2946 = vunpack.c.l.b16 %v614
      %v2947 = vunpack.c.l.b16 %v615
      %v2948 = vunpack.c.l.b16 %v616
      %v2949 = vunpack.c.l.b16 %v617
      %v2950 = vunpack.c.l.b16 %v618
      %v2951 = vunpack.c.l.b16 %v619
      %v2952 = vunpack.c.l.b16 %v620
      %v2953 = vunpack.c.l.b16 %v621
      %v2954 = vunpack.c.l.b16 %v622
      %v2955 = vunpack.c.l.b16 %v623
      %v2956 = vunpack.c.l.b16 %v624
      %v2957 = vunpack.c.l.b16 %v625
      %v2958 = vunpack.c.l.b16 %v626
      %v2959 = vunpack.c.l.b16 %v627
      %v2960 = vunpack.c.l.b16 %v628
      %v2961 = vunpack.c.l.b16 %v629
      %v2962 = vunpack.c.l.b16 %v630
      %v2963 = vunpack.c.l.b16 %v631
      %v2964 = vunpack.c.l.b16 %v632
      %v2965 = vunpack.c.l.b16 %v633
      %v2966 = vunpack.c.l.b16 %v634
      %v2967 = vunpack.c.l.b16 %v635
      %v2968 = vunpack.c.l.b16 %v636
      %v2969 = vunpack.c.l.b16 %v637
      %v2970 = vunpack.c.l.b16 %v638
      %v2971 = vunpack.c.l.b16 %v639
      %v2972 = vunpack.c.l.b16 %v640
      %v2973 = vunpack.c.l.b16 %v641
      %v2974 = vunpack.c.l.b16 %v642
      %v2975 = vunpack.c.l.b16 %v643
      %v2976 = vunpack.c.l.b16 %v644
      %v2977 = vunpack.c.l.b16 %v645
      %v2978 = vunpack.c.l.b16 %v646
      %v2979 = vunpack.c.l.b16 %v647
      %v2980 = vunpack.c.l.b16 %v648
      %v2981 = vunpack.c.l.b16 %v649
      %v2982 = vunpack.c.l.b16 %v650
      %v2983 = vunpack.c.l.b16 %v651
      %v2984 = vunpack.c.l.b16 %v652
      %v2985 = vunpack.c.l.b16 %v653
      %v2986 = vunpack.c.l.b16 %v654
      %v2987 = vunpack.c.l.b16 %v655
      %v2988 = vunpack.c.l.b16 %v656
      %v2989 = vunpack.c.l.b16 %v657
      %v2990 = vunpack.c.l.b16 %v658
      %v2991 = vunpack.c.l.b16 %v659
      %v2992 = vunpack.c.l.b16 %v660
      %v2993 = vunpack.c.l.b16 %v661
      %v2994 = vunpack.c.l.b16 %v662
      %v2995 = vunpack.c.l.b16 %v663
      %v2996 = vunpack.c.l.b16 %v664
      %v2997 = vunpack.c.l.b16 %v665
      %v2998 = vunpack.c.l.b16 %v666
      %v2999 = vunpack.c.l.b16 %v667
      %v3000 = vunpack.c.l.b16 %v668
      %v3001 = vunpack.c.l.b16 %v669
      %v3002 = vunpack.c.l.b16 %v670
      %v3003 = vunpack.c.l.b16 %v671
      %v3004 = vunpack.c.l.b16 %v672
      %v3005 = vunpack.c.l.b16 %v673
      %v3006 = vunpack.c.l.b16 %v674
      %v3007 = vunpack.c.l.b16 %v675
      %v3008 = vunpack.c.l.b16 %v676
      %v3009 = vunpack.c.l.b16 %v677
      %v3010 = vunpack.c.l.b16 %v678
      %v3011 = vunpack.c.l.b16 %v679
      %v3012 = vunpack.c.l.b16 %v680
      %v3013 = vunpack.c.l.b16 %v681
      %v3014 = vunpack.c.l.b16 %v682
      %v3015 = vunpack.c.l.b16 %v683
      %v3016 = vunpack.c.l.b16 %v684
      %v3017 = vunpack.c.l.b16 %v685
      %v3018 = vunpack.c.l.b16 %v686
      %v3019 = vunpack.c.l.b16 %v687
      %v3020 = vunpack.c.l.b16 %v688
      %v3021 = vunpack.c.l.b16 %v689
      %v3022 = vunpack.c.l.b16 %v690
      %v3023 = vunpack.c.l.b16 %v691
      %v3024 = vunpack.c.l.b16 %v692
      %v3025 = vunpack.c.l.b16 %v693
      %v3026 = vunpack.c.l.b16 %v694
      %v3027 = vunpack.c.l.b16 %v695
      %v3028 = vunpack.c.l.b16 %v696
      %v3029 = vunpack.c.l.b16 %v697
      %v3030 = vunpack.c.l.b16 %v698
      %v3031 = vunpack.c.l.b16 %v699
      %v3032 = vunpack.c.l.b16 %v700
      %v3033 = vunpack.c.l.b16 %v701
      %v3034 = vunpack.c.l.b16 %v702
      %v3035 = vunpack.c.l.b16 %v703
      %v3036 = vunpack.c.l.b16 %v704
      %v3037 = vunpack.c.l.b16 %v705
      %v3038 = vunpack.c.l.b16 %v706
      %v3039 = vunpack.c.l.b16 %v707
      %v3040 = vunpack.c.l.b16 %v708
      %v3041 = vunpack.c.l.b16 %v709
      %v3042 = vunpack.c.l.b16 %v710
      %v3043 = vunpack.c.l.b16 %v711
      %v3044 = vunpack.c.l.b16 %v712
      %v3045 = vunpack.c.l.b16 %v713
      %v3046 = vunpack.c.l.b16 %v714
      %v3047 = vunpack.c.l.b16 %v715
      %v3048 = vunpack.c.l.b16 %v716
      %v3049 = vunpack.c.l.b16 %v717
      %v3050 = vunpack.c.l.b16 %v718
      %v3051 = vunpack.c.l.b16 %v719
      %v3052 = vunpack.c.l.b16 %v720
      %v3053 = vunpack.c.l.b16 %v721
      %v3054 = vunpack.c.l.b16 %v722
      %v3055 = vunpack.c.l.b16 %v723
      %v3056 = vunpack.c.l.b16 %v724
      %v3057 = vunpack.c.l.b16 %v725
      %v3058 = vunpack.c.l.b16 %v726
      %v3059 = vunpack.c.l.b16 %v727
      %v3060 = vunpack.c.l.b16 %v728
      %v3061 = vunpack.c.l.b16 %v729
      %v3062 = vunpack.c.l.b16 %v730
      %v3063 = vunpack.c.l.b16 %v731
      %v3064 = vunpack.c.l.b16 %v732
      %v3065 = vunpack.c.l.b16 %v733
      %v3066 = vunpack.c.l.b16 %v734
      %v3067 = vunpack.c.l.b16 %v735
      %v3068 = vunpack.c.l.b16 %v736
      %v3069 = vunpack.c.l.b16 %v737
      %v3070 = vunpack.c.l.b16 %v738
      %v3071 = vunpack.c.l.b16 %v739
      %v3072 = vunpack.c.l.b16 %v740
      %v3073 = vunpack.c.l.b16 %v741
      %v3074 = vunpack.c.l.b16 %v742
      %v3075 = vunpack.c.l.b16 %v743
      %v3076 = vunpack.c.l.b16 %v744
      %v3077 = vunpack.c.l.b16 %v745
      %v3078 = vunpack.c.l.b16 %v746
      %v3079 = vunpack.c.l.b16 %v747
      %v3080 = vunpack.c.l.b16 %v748
      %v3081 = vunpack.c.l.b16 %v749
      %v3082 = vunpack.c.l.b16 %v750
      %v3083 = vunpack.c.l.b16 %v751
      %v3084 = vunpack.c.l.b16 %v752
      %v3085 = vunpack.c.l.b16 %v753
      %v3086 = vunpack.c.l.b16 %v754
      %v3087 = vunpack.c.l.b16 %v755
      %v3088 = vunpack.c.l.b16 %v756
      %v3089 = vunpack.c.l.b16 %v757
      %v3090 = vunpack.c.l.b16 %v758
      %v3091 = vunpack.c.l.b16 %v759
      %v3092 = vunpack.c.l.b16 %v760
      %v3093 = vunpack.c.l.b16 %v761
      %v3094 = vunpack.c.l.b16 %v762
      %v3095 = vunpack.c.l.b16 %v763
      %v3096 = vunpack.c.l.b16 %v764
      %v3097 = vunpack.c.l.b16 %v765
      %v3098 = vunpack.c.l.b16 %v766
      %v3099 = vunpack.c.l.b16 %v767
      %v3100 = vunpack.c.l.b16 %v768
      %v3101 = vunpack.c.l.b16 %v769
      %v3102 = vunpack.c.l.b16 %v770
      %v3103 = vunpack.c.l.b16 %v771
      %v3104 = vunpack.c.l.b16 %v772
      %v3105 = vunpack.c.l.b16 %v773
      %v3106 = vunpack.c.l.b16 %v774
      %v3107 = vunpack.c.l.b16 %v775
      %v3108 = vunpack.c.l.b16 %v776
      %v3109 = vunpack.c.l.b16 %v777
      %v3110 = vunpack.c.l.b16 %v778
      %v3111 = vunpack.c.l.b16 %v779
      %v3112 = vunpack.c.l.b16 %v780
      %v3113 = vunpack.c.l.b16 %v781
      %v3114 = vunpack.c.l.b16 %v782
      %v3115 = vunpack.c.l.b16 %v783
      %v3116 = vunpack.c.l.b16 %v784
      %v3117 = vunpack.c.l.b16 %v785
      %v3118 = vunpack.c.l.b16 %v786
      %v3119 = vunpack.c.l.b16 %v787
      %v3120 = vunpack.c.l.b16 %v788
      %v3121 = vunpack.c.l.b16 %v789
      %v3122 = vunpack.c.l.b16 %v790
      %v3123 = vunpack.c.l.b16 %v791
      %v3124 = vunpack.c.l.b16 %v792
      %v3125 = vunpack.c.l.b16 %v793
      %v3126 = vunpack.c.l.b16 %v794
      %v3127 = vunpack.c.l.b16 %v795
      %v3128 = vunpack.c.l.b16 %v796
      %v3129 = vunpack.c.l.b16 %v797
      %v3130 = vunpack.c.l.b16 %v798
      %v3131 = vunpack.c.l.b16 %v799
      %v3132 = vunpack.c.l.b16 %v800
      %v3133 = vunpack.c.l.b16 %v801
      %v3134 = vunpack.c.l.b16 %v802
      %v3135 = vunpack.c.l.b16 %v803
      %v3136 = vunpack.c.l.b16 %v804
      %v3137 = vunpack.c.l.b16 %v805
      %v3138 = vunpack.c.l.b16 %v806
      %v3139 = vunpack.c.l.b16 %v807
      %v3140 = vunpack.c.l.b16 %v808
      %v3141 = vunpack.c.l.b16 %v809
      %v3142 = vunpack.c.l.b16 %v810
      %v3143 = vunpack.c.l.b16 %v811
      %v3144 = vunpack.c.l.b16 %v812
      %v3145 = vunpack.c.l.b16 %v813
      %v3146 = vunpack.c.l.b16 %v814
      %v3147 = vunpack.c.l.b16 %v815
      %v3148 = vunpack.c.l.b16 %v816
      %v3149 = vunpack.c.l.b16 %v817
      %v3150 = vunpack.c.l.b16 %v818
      %v3151 = vunpack.c.l.b16 %v819
      %v3152 = vunpack.c.l.b16 %v820
      %v3153 = vunpack.c.l.b16 %v821
      %v3154 = vunpack.c.l.b16 %v822
      %v3155 = vunpack.c.l.b16 %v823
      %v3156 = vunpack.c.l.b16 %v824
      %v3157 = vunpack.c.l.b16 %v825
      %v3158 = vunpack.c.l.b16 %v826
      %v3159 = vunpack.c.l.b16 %v827
      %v3160 = vunpack.c.l.b16 %v828
      %v3161 = vunpack.c.l.b16 %v829
      %v3162 = vunpack.c.l.b16 %v830
      %v3163 = vunpack.c.l.b16 %v831
      %v3164 = vunpack.c.l.b16 %v832
      %v3165 = vunpack.c.l.b16 %v833
      %v3166 = vunpack.c.l.b16 %v834
      %v3167 = vunpack.c.l.b16 %v835
      %v3168 = vunpack.c.l.b16 %v836
      %v3169 = vunpack.c.l.b16 %v837
      %v3170 = vunpack.c.l.b16 %v838
      %v3171 = vunpack.c.l.b16 %v839
      %v3172 = vunpack.c.l.b16 %v840
      %v3173 = vunpack.c.l.b16 %v841
      %v3174 = vunpack.c.l.b16 %v842
      %v3175 = vunpack.c.l.b16 %v843
      %v3176 = vunpack.c.l.b16 %v844
      %v3177 = vunpack.c.l.b16 %v845
      %v3178 = vunpack.c.l.b16 %v846
      %v3179 = vunpack.c.l.b16 %v847
      %v3180 = vunpack.c.l.b16 %v848
      %v3181 = vunpack.c.l.b16 %v849
      %v3182 = vunpack.c.l.b16 %v850
      %v3183 = vunpack.c.l.b16 %v851
      %v3184 = vunpack.c.l.b16 %v852
      %v3185 = vunpack.c.l.b16 %v853
      %v3186 = vpack.c.b16 %v2863, %v2862
      %v3187 = vpack.c.b16 %v2865, %v2864
      %v3188 = vpack.c.b16 %v2867, %v2866
      %v3189 = vpack.c.b16 %v2869, %v2868
      %v3190 = vpack.c.b16 %v2871, %v2870
      %v3191 = vpack.c.b16 %v2873, %v2872
      %v3192 = vpack.c.b16 %v2875, %v2874
      %v3193 = vpack.c.b16 %v2877, %v2876
      %v3194 = vpack.c.b16 %v2879, %v2878
      %v3195 = vpack.c.b16 %v2881, %v2880
      %v3196 = vpack.c.b16 %v2883, %v2882
      %v3197 = vpack.c.b16 %v2885, %v2884
      %v3198 = vpack.c.b16 %v2887, %v2886
      %v3199 = vpack.c.b16 %v2889, %v2888
      %v3200 = vpack.c.b16 %v2891, %v2890
      %v3201 = vpack.c.b16 %v2893, %v2892
      %v3202 = vpack.c.b16 %v2895, %v2894
      %v3203 = vpack.c.b16 %v2897, %v2896
      %v3204 = vpack.c.b16 %v2899, %v2898
      %v3205 = vpack.c.b16 %v2901, %v2900
      %v3206 = vpack.c.b16 %v2903, %v2902
      %v3207 = vpack.c.b16 %v2905, %v2904
      %v3208 = vpack.c.b16 %v2907, %v2906
      %v3209 = vpack.c.b16 %v2909, %v2908
      %v3210 = vpack.c.b16 %v2911, %v2910
      %v3211 = vpack.c.b16 %v2913, %v2912
      %v3212 = vpack.c.b16 %v2915, %v2914
      %v3213 = vpack.c.b16 %v2917, %v2916
      %v3214 = vpack.c.b16 %v2919, %v2918
      %v3215 = vpack.c.b16 %v2921, %v2920
      %v3216 = vpack.c.b16 %v2923, %v2922
      %v3217 = vpack.c.b16 %v2925, %v2924
      %v3218 = vpack.c.b16 %v2927, %v2926
      %v3219 = vpack.c.b16 %v2929, %v2928
      %v3220 = vpack.c.b16 %v2931, %v2930
      %v3221 = vpack.c.b16 %v2933, %v2932
      %v3222 = vpack.c.b16 %v2935, %v2934
      %v3223 = vpack.c.b16 %v2937, %v2936
      %v3224 = vpack.c.b16 %v2939, %v2938
      %v3225 = vpack.c.b16 %v2941, %v2940
      %v3226 = vpack.c.b16 %v2943, %v2942
      %v3227 = vpack.c.b16 %v2945, %v2944
      %v3228 = vpack.c.b16 %v2947, %v2946
      %v3229 = vpack.c.b16 %v2949, %v2948
      %v3230 = vpack.c.b16 %v2951, %v2950
      %v3231 = vpack.c.b16 %v2953, %v2952
      %v3232 = vpack.c.b16 %v2955, %v2954
      %v3233 = vpack.c.b16 %v2957, %v2956
      %v3234 = vpack.c.b16 %v2959, %v2958
      %v3235 = vpack.c.b16 %v2961, %v2960
      %v3236 = vpack.c.b16 %v2963, %v2962
      %v3237 = vpack.c.b16 %v2965, %v2964
      %v3238 = vpack.c.b16 %v2967, %v2966
      %v3239 = vpack.c.b16 %v2969, %v2968
      %v3240 = vpack.c.b16 %v2971, %v2970
      %v3241 = vpack.c.b16 %v2973, %v2972
      %v3242 = vpack.c.b16 %v2975, %v2974
      %v3243 = vpack.c.b16 %v2977, %v2976
      %v3244 = vpack.c.b16 %v2979, %v2978
      %v3245 = vpack.c.b16 %v2981, %v2980
      %v3246 = vpack.c.b16 %v2983, %v2982
      %v3247 = vpack.c.b16 %v2985, %v2984
      %v3248 = vpack.c.b16 %v2987, %v2986
      %v3249 = vpack.c.b16 %v2989, %v2988
      %v3250 = vpack.c.b16 %v2991, %v2990
      %v3251 = vpack.c.b16 %v2993, %v2992
      %v3252 = vpack.c.b16 %v2995, %v2994
      %v3253 = vpack.c.b16 %v2997, %v2996
      %v3254 = vpack.c.b16 %v2999, %v2998
      %v3255 = vpack.c.b16 %v3001, %v3000
      %v3256 = vpack.c.b16 %v3003, %v3002
      %v3257 = vpack.c.b16 %v3005, %v3004
      %v3258 = vpack.c.b16 %v3007, %v3006
      %v3259 = vpack.c.b16 %v3009, %v3008
      %v3260 = vpack.c.b16 %v3011, %v3010
      %v3261 = vpack.c.b16 %v3013, %v3012
      %v3262 = vpack.c.b16 %v3015, %v3014
      %v3263 = vpack.c.b16 %v3017, %v3016
      %v3264 = vpack.c.b16 %v3019, %v3018
      %v3265 = vpack.c.b16 %v3021, %v3020
      %v3266 = vpack.c.b16 %v3023, %v3022
      %v3267 = vpack.c.b16 %v3025, %v3024
      %v3268 = vpack.c.b16 %v3027, %v3026
      %v3269 = vpack.c.b16 %v3029, %v3028
      %v3270 = vpack.c.b16 %v3031, %v3030
      %v3271 = vpack.c.b16 %v3033, %v3032
      %v3272 = vpack.c.b16 %v3035, %v3034
      %v3273 = vpack.c.b16 %v3037, %v3036
      %v3274 = vpack.c.b16 %v3039, %v3038
      %v3275 = vpack.c.b16 %v3041, %v3040
      %v3276 = vpack.c.b16 %v3043, %v3042
      %v3277 = vpack.c.b16 %v3045, %v3044
      %v3278 = vpack.c.b16 %v3047, %v3046
      %v3279 = vpack.c.b16 %v3049, %v3048
      %v3280 = vpack.c.b16 %v3051, %v3050
      %v3281 = vpack.c.b16 %v3053, %v3052
      %v3282 = vpack.c.b16 %v3055, %v3054
      %v3283 = vpack.c.b16 %v3057, %v3056
      %v3284 = vpack.c.b16 %v3059, %v3058
      %v3285 = vpack.c.b16 %v3061, %v3060
      %v3286 = vpack.c.b16 %v3063, %v3062
      %v3287 = vpack.c.b16 %v3065, %v3064
      %v3288 = vpack.c.b16 %v3067, %v3066
      %v3289 = vpack.c.b16 %v3069, %v3068
      %v3290 = vpack.c.b16 %v3071, %v3070
      %v3291 = vpack.c.b16 %v3073, %v3072
      %v3292 = vpack.c.b16 %v3075, %v3074
      %v3293 = vpack.c.b16 %v3077, %v3076
      %v3294 = vpack.c.b16 %v3079, %v3078
      %v3295 = vpack.c.b16 %v3081, %v3080
      %v3296 = vpack.c.b16 %v3083, %v3082
      %v3297 = vpack.c.b16 %v3085, %v3084
      %v3298 = vpack.c.b16 %v3087, %v3086
      %v3299 = vpack.c.b16 %v3089, %v3088
      %v3300 = vpack.c.b16 %v3091, %v3090
      %v3301 = vpack.c.b16 %v3093, %v3092
      %v3302 = vpack.c.b16 %v3095, %v3094
      %v3303 = vpack.c.b16 %v3097, %v3096
      %v3304 = vpack.c.b16 %v3099, %v3098
      %v3305 = vpack.c.b16 %v3101, %v3100
      %v3306 = vpack.c.b16 %v3103, %v3102
      %v3307 = vpack.c.b16 %v3105, %v3104
      %v3308 = vpack.c.b16 %v3107, %v3106
      %v3309 = vpack.c.b16 %v3109, %v3108
      %v3310 = vpack.c.b16 %v3111, %v3110
      %v3311 = vpack.c.b16 %v3113, %v3112
      %v3312 = vpack.c.b16 %v3115, %v3114
      %v3313 = vpack.c.b16 %v3117, %v3116
      %v3314 = vpack.c.b16 %v3119, %v3118
      %v3315 = vpack.c.b16 %v3121, %v3120
      %v3316 = vpack.c.b16 %v3123, %v3122
      %v3317 = vpack.c.b16 %v3125, %v3124
      %v3318 = vpack.c.b16 %v3127, %v3126
      %v3319 = vpack.c.b16 %v3129, %v3128
      %v3320 = vpack.c.b16 %v3131, %v3130
      %v3321 = vpack.c.b16 %v3133, %v3132
      %v3322 = vpack.c.b16 %v3135, %v3134
      %v3323 = vpack.c.b16 %v3137, %v3136
      %v3324 = vpack.c.b16 %v3139, %v3138
      %v3325 = vpack.c.b16 %v3141, %v3140
      %v3326 = vpack.c.b16 %v3143, %v3142
      %v3327 = vpack.c.b16 %v3145, %v3144
      %v3328 = vpack.c.b16 %v3147, %v3146
      %v3329 = vpack.c.b16 %v3149, %v3148
      %v3330 = vpack.c.b16 %v3151, %v3150
      %v3331 = vpack.c.b16 %v3153, %v3152
      %v3332 = vpack.c.b16 %v3155, %v3154
      %v3333 = vpack.c.b16 %v3157, %v3156
      %v3334 = vpack.c.b16 %v3159, %v3158
      %v3335 = vpack.c.b16 %v3161, %v3160
      %v3336 = vpack.c.b16 %v3163, %v3162
      %v3337 = vpack.c.b16 %v3165, %v3164
      %v3338 = vpack.c.b16 %v3167, %v3166
      %v3339 = vpack.c.b16 %v3169, %v3168
      %v3340 = vpack.c.b16 %v3171, %v3170
      %v3341 = vpack.c.b16 %v3173, %v3172
      %v3342 = vpack.c.b16 %v3175, %v3174
      %v3343 = vpack.c.b16 %v3177, %v3176
      %v3344 = vpack.c.b16 %v3179, %v3178
      %v3345 = vpack.c.b16 %v3181, %v3180
      %v3346 = vpack.c.b16 %v3183, %v3182
      %v3347 = vpack.c.b16 %v3185, %v3184
      %vm3510 = vcmask 261120
      %v3512 = vsel %vm3510, %v1902, 0
      %v3515 = vsel %vm3510, %v1923, 0
      %v3518 = vsel %vm3510, %v1944, 0
      %v3521 = vsel %vm3510, %v1965, 0
      %v3524 = vsel %vm3510, %v1986, 0
      %v3527 = vsel %vm3510, %v2007, 0
      %v3530 = vsel %vm3510, %v2028, 0
      %v3533 = vsel %vm3510, %v2049, 0
      %v3536 = vsel %vm3510, %v2070, 0
      %v3539 = vsel %vm3510, %v2091, 0
      %v3542 = vsel %vm3510, %v2112, 0
      %v3545 = vsel %vm3510, %v2133, 0
      %v3548 = vsel %vm3510, %v2154, 0
      %v3551 = vsel %vm3510, %v2175, 0
      %v3554 = vsel %vm3510, %v2196, 0
      %v3557 = vsel %vm3510, %v2217, 0
      %3559 = vmatpush.bf16.msra.mxu0 %v3193
      %3560 = vmatpush.bf16.msra.mxu0 %v3192
      %3561 = vmatpush.bf16.msra.mxu0 %v3191
      %3562 = vmatpush.bf16.msra.mxu0 %v3190
      %3563 = vmatpush.bf16.msra.mxu0 %v3189
      %3564 = vmatpush.bf16.msra.mxu0 %v3188
      %3565 = vmatpush.bf16.msra.mxu0 %v3187
      %3566 = vmatpush.bf16.msra.mxu0 %v3186
      %3567 = vmatmul.bf16.gmra.mxu0 %v1882
      %v3568 = vpop.f32.mrf.mxu0
      %v3569 = vadd.f32 %v856, %v3568
      %v3570 = vpop.f32.mrf.mxu0
      %v3571 = vadd.f32 %v856, %v3570
      %3572 = vmatmul.bf16.gmra.mxu0 %v1903
      %v3573 = vpop.f32.mrf.mxu0
      %v3574 = vadd.f32 %v856, %v3573
      %v3575 = vpop.f32.mrf.mxu0
      %v3576 = vadd.f32 %v856, %v3575
      %3577 = vmatmul.bf16.gmra.mxu0 %v1924
      %v3578 = vpop.f32.mrf.mxu0
      %v3579 = vadd.f32 %v856, %v3578
      %v3580 = vpop.f32.mrf.mxu0
      %v3581 = vadd.f32 %v856, %v3580
      %3582 = vmatmul.bf16.gmra.mxu0 %v1945
      %v3583 = vpop.f32.mrf.mxu0
      %v3584 = vadd.f32 %v856, %v3583
      %v3585 = vpop.f32.mrf.mxu0
      %v3586 = vadd.f32 %v856, %v3585
      %3587 = vmatmul.bf16.gmra.mxu0 %v1966
      %v3588 = vpop.f32.mrf.mxu0
      %v3589 = vadd.f32 %v856, %v3588
      %v3590 = vpop.f32.mrf.mxu0
      %v3591 = vadd.f32 %v856, %v3590
      %3592 = vmatmul.bf16.gmra.mxu0 %v1987
      %v3593 = vpop.f32.mrf.mxu0
      %v3594 = vadd.f32 %v856, %v3593
      %v3595 = vpop.f32.mrf.mxu0
      %v3596 = vadd.f32 %v856, %v3595
      %3597 = vmatmul.bf16.gmra.mxu0 %v2008
      %v3598 = vpop.f32.mrf.mxu0
      %v3599 = vadd.f32 %v856, %v3598
      %v3600 = vpop.f32.mrf.mxu0
      %v3601 = vadd.f32 %v856, %v3600
      %3602 = vmatmul.bf16.gmra.mxu0 %v2029
      %v3603 = vpop.f32.mrf.mxu0
      %v3604 = vadd.f32 %v856, %v3603
      %v3605 = vpop.f32.mrf.mxu0
      %v3606 = vadd.f32 %v856, %v3605
      %3607 = vmatmul.bf16.gmra.mxu0 %v2050
      %v3608 = vpop.f32.mrf.mxu0
      %v3609 = vadd.f32 %v856, %v3608
      %v3610 = vpop.f32.mrf.mxu0
      %v3611 = vadd.f32 %v856, %v3610
      %3612 = vmatmul.bf16.gmra.mxu0 %v2071
      %v3613 = vpop.f32.mrf.mxu0
      %v3614 = vadd.f32 %v856, %v3613
      %v3615 = vpop.f32.mrf.mxu0
      %v3616 = vadd.f32 %v856, %v3615
      %3617 = vmatmul.bf16.gmra.mxu0 %v2092
      %v3618 = vpop.f32.mrf.mxu0
      %v3619 = vadd.f32 %v856, %v3618
      %v3620 = vpop.f32.mrf.mxu0
      %v3621 = vadd.f32 %v856, %v3620
      %3622 = vmatmul.bf16.gmra.mxu0 %v2113
      %v3623 = vpop.f32.mrf.mxu0
      %v3624 = vadd.f32 %v856, %v3623
      %v3625 = vpop.f32.mrf.mxu0
      %v3626 = vadd.f32 %v856, %v3625
      %3627 = vmatmul.bf16.gmra.mxu0 %v2134
      %v3628 = vpop.f32.mrf.mxu0
      %v3629 = vadd.f32 %v856, %v3628
      %v3630 = vpop.f32.mrf.mxu0
      %v3631 = vadd.f32 %v856, %v3630
      %3632 = vmatmul.bf16.gmra.mxu0 %v2155
      %v3633 = vpop.f32.mrf.mxu0
      %v3634 = vadd.f32 %v856, %v3633
      %v3635 = vpop.f32.mrf.mxu0
      %v3636 = vadd.f32 %v856, %v3635
      %3637 = vmatmul.bf16.gmra.mxu0 %v2176
      %v3638 = vpop.f32.mrf.mxu0
      %v3639 = vadd.f32 %v856, %v3638
      %v3640 = vpop.f32.mrf.mxu0
      %v3641 = vadd.f32 %v856, %v3640
      %3642 = vmatmul.bf16.gmra.mxu0 %v2197
      %v3643 = vpop.f32.mrf.mxu0
      %v3644 = vadd.f32 %v856, %v3643
      %v3645 = vpop.f32.mrf.mxu0
      %v3646 = vadd.f32 %v856, %v3645
      %3647 = vdwg.mxu0
      %3648 = vmatpush.bf16.msra.mxu0 %v3201
      %3649 = vmatpush.bf16.msra.mxu0 %v3200
      %3650 = vmatpush.bf16.msra.mxu0 %v3199
      %3651 = vmatpush.bf16.msra.mxu0 %v3198
      %3652 = vmatpush.bf16.msra.mxu0 %v3197
      %3653 = vmatpush.bf16.msra.mxu0 %v3196
      %3654 = vmatpush.bf16.msra.mxu0 %v3195
      %3655 = vmatpush.bf16.msra.mxu0 %v3194
      %3656 = vmatmul.bf16.gmra.mxu0 %v1883
      %v3657 = vpop.f32.mrf.mxu0
      %v3658 = vadd.f32 %v3569, %v3657
      %v3659 = vpop.f32.mrf.mxu0
      %v3660 = vadd.f32 %v3571, %v3659
      %3661 = vmatmul.bf16.gmra.mxu0 %v1904
      %v3662 = vpop.f32.mrf.mxu0
      %v3663 = vadd.f32 %v3574, %v3662
      %v3664 = vpop.f32.mrf.mxu0
      %v3665 = vadd.f32 %v3576, %v3664
      %3666 = vmatmul.bf16.gmra.mxu0 %v1925
      %v3667 = vpop.f32.mrf.mxu0
      %v3668 = vadd.f32 %v3579, %v3667
      %v3669 = vpop.f32.mrf.mxu0
      %v3670 = vadd.f32 %v3581, %v3669
      %3671 = vmatmul.bf16.gmra.mxu0 %v1946
      %v3672 = vpop.f32.mrf.mxu0
      %v3673 = vadd.f32 %v3584, %v3672
      %v3674 = vpop.f32.mrf.mxu0
      %v3675 = vadd.f32 %v3586, %v3674
      %3676 = vmatmul.bf16.gmra.mxu0 %v1967
      %v3677 = vpop.f32.mrf.mxu0
      %v3678 = vadd.f32 %v3589, %v3677
      %v3679 = vpop.f32.mrf.mxu0
      %v3680 = vadd.f32 %v3591, %v3679
      %3681 = vmatmul.bf16.gmra.mxu0 %v1988
      %v3682 = vpop.f32.mrf.mxu0
      %v3683 = vadd.f32 %v3594, %v3682
      %v3684 = vpop.f32.mrf.mxu0
      %v3685 = vadd.f32 %v3596, %v3684
      %3686 = vmatmul.bf16.gmra.mxu0 %v2009
      %v3687 = vpop.f32.mrf.mxu0
      %v3688 = vadd.f32 %v3599, %v3687
      %v3689 = vpop.f32.mrf.mxu0
      %v3690 = vadd.f32 %v3601, %v3689
      %3691 = vmatmul.bf16.gmra.mxu0 %v2030
      %v3692 = vpop.f32.mrf.mxu0
      %v3693 = vadd.f32 %v3604, %v3692
      %v3694 = vpop.f32.mrf.mxu0
      %v3695 = vadd.f32 %v3606, %v3694
      %3696 = vmatmul.bf16.gmra.mxu0 %v2051
      %v3697 = vpop.f32.mrf.mxu0
      %v3698 = vadd.f32 %v3609, %v3697
      %v3699 = vpop.f32.mrf.mxu0
      %v3700 = vadd.f32 %v3611, %v3699
      %3701 = vmatmul.bf16.gmra.mxu0 %v2072
      %v3702 = vpop.f32.mrf.mxu0
      %v3703 = vadd.f32 %v3614, %v3702
      %v3704 = vpop.f32.mrf.mxu0
      %v3705 = vadd.f32 %v3616, %v3704
      %3706 = vmatmul.bf16.gmra.mxu0 %v2093
      %v3707 = vpop.f32.mrf.mxu0
      %v3708 = vadd.f32 %v3619, %v3707
      %v3709 = vpop.f32.mrf.mxu0
      %v3710 = vadd.f32 %v3621, %v3709
      %3711 = vmatmul.bf16.gmra.mxu0 %v2114
      %v3712 = vpop.f32.mrf.mxu0
      %v3713 = vadd.f32 %v3624, %v3712
      %v3714 = vpop.f32.mrf.mxu0
      %v3715 = vadd.f32 %v3626, %v3714
      %3716 = vmatmul.bf16.gmra.mxu0 %v2135
      %v3717 = vpop.f32.mrf.mxu0
      %v3718 = vadd.f32 %v3629, %v3717
      %v3719 = vpop.f32.mrf.mxu0
      %v3720 = vadd.f32 %v3631, %v3719
      %3721 = vmatmul.bf16.gmra.mxu0 %v2156
      %v3722 = vpop.f32.mrf.mxu0
      %v3723 = vadd.f32 %v3634, %v3722
      %v3724 = vpop.f32.mrf.mxu0
      %v3725 = vadd.f32 %v3636, %v3724
      %3726 = vmatmul.bf16.gmra.mxu0 %v2177
      %v3727 = vpop.f32.mrf.mxu0
      %v3728 = vadd.f32 %v3639, %v3727
      %v3729 = vpop.f32.mrf.mxu0
      %v3730 = vadd.f32 %v3641, %v3729
      %3731 = vmatmul.bf16.gmra.mxu0 %v2198
      %v3732 = vpop.f32.mrf.mxu0
      %v3733 = vadd.f32 %v3644, %v3732
      %v3734 = vpop.f32.mrf.mxu0
      %v3735 = vadd.f32 %v3646, %v3734
      %3736 = vdwg.mxu0
      %3737 = vmatpush.bf16.msra.mxu0 %v3209
      %3738 = vmatpush.bf16.msra.mxu0 %v3208
      %3739 = vmatpush.bf16.msra.mxu0 %v3207
      %3740 = vmatpush.bf16.msra.mxu0 %v3206
      %3741 = vmatpush.bf16.msra.mxu0 %v3205
      %3742 = vmatpush.bf16.msra.mxu0 %v3204
      %3743 = vmatpush.bf16.msra.mxu0 %v3203
      %3744 = vmatpush.bf16.msra.mxu0 %v3202
      %3745 = vmatmul.bf16.gmra.mxu0 %v1884
      %v3746 = vpop.f32.mrf.mxu0
      %v3747 = vadd.f32 %v3658, %v3746
      %v3748 = vpop.f32.mrf.mxu0
      %v3749 = vadd.f32 %v3660, %v3748
      %3750 = vmatmul.bf16.gmra.mxu0 %v1905
      %v3751 = vpop.f32.mrf.mxu0
      %v3752 = vadd.f32 %v3663, %v3751
      %v3753 = vpop.f32.mrf.mxu0
      %v3754 = vadd.f32 %v3665, %v3753
      %3755 = vmatmul.bf16.gmra.mxu0 %v1926
      %v3756 = vpop.f32.mrf.mxu0
      %v3757 = vadd.f32 %v3668, %v3756
      %v3758 = vpop.f32.mrf.mxu0
      %v3759 = vadd.f32 %v3670, %v3758
      %3760 = vmatmul.bf16.gmra.mxu0 %v1947
      %v3761 = vpop.f32.mrf.mxu0
      %v3762 = vadd.f32 %v3673, %v3761
      %v3763 = vpop.f32.mrf.mxu0
      %v3764 = vadd.f32 %v3675, %v3763
      %3765 = vmatmul.bf16.gmra.mxu0 %v1968
      %v3766 = vpop.f32.mrf.mxu0
      %v3767 = vadd.f32 %v3678, %v3766
      %v3768 = vpop.f32.mrf.mxu0
      %v3769 = vadd.f32 %v3680, %v3768
      %3770 = vmatmul.bf16.gmra.mxu0 %v1989
      %v3771 = vpop.f32.mrf.mxu0
      %v3772 = vadd.f32 %v3683, %v3771
      %v3773 = vpop.f32.mrf.mxu0
      %v3774 = vadd.f32 %v3685, %v3773
      %3775 = vmatmul.bf16.gmra.mxu0 %v2010
      %v3776 = vpop.f32.mrf.mxu0
      %v3777 = vadd.f32 %v3688, %v3776
      %v3778 = vpop.f32.mrf.mxu0
      %v3779 = vadd.f32 %v3690, %v3778
      %3780 = vmatmul.bf16.gmra.mxu0 %v2031
      %v3781 = vpop.f32.mrf.mxu0
      %v3782 = vadd.f32 %v3693, %v3781
      %v3783 = vpop.f32.mrf.mxu0
      %v3784 = vadd.f32 %v3695, %v3783
      %3785 = vmatmul.bf16.gmra.mxu0 %v2052
      %v3786 = vpop.f32.mrf.mxu0
      %v3787 = vadd.f32 %v3698, %v3786
      %v3788 = vpop.f32.mrf.mxu0
      %v3789 = vadd.f32 %v3700, %v3788
      %3790 = vmatmul.bf16.gmra.mxu0 %v2073
      %v3791 = vpop.f32.mrf.mxu0
      %v3792 = vadd.f32 %v3703, %v3791
      %v3793 = vpop.f32.mrf.mxu0
      %v3794 = vadd.f32 %v3705, %v3793
      %3795 = vmatmul.bf16.gmra.mxu0 %v2094
      %v3796 = vpop.f32.mrf.mxu0
      %v3797 = vadd.f32 %v3708, %v3796
      %v3798 = vpop.f32.mrf.mxu0
      %v3799 = vadd.f32 %v3710, %v3798
      %3800 = vmatmul.bf16.gmra.mxu0 %v2115
      %v3801 = vpop.f32.mrf.mxu0
      %v3802 = vadd.f32 %v3713, %v3801
      %v3803 = vpop.f32.mrf.mxu0
      %v3804 = vadd.f32 %v3715, %v3803
      %3805 = vmatmul.bf16.gmra.mxu0 %v2136
      %v3806 = vpop.f32.mrf.mxu0
      %v3807 = vadd.f32 %v3718, %v3806
      %v3808 = vpop.f32.mrf.mxu0
      %v3809 = vadd.f32 %v3720, %v3808
      %3810 = vmatmul.bf16.gmra.mxu0 %v2157
      %v3811 = vpop.f32.mrf.mxu0
      %v3812 = vadd.f32 %v3723, %v3811
      %v3813 = vpop.f32.mrf.mxu0
      %v3814 = vadd.f32 %v3725, %v3813
      %3815 = vmatmul.bf16.gmra.mxu0 %v2178
      %v3816 = vpop.f32.mrf.mxu0
      %v3817 = vadd.f32 %v3728, %v3816
      %v3818 = vpop.f32.mrf.mxu0
      %v3819 = vadd.f32 %v3730, %v3818
      %3820 = vmatmul.bf16.gmra.mxu0 %v2199
      %v3821 = vpop.f32.mrf.mxu0
      %v3822 = vadd.f32 %v3733, %v3821
      %v3823 = vpop.f32.mrf.mxu0
      %v3824 = vadd.f32 %v3735, %v3823
      %3825 = vdwg.mxu0
      %3826 = vmatpush.bf16.msra.mxu0 %v3217
      %3827 = vmatpush.bf16.msra.mxu0 %v3216
      %3828 = vmatpush.bf16.msra.mxu0 %v3215
      %3829 = vmatpush.bf16.msra.mxu0 %v3214
      %3830 = vmatpush.bf16.msra.mxu0 %v3213
      %3831 = vmatpush.bf16.msra.mxu0 %v3212
      %3832 = vmatpush.bf16.msra.mxu0 %v3211
      %3833 = vmatpush.bf16.msra.mxu0 %v3210
      %3834 = vmatmul.bf16.gmra.mxu0 %v1885
      %v3835 = vpop.f32.mrf.mxu0
      %v3836 = vadd.f32 %v3747, %v3835
      %v3837 = vpop.f32.mrf.mxu0
      %v3838 = vadd.f32 %v3749, %v3837
      %3839 = vmatmul.bf16.gmra.mxu0 %v1906
      %v3840 = vpop.f32.mrf.mxu0
      %v3841 = vadd.f32 %v3752, %v3840
      %v3842 = vpop.f32.mrf.mxu0
      %v3843 = vadd.f32 %v3754, %v3842
      %3844 = vmatmul.bf16.gmra.mxu0 %v1927
      %v3845 = vpop.f32.mrf.mxu0
      %v3846 = vadd.f32 %v3757, %v3845
      %v3847 = vpop.f32.mrf.mxu0
      %v3848 = vadd.f32 %v3759, %v3847
      %3849 = vmatmul.bf16.gmra.mxu0 %v1948
      %v3850 = vpop.f32.mrf.mxu0
      %v3851 = vadd.f32 %v3762, %v3850
      %v3852 = vpop.f32.mrf.mxu0
      %v3853 = vadd.f32 %v3764, %v3852
      %3854 = vmatmul.bf16.gmra.mxu0 %v1969
      %v3855 = vpop.f32.mrf.mxu0
      %v3856 = vadd.f32 %v3767, %v3855
      %v3857 = vpop.f32.mrf.mxu0
      %v3858 = vadd.f32 %v3769, %v3857
      %3859 = vmatmul.bf16.gmra.mxu0 %v1990
      %v3860 = vpop.f32.mrf.mxu0
      %v3861 = vadd.f32 %v3772, %v3860
      %v3862 = vpop.f32.mrf.mxu0
      %v3863 = vadd.f32 %v3774, %v3862
      %3864 = vmatmul.bf16.gmra.mxu0 %v2011
      %v3865 = vpop.f32.mrf.mxu0
      %v3866 = vadd.f32 %v3777, %v3865
      %v3867 = vpop.f32.mrf.mxu0
      %v3868 = vadd.f32 %v3779, %v3867
      %3869 = vmatmul.bf16.gmra.mxu0 %v2032
      %v3870 = vpop.f32.mrf.mxu0
      %v3871 = vadd.f32 %v3782, %v3870
      %v3872 = vpop.f32.mrf.mxu0
      %v3873 = vadd.f32 %v3784, %v3872
      %3874 = vmatmul.bf16.gmra.mxu0 %v2053
      %v3875 = vpop.f32.mrf.mxu0
      %v3876 = vadd.f32 %v3787, %v3875
      %v3877 = vpop.f32.mrf.mxu0
      %v3878 = vadd.f32 %v3789, %v3877
      %3879 = vmatmul.bf16.gmra.mxu0 %v2074
      %v3880 = vpop.f32.mrf.mxu0
      %v3881 = vadd.f32 %v3792, %v3880
      %v3882 = vpop.f32.mrf.mxu0
      %v3883 = vadd.f32 %v3794, %v3882
      %3884 = vmatmul.bf16.gmra.mxu0 %v2095
      %v3885 = vpop.f32.mrf.mxu0
      %v3886 = vadd.f32 %v3797, %v3885
      %v3887 = vpop.f32.mrf.mxu0
      %v3888 = vadd.f32 %v3799, %v3887
      %3889 = vmatmul.bf16.gmra.mxu0 %v2116
      %v3890 = vpop.f32.mrf.mxu0
      %v3891 = vadd.f32 %v3802, %v3890
      %v3892 = vpop.f32.mrf.mxu0
      %v3893 = vadd.f32 %v3804, %v3892
      %3894 = vmatmul.bf16.gmra.mxu0 %v2137
      %v3895 = vpop.f32.mrf.mxu0
      %v3896 = vadd.f32 %v3807, %v3895
      %v3897 = vpop.f32.mrf.mxu0
      %v3898 = vadd.f32 %v3809, %v3897
      %3899 = vmatmul.bf16.gmra.mxu0 %v2158
      %v3900 = vpop.f32.mrf.mxu0
      %v3901 = vadd.f32 %v3812, %v3900
      %v3902 = vpop.f32.mrf.mxu0
      %v3903 = vadd.f32 %v3814, %v3902
      %3904 = vmatmul.bf16.gmra.mxu0 %v2179
      %v3905 = vpop.f32.mrf.mxu0
      %v3906 = vadd.f32 %v3817, %v3905
      %v3907 = vpop.f32.mrf.mxu0
      %v3908 = vadd.f32 %v3819, %v3907
      %3909 = vmatmul.bf16.gmra.mxu0 %v2200
      %v3910 = vpop.f32.mrf.mxu0
      %v3911 = vadd.f32 %v3822, %v3910
      %v3912 = vpop.f32.mrf.mxu0
      %v3913 = vadd.f32 %v3824, %v3912
      %3914 = vdwg.mxu0
      %3915 = vmatpush.bf16.msra.mxu0 %v3225
      %3916 = vmatpush.bf16.msra.mxu0 %v3224
      %3917 = vmatpush.bf16.msra.mxu0 %v3223
      %3918 = vmatpush.bf16.msra.mxu0 %v3222
      %3919 = vmatpush.bf16.msra.mxu0 %v3221
      %3920 = vmatpush.bf16.msra.mxu0 %v3220
      %3921 = vmatpush.bf16.msra.mxu0 %v3219
      %3922 = vmatpush.bf16.msra.mxu0 %v3218
      %3923 = vmatmul.bf16.gmra.mxu0 %v1886
      %v3924 = vpop.f32.mrf.mxu0
      %v3925 = vadd.f32 %v3836, %v3924
      %v3926 = vpop.f32.mrf.mxu0
      %v3927 = vadd.f32 %v3838, %v3926
      %3928 = vmatmul.bf16.gmra.mxu0 %v1907
      %v3929 = vpop.f32.mrf.mxu0
      %v3930 = vadd.f32 %v3841, %v3929
      %v3931 = vpop.f32.mrf.mxu0
      %v3932 = vadd.f32 %v3843, %v3931
      %3933 = vmatmul.bf16.gmra.mxu0 %v1928
      %v3934 = vpop.f32.mrf.mxu0
      %v3935 = vadd.f32 %v3846, %v3934
      %v3936 = vpop.f32.mrf.mxu0
      %v3937 = vadd.f32 %v3848, %v3936
      %3938 = vmatmul.bf16.gmra.mxu0 %v1949
      %v3939 = vpop.f32.mrf.mxu0
      %v3940 = vadd.f32 %v3851, %v3939
      %v3941 = vpop.f32.mrf.mxu0
      %v3942 = vadd.f32 %v3853, %v3941
      %3943 = vmatmul.bf16.gmra.mxu0 %v1970
      %v3944 = vpop.f32.mrf.mxu0
      %v3945 = vadd.f32 %v3856, %v3944
      %v3946 = vpop.f32.mrf.mxu0
      %v3947 = vadd.f32 %v3858, %v3946
      %3948 = vmatmul.bf16.gmra.mxu0 %v1991
      %v3949 = vpop.f32.mrf.mxu0
      %v3950 = vadd.f32 %v3861, %v3949
      %v3951 = vpop.f32.mrf.mxu0
      %v3952 = vadd.f32 %v3863, %v3951
      %3953 = vmatmul.bf16.gmra.mxu0 %v2012
      %v3954 = vpop.f32.mrf.mxu0
      %v3955 = vadd.f32 %v3866, %v3954
      %v3956 = vpop.f32.mrf.mxu0
      %v3957 = vadd.f32 %v3868, %v3956
      %3958 = vmatmul.bf16.gmra.mxu0 %v2033
      %v3959 = vpop.f32.mrf.mxu0
      %v3960 = vadd.f32 %v3871, %v3959
      %v3961 = vpop.f32.mrf.mxu0
      %v3962 = vadd.f32 %v3873, %v3961
      %3963 = vmatmul.bf16.gmra.mxu0 %v2054
      %v3964 = vpop.f32.mrf.mxu0
      %v3965 = vadd.f32 %v3876, %v3964
      %v3966 = vpop.f32.mrf.mxu0
      %v3967 = vadd.f32 %v3878, %v3966
      %3968 = vmatmul.bf16.gmra.mxu0 %v2075
      %v3969 = vpop.f32.mrf.mxu0
      %v3970 = vadd.f32 %v3881, %v3969
      %v3971 = vpop.f32.mrf.mxu0
      %v3972 = vadd.f32 %v3883, %v3971
      %3973 = vmatmul.bf16.gmra.mxu0 %v2096
      %v3974 = vpop.f32.mrf.mxu0
      %v3975 = vadd.f32 %v3886, %v3974
      %v3976 = vpop.f32.mrf.mxu0
      %v3977 = vadd.f32 %v3888, %v3976
      %3978 = vmatmul.bf16.gmra.mxu0 %v2117
      %v3979 = vpop.f32.mrf.mxu0
      %v3980 = vadd.f32 %v3891, %v3979
      %v3981 = vpop.f32.mrf.mxu0
      %v3982 = vadd.f32 %v3893, %v3981
      %3983 = vmatmul.bf16.gmra.mxu0 %v2138
      %v3984 = vpop.f32.mrf.mxu0
      %v3985 = vadd.f32 %v3896, %v3984
      %v3986 = vpop.f32.mrf.mxu0
      %v3987 = vadd.f32 %v3898, %v3986
      %3988 = vmatmul.bf16.gmra.mxu0 %v2159
      %v3989 = vpop.f32.mrf.mxu0
      %v3990 = vadd.f32 %v3901, %v3989
      %v3991 = vpop.f32.mrf.mxu0
      %v3992 = vadd.f32 %v3903, %v3991
      %3993 = vmatmul.bf16.gmra.mxu0 %v2180
      %v3994 = vpop.f32.mrf.mxu0
      %v3995 = vadd.f32 %v3906, %v3994
      %v3996 = vpop.f32.mrf.mxu0
      %v3997 = vadd.f32 %v3908, %v3996
      %3998 = vmatmul.bf16.gmra.mxu0 %v2201
      %v3999 = vpop.f32.mrf.mxu0
      %v4000 = vadd.f32 %v3911, %v3999
      %v4001 = vpop.f32.mrf.mxu0
      %v4002 = vadd.f32 %v3913, %v4001
      %4003 = vdwg.mxu0
      %4004 = vmatpush.bf16.msra.mxu0 %v3233
      %4005 = vmatpush.bf16.msra.mxu0 %v3232
      %4006 = vmatpush.bf16.msra.mxu0 %v3231
      %4007 = vmatpush.bf16.msra.mxu0 %v3230
      %4008 = vmatpush.bf16.msra.mxu0 %v3229
      %4009 = vmatpush.bf16.msra.mxu0 %v3228
      %4010 = vmatpush.bf16.msra.mxu0 %v3227
      %4011 = vmatpush.bf16.msra.mxu0 %v3226
      %4012 = vmatmul.bf16.gmra.mxu0 %v1887
      %v4013 = vpop.f32.mrf.mxu0
      %v4014 = vadd.f32 %v3925, %v4013
      %v4015 = vpop.f32.mrf.mxu0
      %v4016 = vadd.f32 %v3927, %v4015
      %4017 = vmatmul.bf16.gmra.mxu0 %v1908
      %v4018 = vpop.f32.mrf.mxu0
      %v4019 = vadd.f32 %v3930, %v4018
      %v4020 = vpop.f32.mrf.mxu0
      %v4021 = vadd.f32 %v3932, %v4020
      %4022 = vmatmul.bf16.gmra.mxu0 %v1929
      %v4023 = vpop.f32.mrf.mxu0
      %v4024 = vadd.f32 %v3935, %v4023
      %v4025 = vpop.f32.mrf.mxu0
      %v4026 = vadd.f32 %v3937, %v4025
      %4027 = vmatmul.bf16.gmra.mxu0 %v1950
      %v4028 = vpop.f32.mrf.mxu0
      %v4029 = vadd.f32 %v3940, %v4028
      %v4030 = vpop.f32.mrf.mxu0
      %v4031 = vadd.f32 %v3942, %v4030
      %4032 = vmatmul.bf16.gmra.mxu0 %v1971
      %v4033 = vpop.f32.mrf.mxu0
      %v4034 = vadd.f32 %v3945, %v4033
      %v4035 = vpop.f32.mrf.mxu0
      %v4036 = vadd.f32 %v3947, %v4035
      %4037 = vmatmul.bf16.gmra.mxu0 %v1992
      %v4038 = vpop.f32.mrf.mxu0
      %v4039 = vadd.f32 %v3950, %v4038
      %v4040 = vpop.f32.mrf.mxu0
      %v4041 = vadd.f32 %v3952, %v4040
      %4042 = vmatmul.bf16.gmra.mxu0 %v2013
      %v4043 = vpop.f32.mrf.mxu0
      %v4044 = vadd.f32 %v3955, %v4043
      %v4045 = vpop.f32.mrf.mxu0
      %v4046 = vadd.f32 %v3957, %v4045
      %4047 = vmatmul.bf16.gmra.mxu0 %v2034
      %v4048 = vpop.f32.mrf.mxu0
      %v4049 = vadd.f32 %v3960, %v4048
      %v4050 = vpop.f32.mrf.mxu0
      %v4051 = vadd.f32 %v3962, %v4050
      %4052 = vmatmul.bf16.gmra.mxu0 %v2055
      %v4053 = vpop.f32.mrf.mxu0
      %v4054 = vadd.f32 %v3965, %v4053
      %v4055 = vpop.f32.mrf.mxu0
      %v4056 = vadd.f32 %v3967, %v4055
      %4057 = vmatmul.bf16.gmra.mxu0 %v2076
      %v4058 = vpop.f32.mrf.mxu0
      %v4059 = vadd.f32 %v3970, %v4058
      %v4060 = vpop.f32.mrf.mxu0
      %v4061 = vadd.f32 %v3972, %v4060
      %4062 = vmatmul.bf16.gmra.mxu0 %v2097
      %v4063 = vpop.f32.mrf.mxu0
      %v4064 = vadd.f32 %v3975, %v4063
      %v4065 = vpop.f32.mrf.mxu0
      %v4066 = vadd.f32 %v3977, %v4065
      %4067 = vmatmul.bf16.gmra.mxu0 %v2118
      %v4068 = vpop.f32.mrf.mxu0
      %v4069 = vadd.f32 %v3980, %v4068
      %v4070 = vpop.f32.mrf.mxu0
      %v4071 = vadd.f32 %v3982, %v4070
      %4072 = vmatmul.bf16.gmra.mxu0 %v2139
      %v4073 = vpop.f32.mrf.mxu0
      %v4074 = vadd.f32 %v3985, %v4073
      %v4075 = vpop.f32.mrf.mxu0
      %v4076 = vadd.f32 %v3987, %v4075
      %4077 = vmatmul.bf16.gmra.mxu0 %v2160
      %v4078 = vpop.f32.mrf.mxu0
      %v4079 = vadd.f32 %v3990, %v4078
      %v4080 = vpop.f32.mrf.mxu0
      %v4081 = vadd.f32 %v3992, %v4080
      %4082 = vmatmul.bf16.gmra.mxu0 %v2181
      %v4083 = vpop.f32.mrf.mxu0
      %v4084 = vadd.f32 %v3995, %v4083
      %v4085 = vpop.f32.mrf.mxu0
      %v4086 = vadd.f32 %v3997, %v4085
      %4087 = vmatmul.bf16.gmra.mxu0 %v2202
      %v4088 = vpop.f32.mrf.mxu0
      %v4089 = vadd.f32 %v4000, %v4088
      %v4090 = vpop.f32.mrf.mxu0
      %v4091 = vadd.f32 %v4002, %v4090
      %4092 = vdwg.mxu0
      %4093 = vmatpush.bf16.msra.mxu0 %v3241
      %4094 = vmatpush.bf16.msra.mxu0 %v3240
      %4095 = vmatpush.bf16.msra.mxu0 %v3239
      %4096 = vmatpush.bf16.msra.mxu0 %v3238
      %4097 = vmatpush.bf16.msra.mxu0 %v3237
      %4098 = vmatpush.bf16.msra.mxu0 %v3236
      %4099 = vmatpush.bf16.msra.mxu0 %v3235
      %4100 = vmatpush.bf16.msra.mxu0 %v3234
      %4101 = vmatmul.bf16.gmra.mxu0 %v1888
      %v4102 = vpop.f32.mrf.mxu0
      %v4103 = vadd.f32 %v4014, %v4102
      %v4104 = vpop.f32.mrf.mxu0
      %v4105 = vadd.f32 %v4016, %v4104
      %4106 = vmatmul.bf16.gmra.mxu0 %v1909
      %v4107 = vpop.f32.mrf.mxu0
      %v4108 = vadd.f32 %v4019, %v4107
      %v4109 = vpop.f32.mrf.mxu0
      %v4110 = vadd.f32 %v4021, %v4109
      %4111 = vmatmul.bf16.gmra.mxu0 %v1930
      %v4112 = vpop.f32.mrf.mxu0
      %v4113 = vadd.f32 %v4024, %v4112
      %v4114 = vpop.f32.mrf.mxu0
      %v4115 = vadd.f32 %v4026, %v4114
      %4116 = vmatmul.bf16.gmra.mxu0 %v1951
      %v4117 = vpop.f32.mrf.mxu0
      %v4118 = vadd.f32 %v4029, %v4117
      %v4119 = vpop.f32.mrf.mxu0
      %v4120 = vadd.f32 %v4031, %v4119
      %4121 = vmatmul.bf16.gmra.mxu0 %v1972
      %v4122 = vpop.f32.mrf.mxu0
      %v4123 = vadd.f32 %v4034, %v4122
      %v4124 = vpop.f32.mrf.mxu0
      %v4125 = vadd.f32 %v4036, %v4124
      %4126 = vmatmul.bf16.gmra.mxu0 %v1993
      %v4127 = vpop.f32.mrf.mxu0
      %v4128 = vadd.f32 %v4039, %v4127
      %v4129 = vpop.f32.mrf.mxu0
      %v4130 = vadd.f32 %v4041, %v4129
      %4131 = vmatmul.bf16.gmra.mxu0 %v2014
      %v4132 = vpop.f32.mrf.mxu0
      %v4133 = vadd.f32 %v4044, %v4132
      %v4134 = vpop.f32.mrf.mxu0
      %v4135 = vadd.f32 %v4046, %v4134
      %4136 = vmatmul.bf16.gmra.mxu0 %v2035
      %v4137 = vpop.f32.mrf.mxu0
      %v4138 = vadd.f32 %v4049, %v4137
      %v4139 = vpop.f32.mrf.mxu0
      %v4140 = vadd.f32 %v4051, %v4139
      %4141 = vmatmul.bf16.gmra.mxu0 %v2056
      %v4142 = vpop.f32.mrf.mxu0
      %v4143 = vadd.f32 %v4054, %v4142
      %v4144 = vpop.f32.mrf.mxu0
      %v4145 = vadd.f32 %v4056, %v4144
      %4146 = vmatmul.bf16.gmra.mxu0 %v2077
      %v4147 = vpop.f32.mrf.mxu0
      %v4148 = vadd.f32 %v4059, %v4147
      %v4149 = vpop.f32.mrf.mxu0
      %v4150 = vadd.f32 %v4061, %v4149
      %4151 = vmatmul.bf16.gmra.mxu0 %v2098
      %v4152 = vpop.f32.mrf.mxu0
      %v4153 = vadd.f32 %v4064, %v4152
      %v4154 = vpop.f32.mrf.mxu0
      %v4155 = vadd.f32 %v4066, %v4154
      %4156 = vmatmul.bf16.gmra.mxu0 %v2119
      %v4157 = vpop.f32.mrf.mxu0
      %v4158 = vadd.f32 %v4069, %v4157
      %v4159 = vpop.f32.mrf.mxu0
      %v4160 = vadd.f32 %v4071, %v4159
      %4161 = vmatmul.bf16.gmra.mxu0 %v2140
      %v4162 = vpop.f32.mrf.mxu0
      %v4163 = vadd.f32 %v4074, %v4162
      %v4164 = vpop.f32.mrf.mxu0
      %v4165 = vadd.f32 %v4076, %v4164
      %4166 = vmatmul.bf16.gmra.mxu0 %v2161
      %v4167 = vpop.f32.mrf.mxu0
      %v4168 = vadd.f32 %v4079, %v4167
      %v4169 = vpop.f32.mrf.mxu0
      %v4170 = vadd.f32 %v4081, %v4169
      %4171 = vmatmul.bf16.gmra.mxu0 %v2182
      %v4172 = vpop.f32.mrf.mxu0
      %v4173 = vadd.f32 %v4084, %v4172
      %v4174 = vpop.f32.mrf.mxu0
      %v4175 = vadd.f32 %v4086, %v4174
      %4176 = vmatmul.bf16.gmra.mxu0 %v2203
      %v4177 = vpop.f32.mrf.mxu0
      %v4178 = vadd.f32 %v4089, %v4177
      %v4179 = vpop.f32.mrf.mxu0
      %v4180 = vadd.f32 %v4091, %v4179
      %4181 = vdwg.mxu0
      %4182 = vmatpush.bf16.msra.mxu0 %v3249
      %4183 = vmatpush.bf16.msra.mxu0 %v3248
      %4184 = vmatpush.bf16.msra.mxu0 %v3247
      %4185 = vmatpush.bf16.msra.mxu0 %v3246
      %4186 = vmatpush.bf16.msra.mxu0 %v3245
      %4187 = vmatpush.bf16.msra.mxu0 %v3244
      %4188 = vmatpush.bf16.msra.mxu0 %v3243
      %4189 = vmatpush.bf16.msra.mxu0 %v3242
      %4190 = vmatmul.bf16.gmra.mxu0 %v1889
      %v4191 = vpop.f32.mrf.mxu0
      %v4192 = vadd.f32 %v4103, %v4191
      %v4193 = vpop.f32.mrf.mxu0
      %v4194 = vadd.f32 %v4105, %v4193
      %4195 = vmatmul.bf16.gmra.mxu0 %v1910
      %v4196 = vpop.f32.mrf.mxu0
      %v4197 = vadd.f32 %v4108, %v4196
      %v4198 = vpop.f32.mrf.mxu0
      %v4199 = vadd.f32 %v4110, %v4198
      %4200 = vmatmul.bf16.gmra.mxu0 %v1931
      %v4201 = vpop.f32.mrf.mxu0
      %v4202 = vadd.f32 %v4113, %v4201
      %v4203 = vpop.f32.mrf.mxu0
      %v4204 = vadd.f32 %v4115, %v4203
      %4205 = vmatmul.bf16.gmra.mxu0 %v1952
      %v4206 = vpop.f32.mrf.mxu0
      %v4207 = vadd.f32 %v4118, %v4206
      %v4208 = vpop.f32.mrf.mxu0
      %v4209 = vadd.f32 %v4120, %v4208
      %4210 = vmatmul.bf16.gmra.mxu0 %v1973
      %v4211 = vpop.f32.mrf.mxu0
      %v4212 = vadd.f32 %v4123, %v4211
      %v4213 = vpop.f32.mrf.mxu0
      %v4214 = vadd.f32 %v4125, %v4213
      %4215 = vmatmul.bf16.gmra.mxu0 %v1994
      %v4216 = vpop.f32.mrf.mxu0
      %v4217 = vadd.f32 %v4128, %v4216
      %v4218 = vpop.f32.mrf.mxu0
      %v4219 = vadd.f32 %v4130, %v4218
      %4220 = vmatmul.bf16.gmra.mxu0 %v2015
      %v4221 = vpop.f32.mrf.mxu0
      %v4222 = vadd.f32 %v4133, %v4221
      %v4223 = vpop.f32.mrf.mxu0
      %v4224 = vadd.f32 %v4135, %v4223
      %4225 = vmatmul.bf16.gmra.mxu0 %v2036
      %v4226 = vpop.f32.mrf.mxu0
      %v4227 = vadd.f32 %v4138, %v4226
      %v4228 = vpop.f32.mrf.mxu0
      %v4229 = vadd.f32 %v4140, %v4228
      %4230 = vmatmul.bf16.gmra.mxu0 %v2057
      %v4231 = vpop.f32.mrf.mxu0
      %v4232 = vadd.f32 %v4143, %v4231
      %v4233 = vpop.f32.mrf.mxu0
      %v4234 = vadd.f32 %v4145, %v4233
      %4235 = vmatmul.bf16.gmra.mxu0 %v2078
      %v4236 = vpop.f32.mrf.mxu0
      %v4237 = vadd.f32 %v4148, %v4236
      %v4238 = vpop.f32.mrf.mxu0
      %v4239 = vadd.f32 %v4150, %v4238
      %4240 = vmatmul.bf16.gmra.mxu0 %v2099
      %v4241 = vpop.f32.mrf.mxu0
      %v4242 = vadd.f32 %v4153, %v4241
      %v4243 = vpop.f32.mrf.mxu0
      %v4244 = vadd.f32 %v4155, %v4243
      %4245 = vmatmul.bf16.gmra.mxu0 %v2120
      %v4246 = vpop.f32.mrf.mxu0
      %v4247 = vadd.f32 %v4158, %v4246
      %v4248 = vpop.f32.mrf.mxu0
      %v4249 = vadd.f32 %v4160, %v4248
      %4250 = vmatmul.bf16.gmra.mxu0 %v2141
      %v4251 = vpop.f32.mrf.mxu0
      %v4252 = vadd.f32 %v4163, %v4251
      %v4253 = vpop.f32.mrf.mxu0
      %v4254 = vadd.f32 %v4165, %v4253
      %4255 = vmatmul.bf16.gmra.mxu0 %v2162
      %v4256 = vpop.f32.mrf.mxu0
      %v4257 = vadd.f32 %v4168, %v4256
      %v4258 = vpop.f32.mrf.mxu0
      %v4259 = vadd.f32 %v4170, %v4258
      %4260 = vmatmul.bf16.gmra.mxu0 %v2183
      %v4261 = vpop.f32.mrf.mxu0
      %v4262 = vadd.f32 %v4173, %v4261
      %v4263 = vpop.f32.mrf.mxu0
      %v4264 = vadd.f32 %v4175, %v4263
      %4265 = vmatmul.bf16.gmra.mxu0 %v2204
      %v4266 = vpop.f32.mrf.mxu0
      %v4267 = vadd.f32 %v4178, %v4266
      %v4268 = vpop.f32.mrf.mxu0
      %v4269 = vadd.f32 %v4180, %v4268
      %4270 = vdwg.mxu0
      %4271 = vmatpush.bf16.msra.mxu0 %v3257
      %4272 = vmatpush.bf16.msra.mxu0 %v3256
      %4273 = vmatpush.bf16.msra.mxu0 %v3255
      %4274 = vmatpush.bf16.msra.mxu0 %v3254
      %4275 = vmatpush.bf16.msra.mxu0 %v3253
      %4276 = vmatpush.bf16.msra.mxu0 %v3252
      %4277 = vmatpush.bf16.msra.mxu0 %v3251
      %4278 = vmatpush.bf16.msra.mxu0 %v3250
      %4279 = vmatmul.bf16.gmra.mxu0 %v1890
      %v4280 = vpop.f32.mrf.mxu0
      %v4281 = vadd.f32 %v4192, %v4280
      %v4282 = vpop.f32.mrf.mxu0
      %v4283 = vadd.f32 %v4194, %v4282
      %4284 = vmatmul.bf16.gmra.mxu0 %v1911
      %v4285 = vpop.f32.mrf.mxu0
      %v4286 = vadd.f32 %v4197, %v4285
      %v4287 = vpop.f32.mrf.mxu0
      %v4288 = vadd.f32 %v4199, %v4287
      %4289 = vmatmul.bf16.gmra.mxu0 %v1932
      %v4290 = vpop.f32.mrf.mxu0
      %v4291 = vadd.f32 %v4202, %v4290
      %v4292 = vpop.f32.mrf.mxu0
      %v4293 = vadd.f32 %v4204, %v4292
      %4294 = vmatmul.bf16.gmra.mxu0 %v1953
      %v4295 = vpop.f32.mrf.mxu0
      %v4296 = vadd.f32 %v4207, %v4295
      %v4297 = vpop.f32.mrf.mxu0
      %v4298 = vadd.f32 %v4209, %v4297
      %4299 = vmatmul.bf16.gmra.mxu0 %v1974
      %v4300 = vpop.f32.mrf.mxu0
      %v4301 = vadd.f32 %v4212, %v4300
      %v4302 = vpop.f32.mrf.mxu0
      %v4303 = vadd.f32 %v4214, %v4302
      %4304 = vmatmul.bf16.gmra.mxu0 %v1995
      %v4305 = vpop.f32.mrf.mxu0
      %v4306 = vadd.f32 %v4217, %v4305
      %v4307 = vpop.f32.mrf.mxu0
      %v4308 = vadd.f32 %v4219, %v4307
      %4309 = vmatmul.bf16.gmra.mxu0 %v2016
      %v4310 = vpop.f32.mrf.mxu0
      %v4311 = vadd.f32 %v4222, %v4310
      %v4312 = vpop.f32.mrf.mxu0
      %v4313 = vadd.f32 %v4224, %v4312
      %4314 = vmatmul.bf16.gmra.mxu0 %v2037
      %v4315 = vpop.f32.mrf.mxu0
      %v4316 = vadd.f32 %v4227, %v4315
      %v4317 = vpop.f32.mrf.mxu0
      %v4318 = vadd.f32 %v4229, %v4317
      %4319 = vmatmul.bf16.gmra.mxu0 %v2058
      %v4320 = vpop.f32.mrf.mxu0
      %v4321 = vadd.f32 %v4232, %v4320
      %v4322 = vpop.f32.mrf.mxu0
      %v4323 = vadd.f32 %v4234, %v4322
      %4324 = vmatmul.bf16.gmra.mxu0 %v2079
      %v4325 = vpop.f32.mrf.mxu0
      %v4326 = vadd.f32 %v4237, %v4325
      %v4327 = vpop.f32.mrf.mxu0
      %v4328 = vadd.f32 %v4239, %v4327
      %4329 = vmatmul.bf16.gmra.mxu0 %v2100
      %v4330 = vpop.f32.mrf.mxu0
      %v4331 = vadd.f32 %v4242, %v4330
      %v4332 = vpop.f32.mrf.mxu0
      %v4333 = vadd.f32 %v4244, %v4332
      %4334 = vmatmul.bf16.gmra.mxu0 %v2121
      %v4335 = vpop.f32.mrf.mxu0
      %v4336 = vadd.f32 %v4247, %v4335
      %v4337 = vpop.f32.mrf.mxu0
      %v4338 = vadd.f32 %v4249, %v4337
      %4339 = vmatmul.bf16.gmra.mxu0 %v2142
      %v4340 = vpop.f32.mrf.mxu0
      %v4341 = vadd.f32 %v4252, %v4340
      %v4342 = vpop.f32.mrf.mxu0
      %v4343 = vadd.f32 %v4254, %v4342
      %4344 = vmatmul.bf16.gmra.mxu0 %v2163
      %v4345 = vpop.f32.mrf.mxu0
      %v4346 = vadd.f32 %v4257, %v4345
      %v4347 = vpop.f32.mrf.mxu0
      %v4348 = vadd.f32 %v4259, %v4347
      %4349 = vmatmul.bf16.gmra.mxu0 %v2184
      %v4350 = vpop.f32.mrf.mxu0
      %v4351 = vadd.f32 %v4262, %v4350
      %v4352 = vpop.f32.mrf.mxu0
      %v4353 = vadd.f32 %v4264, %v4352
      %4354 = vmatmul.bf16.gmra.mxu0 %v2205
      %v4355 = vpop.f32.mrf.mxu0
      %v4356 = vadd.f32 %v4267, %v4355
      %v4357 = vpop.f32.mrf.mxu0
      %v4358 = vadd.f32 %v4269, %v4357
      %4359 = vdwg.mxu0
      %4360 = vmatpush.bf16.msra.mxu0 %v3265
      %4361 = vmatpush.bf16.msra.mxu0 %v3264
      %4362 = vmatpush.bf16.msra.mxu0 %v3263
      %4363 = vmatpush.bf16.msra.mxu0 %v3262
      %4364 = vmatpush.bf16.msra.mxu0 %v3261
      %4365 = vmatpush.bf16.msra.mxu0 %v3260
      %4366 = vmatpush.bf16.msra.mxu0 %v3259
      %4367 = vmatpush.bf16.msra.mxu0 %v3258
      %4368 = vmatmul.bf16.gmra.mxu0 %v1891
      %v4369 = vpop.f32.mrf.mxu0
      %v4370 = vadd.f32 %v4281, %v4369
      %v4371 = vpop.f32.mrf.mxu0
      %v4372 = vadd.f32 %v4283, %v4371
      %4373 = vmatmul.bf16.gmra.mxu0 %v1912
      %v4374 = vpop.f32.mrf.mxu0
      %v4375 = vadd.f32 %v4286, %v4374
      %v4376 = vpop.f32.mrf.mxu0
      %v4377 = vadd.f32 %v4288, %v4376
      %4378 = vmatmul.bf16.gmra.mxu0 %v1933
      %v4379 = vpop.f32.mrf.mxu0
      %v4380 = vadd.f32 %v4291, %v4379
      %v4381 = vpop.f32.mrf.mxu0
      %v4382 = vadd.f32 %v4293, %v4381
      %4383 = vmatmul.bf16.gmra.mxu0 %v1954
      %v4384 = vpop.f32.mrf.mxu0
      %v4385 = vadd.f32 %v4296, %v4384
      %v4386 = vpop.f32.mrf.mxu0
      %v4387 = vadd.f32 %v4298, %v4386
      %4388 = vmatmul.bf16.gmra.mxu0 %v1975
      %v4389 = vpop.f32.mrf.mxu0
      %v4390 = vadd.f32 %v4301, %v4389
      %v4391 = vpop.f32.mrf.mxu0
      %v4392 = vadd.f32 %v4303, %v4391
      %4393 = vmatmul.bf16.gmra.mxu0 %v1996
      %v4394 = vpop.f32.mrf.mxu0
      %v4395 = vadd.f32 %v4306, %v4394
      %v4396 = vpop.f32.mrf.mxu0
      %v4397 = vadd.f32 %v4308, %v4396
      %4398 = vmatmul.bf16.gmra.mxu0 %v2017
      %v4399 = vpop.f32.mrf.mxu0
      %v4400 = vadd.f32 %v4311, %v4399
      %v4401 = vpop.f32.mrf.mxu0
      %v4402 = vadd.f32 %v4313, %v4401
      %4403 = vmatmul.bf16.gmra.mxu0 %v2038
      %v4404 = vpop.f32.mrf.mxu0
      %v4405 = vadd.f32 %v4316, %v4404
      %v4406 = vpop.f32.mrf.mxu0
      %v4407 = vadd.f32 %v4318, %v4406
      %4408 = vmatmul.bf16.gmra.mxu0 %v2059
      %v4409 = vpop.f32.mrf.mxu0
      %v4410 = vadd.f32 %v4321, %v4409
      %v4411 = vpop.f32.mrf.mxu0
      %v4412 = vadd.f32 %v4323, %v4411
      %4413 = vmatmul.bf16.gmra.mxu0 %v2080
      %v4414 = vpop.f32.mrf.mxu0
      %v4415 = vadd.f32 %v4326, %v4414
      %v4416 = vpop.f32.mrf.mxu0
      %v4417 = vadd.f32 %v4328, %v4416
      %4418 = vmatmul.bf16.gmra.mxu0 %v2101
      %v4419 = vpop.f32.mrf.mxu0
      %v4420 = vadd.f32 %v4331, %v4419
      %v4421 = vpop.f32.mrf.mxu0
      %v4422 = vadd.f32 %v4333, %v4421
      %4423 = vmatmul.bf16.gmra.mxu0 %v2122
      %v4424 = vpop.f32.mrf.mxu0
      %v4425 = vadd.f32 %v4336, %v4424
      %v4426 = vpop.f32.mrf.mxu0
      %v4427 = vadd.f32 %v4338, %v4426
      %4428 = vmatmul.bf16.gmra.mxu0 %v2143
      %v4429 = vpop.f32.mrf.mxu0
      %v4430 = vadd.f32 %v4341, %v4429
      %v4431 = vpop.f32.mrf.mxu0
      %v4432 = vadd.f32 %v4343, %v4431
      %4433 = vmatmul.bf16.gmra.mxu0 %v2164
      %v4434 = vpop.f32.mrf.mxu0
      %v4435 = vadd.f32 %v4346, %v4434
      %v4436 = vpop.f32.mrf.mxu0
      %v4437 = vadd.f32 %v4348, %v4436
      %4438 = vmatmul.bf16.gmra.mxu0 %v2185
      %v4439 = vpop.f32.mrf.mxu0
      %v4440 = vadd.f32 %v4351, %v4439
      %v4441 = vpop.f32.mrf.mxu0
      %v4442 = vadd.f32 %v4353, %v4441
      %4443 = vmatmul.bf16.gmra.mxu0 %v2206
      %v4444 = vpop.f32.mrf.mxu0
      %v4445 = vadd.f32 %v4356, %v4444
      %v4446 = vpop.f32.mrf.mxu0
      %v4447 = vadd.f32 %v4358, %v4446
      %4448 = vdwg.mxu0
      %4449 = vmatpush.bf16.msra.mxu0 %v3273
      %4450 = vmatpush.bf16.msra.mxu0 %v3272
      %4451 = vmatpush.bf16.msra.mxu0 %v3271
      %4452 = vmatpush.bf16.msra.mxu0 %v3270
      %4453 = vmatpush.bf16.msra.mxu0 %v3269
      %4454 = vmatpush.bf16.msra.mxu0 %v3268
      %4455 = vmatpush.bf16.msra.mxu0 %v3267
      %4456 = vmatpush.bf16.msra.mxu0 %v3266
      %4457 = vmatmul.bf16.gmra.mxu0 %v1892
      %v4458 = vpop.f32.mrf.mxu0
      %v4459 = vadd.f32 %v4370, %v4458
      %v4460 = vpop.f32.mrf.mxu0
      %v4461 = vadd.f32 %v4372, %v4460
      %4462 = vmatmul.bf16.gmra.mxu0 %v1913
      %v4463 = vpop.f32.mrf.mxu0
      %v4464 = vadd.f32 %v4375, %v4463
      %v4465 = vpop.f32.mrf.mxu0
      %v4466 = vadd.f32 %v4377, %v4465
      %4467 = vmatmul.bf16.gmra.mxu0 %v1934
      %v4468 = vpop.f32.mrf.mxu0
      %v4469 = vadd.f32 %v4380, %v4468
      %v4470 = vpop.f32.mrf.mxu0
      %v4471 = vadd.f32 %v4382, %v4470
      %4472 = vmatmul.bf16.gmra.mxu0 %v1955
      %v4473 = vpop.f32.mrf.mxu0
      %v4474 = vadd.f32 %v4385, %v4473
      %v4475 = vpop.f32.mrf.mxu0
      %v4476 = vadd.f32 %v4387, %v4475
      %4477 = vmatmul.bf16.gmra.mxu0 %v1976
      %v4478 = vpop.f32.mrf.mxu0
      %v4479 = vadd.f32 %v4390, %v4478
      %v4480 = vpop.f32.mrf.mxu0
      %v4481 = vadd.f32 %v4392, %v4480
      %4482 = vmatmul.bf16.gmra.mxu0 %v1997
      %v4483 = vpop.f32.mrf.mxu0
      %v4484 = vadd.f32 %v4395, %v4483
      %v4485 = vpop.f32.mrf.mxu0
      %v4486 = vadd.f32 %v4397, %v4485
      %4487 = vmatmul.bf16.gmra.mxu0 %v2018
      %v4488 = vpop.f32.mrf.mxu0
      %v4489 = vadd.f32 %v4400, %v4488
      %v4490 = vpop.f32.mrf.mxu0
      %v4491 = vadd.f32 %v4402, %v4490
      %4492 = vmatmul.bf16.gmra.mxu0 %v2039
      %v4493 = vpop.f32.mrf.mxu0
      %v4494 = vadd.f32 %v4405, %v4493
      %v4495 = vpop.f32.mrf.mxu0
      %v4496 = vadd.f32 %v4407, %v4495
      %4497 = vmatmul.bf16.gmra.mxu0 %v2060
      %v4498 = vpop.f32.mrf.mxu0
      %v4499 = vadd.f32 %v4410, %v4498
      %v4500 = vpop.f32.mrf.mxu0
      %v4501 = vadd.f32 %v4412, %v4500
      %4502 = vmatmul.bf16.gmra.mxu0 %v2081
      %v4503 = vpop.f32.mrf.mxu0
      %v4504 = vadd.f32 %v4415, %v4503
      %v4505 = vpop.f32.mrf.mxu0
      %v4506 = vadd.f32 %v4417, %v4505
      %4507 = vmatmul.bf16.gmra.mxu0 %v2102
      %v4508 = vpop.f32.mrf.mxu0
      %v4509 = vadd.f32 %v4420, %v4508
      %v4510 = vpop.f32.mrf.mxu0
      %v4511 = vadd.f32 %v4422, %v4510
      %4512 = vmatmul.bf16.gmra.mxu0 %v2123
      %v4513 = vpop.f32.mrf.mxu0
      %v4514 = vadd.f32 %v4425, %v4513
      %v4515 = vpop.f32.mrf.mxu0
      %v4516 = vadd.f32 %v4427, %v4515
      %4517 = vmatmul.bf16.gmra.mxu0 %v2144
      %v4518 = vpop.f32.mrf.mxu0
      %v4519 = vadd.f32 %v4430, %v4518
      %v4520 = vpop.f32.mrf.mxu0
      %v4521 = vadd.f32 %v4432, %v4520
      %4522 = vmatmul.bf16.gmra.mxu0 %v2165
      %v4523 = vpop.f32.mrf.mxu0
      %v4524 = vadd.f32 %v4435, %v4523
      %v4525 = vpop.f32.mrf.mxu0
      %v4526 = vadd.f32 %v4437, %v4525
      %4527 = vmatmul.bf16.gmra.mxu0 %v2186
      %v4528 = vpop.f32.mrf.mxu0
      %v4529 = vadd.f32 %v4440, %v4528
      %v4530 = vpop.f32.mrf.mxu0
      %v4531 = vadd.f32 %v4442, %v4530
      %4532 = vmatmul.bf16.gmra.mxu0 %v2207
      %v4533 = vpop.f32.mrf.mxu0
      %v4534 = vadd.f32 %v4445, %v4533
      %v4535 = vpop.f32.mrf.mxu0
      %v4536 = vadd.f32 %v4447, %v4535
      %4537 = vdwg.mxu0
      %4538 = vmatpush.bf16.msra.mxu0 %v3281
      %4539 = vmatpush.bf16.msra.mxu0 %v3280
      %4540 = vmatpush.bf16.msra.mxu0 %v3279
      %4541 = vmatpush.bf16.msra.mxu0 %v3278
      %4542 = vmatpush.bf16.msra.mxu0 %v3277
      %4543 = vmatpush.bf16.msra.mxu0 %v3276
      %4544 = vmatpush.bf16.msra.mxu0 %v3275
      %4545 = vmatpush.bf16.msra.mxu0 %v3274
      %4546 = vmatmul.bf16.gmra.mxu0 %v1893
      %v4547 = vpop.f32.mrf.mxu0
      %v4548 = vadd.f32 %v4459, %v4547
      %v4549 = vpop.f32.mrf.mxu0
      %v4550 = vadd.f32 %v4461, %v4549
      %4551 = vmatmul.bf16.gmra.mxu0 %v1914
      %v4552 = vpop.f32.mrf.mxu0
      %v4553 = vadd.f32 %v4464, %v4552
      %v4554 = vpop.f32.mrf.mxu0
      %v4555 = vadd.f32 %v4466, %v4554
      %4556 = vmatmul.bf16.gmra.mxu0 %v1935
      %v4557 = vpop.f32.mrf.mxu0
      %v4558 = vadd.f32 %v4469, %v4557
      %v4559 = vpop.f32.mrf.mxu0
      %v4560 = vadd.f32 %v4471, %v4559
      %4561 = vmatmul.bf16.gmra.mxu0 %v1956
      %v4562 = vpop.f32.mrf.mxu0
      %v4563 = vadd.f32 %v4474, %v4562
      %v4564 = vpop.f32.mrf.mxu0
      %v4565 = vadd.f32 %v4476, %v4564
      %4566 = vmatmul.bf16.gmra.mxu0 %v1977
      %v4567 = vpop.f32.mrf.mxu0
      %v4568 = vadd.f32 %v4479, %v4567
      %v4569 = vpop.f32.mrf.mxu0
      %v4570 = vadd.f32 %v4481, %v4569
      %4571 = vmatmul.bf16.gmra.mxu0 %v1998
      %v4572 = vpop.f32.mrf.mxu0
      %v4573 = vadd.f32 %v4484, %v4572
      %v4574 = vpop.f32.mrf.mxu0
      %v4575 = vadd.f32 %v4486, %v4574
      %4576 = vmatmul.bf16.gmra.mxu0 %v2019
      %v4577 = vpop.f32.mrf.mxu0
      %v4578 = vadd.f32 %v4489, %v4577
      %v4579 = vpop.f32.mrf.mxu0
      %v4580 = vadd.f32 %v4491, %v4579
      %4581 = vmatmul.bf16.gmra.mxu0 %v2040
      %v4582 = vpop.f32.mrf.mxu0
      %v4583 = vadd.f32 %v4494, %v4582
      %v4584 = vpop.f32.mrf.mxu0
      %v4585 = vadd.f32 %v4496, %v4584
      %4586 = vmatmul.bf16.gmra.mxu0 %v2061
      %v4587 = vpop.f32.mrf.mxu0
      %v4588 = vadd.f32 %v4499, %v4587
      %v4589 = vpop.f32.mrf.mxu0
      %v4590 = vadd.f32 %v4501, %v4589
      %4591 = vmatmul.bf16.gmra.mxu0 %v2082
      %v4592 = vpop.f32.mrf.mxu0
      %v4593 = vadd.f32 %v4504, %v4592
      %v4594 = vpop.f32.mrf.mxu0
      %v4595 = vadd.f32 %v4506, %v4594
      %4596 = vmatmul.bf16.gmra.mxu0 %v2103
      %v4597 = vpop.f32.mrf.mxu0
      %v4598 = vadd.f32 %v4509, %v4597
      %v4599 = vpop.f32.mrf.mxu0
      %v4600 = vadd.f32 %v4511, %v4599
      %4601 = vmatmul.bf16.gmra.mxu0 %v2124
      %v4602 = vpop.f32.mrf.mxu0
      %v4603 = vadd.f32 %v4514, %v4602
      %v4604 = vpop.f32.mrf.mxu0
      %v4605 = vadd.f32 %v4516, %v4604
      %4606 = vmatmul.bf16.gmra.mxu0 %v2145
      %v4607 = vpop.f32.mrf.mxu0
      %v4608 = vadd.f32 %v4519, %v4607
      %v4609 = vpop.f32.mrf.mxu0
      %v4610 = vadd.f32 %v4521, %v4609
      %4611 = vmatmul.bf16.gmra.mxu0 %v2166
      %v4612 = vpop.f32.mrf.mxu0
      %v4613 = vadd.f32 %v4524, %v4612
      %v4614 = vpop.f32.mrf.mxu0
      %v4615 = vadd.f32 %v4526, %v4614
      %4616 = vmatmul.bf16.gmra.mxu0 %v2187
      %v4617 = vpop.f32.mrf.mxu0
      %v4618 = vadd.f32 %v4529, %v4617
      %v4619 = vpop.f32.mrf.mxu0
      %v4620 = vadd.f32 %v4531, %v4619
      %4621 = vmatmul.bf16.gmra.mxu0 %v2208
      %v4622 = vpop.f32.mrf.mxu0
      %v4623 = vadd.f32 %v4534, %v4622
      %v4624 = vpop.f32.mrf.mxu0
      %v4625 = vadd.f32 %v4536, %v4624
      %4626 = vdwg.mxu0
      %4627 = vmatpush.bf16.msra.mxu0 %v3289
      %4628 = vmatpush.bf16.msra.mxu0 %v3288
      %4629 = vmatpush.bf16.msra.mxu0 %v3287
      %4630 = vmatpush.bf16.msra.mxu0 %v3286
      %4631 = vmatpush.bf16.msra.mxu0 %v3285
      %4632 = vmatpush.bf16.msra.mxu0 %v3284
      %4633 = vmatpush.bf16.msra.mxu0 %v3283
      %4634 = vmatpush.bf16.msra.mxu0 %v3282
      %4635 = vmatmul.bf16.gmra.mxu0 %v1894
      %v4636 = vpop.f32.mrf.mxu0
      %v4637 = vadd.f32 %v4548, %v4636
      %v4638 = vpop.f32.mrf.mxu0
      %v4639 = vadd.f32 %v4550, %v4638
      %4640 = vmatmul.bf16.gmra.mxu0 %v1915
      %v4641 = vpop.f32.mrf.mxu0
      %v4642 = vadd.f32 %v4553, %v4641
      %v4643 = vpop.f32.mrf.mxu0
      %v4644 = vadd.f32 %v4555, %v4643
      %4645 = vmatmul.bf16.gmra.mxu0 %v1936
      %v4646 = vpop.f32.mrf.mxu0
      %v4647 = vadd.f32 %v4558, %v4646
      %v4648 = vpop.f32.mrf.mxu0
      %v4649 = vadd.f32 %v4560, %v4648
      %4650 = vmatmul.bf16.gmra.mxu0 %v1957
      %v4651 = vpop.f32.mrf.mxu0
      %v4652 = vadd.f32 %v4563, %v4651
      %v4653 = vpop.f32.mrf.mxu0
      %v4654 = vadd.f32 %v4565, %v4653
      %4655 = vmatmul.bf16.gmra.mxu0 %v1978
      %v4656 = vpop.f32.mrf.mxu0
      %v4657 = vadd.f32 %v4568, %v4656
      %v4658 = vpop.f32.mrf.mxu0
      %v4659 = vadd.f32 %v4570, %v4658
      %4660 = vmatmul.bf16.gmra.mxu0 %v1999
      %v4661 = vpop.f32.mrf.mxu0
      %v4662 = vadd.f32 %v4573, %v4661
      %v4663 = vpop.f32.mrf.mxu0
      %v4664 = vadd.f32 %v4575, %v4663
      %4665 = vmatmul.bf16.gmra.mxu0 %v2020
      %v4666 = vpop.f32.mrf.mxu0
      %v4667 = vadd.f32 %v4578, %v4666
      %v4668 = vpop.f32.mrf.mxu0
      %v4669 = vadd.f32 %v4580, %v4668
      %4670 = vmatmul.bf16.gmra.mxu0 %v2041
      %v4671 = vpop.f32.mrf.mxu0
      %v4672 = vadd.f32 %v4583, %v4671
      %v4673 = vpop.f32.mrf.mxu0
      %v4674 = vadd.f32 %v4585, %v4673
      %4675 = vmatmul.bf16.gmra.mxu0 %v2062
      %v4676 = vpop.f32.mrf.mxu0
      %v4677 = vadd.f32 %v4588, %v4676
      %v4678 = vpop.f32.mrf.mxu0
      %v4679 = vadd.f32 %v4590, %v4678
      %4680 = vmatmul.bf16.gmra.mxu0 %v2083
      %v4681 = vpop.f32.mrf.mxu0
      %v4682 = vadd.f32 %v4593, %v4681
      %v4683 = vpop.f32.mrf.mxu0
      %v4684 = vadd.f32 %v4595, %v4683
      %4685 = vmatmul.bf16.gmra.mxu0 %v2104
      %v4686 = vpop.f32.mrf.mxu0
      %v4687 = vadd.f32 %v4598, %v4686
      %v4688 = vpop.f32.mrf.mxu0
      %v4689 = vadd.f32 %v4600, %v4688
      %4690 = vmatmul.bf16.gmra.mxu0 %v2125
      %v4691 = vpop.f32.mrf.mxu0
      %v4692 = vadd.f32 %v4603, %v4691
      %v4693 = vpop.f32.mrf.mxu0
      %v4694 = vadd.f32 %v4605, %v4693
      %4695 = vmatmul.bf16.gmra.mxu0 %v2146
      %v4696 = vpop.f32.mrf.mxu0
      %v4697 = vadd.f32 %v4608, %v4696
      %v4698 = vpop.f32.mrf.mxu0
      %v4699 = vadd.f32 %v4610, %v4698
      %4700 = vmatmul.bf16.gmra.mxu0 %v2167
      %v4701 = vpop.f32.mrf.mxu0
      %v4702 = vadd.f32 %v4613, %v4701
      %v4703 = vpop.f32.mrf.mxu0
      %v4704 = vadd.f32 %v4615, %v4703
      %4705 = vmatmul.bf16.gmra.mxu0 %v2188
      %v4706 = vpop.f32.mrf.mxu0
      %v4707 = vadd.f32 %v4618, %v4706
      %v4708 = vpop.f32.mrf.mxu0
      %v4709 = vadd.f32 %v4620, %v4708
      %4710 = vmatmul.bf16.gmra.mxu0 %v2209
      %v4711 = vpop.f32.mrf.mxu0
      %v4712 = vadd.f32 %v4623, %v4711
      %v4713 = vpop.f32.mrf.mxu0
      %v4714 = vadd.f32 %v4625, %v4713
      %4715 = vdwg.mxu0
      %4716 = vmatpush.bf16.msra.mxu0 %v3297
      %4717 = vmatpush.bf16.msra.mxu0 %v3296
      %4718 = vmatpush.bf16.msra.mxu0 %v3295
      %4719 = vmatpush.bf16.msra.mxu0 %v3294
      %4720 = vmatpush.bf16.msra.mxu0 %v3293
      %4721 = vmatpush.bf16.msra.mxu0 %v3292
      %4722 = vmatpush.bf16.msra.mxu0 %v3291
      %4723 = vmatpush.bf16.msra.mxu0 %v3290
      %4724 = vmatmul.bf16.gmra.mxu0 %v1895
      %v4725 = vpop.f32.mrf.mxu0
      %v4726 = vadd.f32 %v4637, %v4725
      %v4727 = vpop.f32.mrf.mxu0
      %v4728 = vadd.f32 %v4639, %v4727
      %4729 = vmatmul.bf16.gmra.mxu0 %v1916
      %v4730 = vpop.f32.mrf.mxu0
      %v4731 = vadd.f32 %v4642, %v4730
      %v4732 = vpop.f32.mrf.mxu0
      %v4733 = vadd.f32 %v4644, %v4732
      %4734 = vmatmul.bf16.gmra.mxu0 %v1937
      %v4735 = vpop.f32.mrf.mxu0
      %v4736 = vadd.f32 %v4647, %v4735
      %v4737 = vpop.f32.mrf.mxu0
      %v4738 = vadd.f32 %v4649, %v4737
      %4739 = vmatmul.bf16.gmra.mxu0 %v1958
      %v4740 = vpop.f32.mrf.mxu0
      %v4741 = vadd.f32 %v4652, %v4740
      %v4742 = vpop.f32.mrf.mxu0
      %v4743 = vadd.f32 %v4654, %v4742
      %4744 = vmatmul.bf16.gmra.mxu0 %v1979
      %v4745 = vpop.f32.mrf.mxu0
      %v4746 = vadd.f32 %v4657, %v4745
      %v4747 = vpop.f32.mrf.mxu0
      %v4748 = vadd.f32 %v4659, %v4747
      %4749 = vmatmul.bf16.gmra.mxu0 %v2000
      %v4750 = vpop.f32.mrf.mxu0
      %v4751 = vadd.f32 %v4662, %v4750
      %v4752 = vpop.f32.mrf.mxu0
      %v4753 = vadd.f32 %v4664, %v4752
      %4754 = vmatmul.bf16.gmra.mxu0 %v2021
      %v4755 = vpop.f32.mrf.mxu0
      %v4756 = vadd.f32 %v4667, %v4755
      %v4757 = vpop.f32.mrf.mxu0
      %v4758 = vadd.f32 %v4669, %v4757
      %4759 = vmatmul.bf16.gmra.mxu0 %v2042
      %v4760 = vpop.f32.mrf.mxu0
      %v4761 = vadd.f32 %v4672, %v4760
      %v4762 = vpop.f32.mrf.mxu0
      %v4763 = vadd.f32 %v4674, %v4762
      %4764 = vmatmul.bf16.gmra.mxu0 %v2063
      %v4765 = vpop.f32.mrf.mxu0
      %v4766 = vadd.f32 %v4677, %v4765
      %v4767 = vpop.f32.mrf.mxu0
      %v4768 = vadd.f32 %v4679, %v4767
      %4769 = vmatmul.bf16.gmra.mxu0 %v2084
      %v4770 = vpop.f32.mrf.mxu0
      %v4771 = vadd.f32 %v4682, %v4770
      %v4772 = vpop.f32.mrf.mxu0
      %v4773 = vadd.f32 %v4684, %v4772
      %4774 = vmatmul.bf16.gmra.mxu0 %v2105
      %v4775 = vpop.f32.mrf.mxu0
      %v4776 = vadd.f32 %v4687, %v4775
      %v4777 = vpop.f32.mrf.mxu0
      %v4778 = vadd.f32 %v4689, %v4777
      %4779 = vmatmul.bf16.gmra.mxu0 %v2126
      %v4780 = vpop.f32.mrf.mxu0
      %v4781 = vadd.f32 %v4692, %v4780
      %v4782 = vpop.f32.mrf.mxu0
      %v4783 = vadd.f32 %v4694, %v4782
      %4784 = vmatmul.bf16.gmra.mxu0 %v2147
      %v4785 = vpop.f32.mrf.mxu0
      %v4786 = vadd.f32 %v4697, %v4785
      %v4787 = vpop.f32.mrf.mxu0
      %v4788 = vadd.f32 %v4699, %v4787
      %4789 = vmatmul.bf16.gmra.mxu0 %v2168
      %v4790 = vpop.f32.mrf.mxu0
      %v4791 = vadd.f32 %v4702, %v4790
      %v4792 = vpop.f32.mrf.mxu0
      %v4793 = vadd.f32 %v4704, %v4792
      %4794 = vmatmul.bf16.gmra.mxu0 %v2189
      %v4795 = vpop.f32.mrf.mxu0
      %v4796 = vadd.f32 %v4707, %v4795
      %v4797 = vpop.f32.mrf.mxu0
      %v4798 = vadd.f32 %v4709, %v4797
      %4799 = vmatmul.bf16.gmra.mxu0 %v2210
      %v4800 = vpop.f32.mrf.mxu0
      %v4801 = vadd.f32 %v4712, %v4800
      %v4802 = vpop.f32.mrf.mxu0
      %v4803 = vadd.f32 %v4714, %v4802
      %4804 = vdwg.mxu0
      %4805 = vmatpush.bf16.msra.mxu0 %v3305
      %4806 = vmatpush.bf16.msra.mxu0 %v3304
      %4807 = vmatpush.bf16.msra.mxu0 %v3303
      %4808 = vmatpush.bf16.msra.mxu0 %v3302
      %4809 = vmatpush.bf16.msra.mxu0 %v3301
      %4810 = vmatpush.bf16.msra.mxu0 %v3300
      %4811 = vmatpush.bf16.msra.mxu0 %v3299
      %4812 = vmatpush.bf16.msra.mxu0 %v3298
      %4813 = vmatmul.bf16.gmra.mxu0 %v1896
      %v4814 = vpop.f32.mrf.mxu0
      %v4815 = vadd.f32 %v4726, %v4814
      %v4816 = vpop.f32.mrf.mxu0
      %v4817 = vadd.f32 %v4728, %v4816
      %4818 = vmatmul.bf16.gmra.mxu0 %v1917
      %v4819 = vpop.f32.mrf.mxu0
      %v4820 = vadd.f32 %v4731, %v4819
      %v4821 = vpop.f32.mrf.mxu0
      %v4822 = vadd.f32 %v4733, %v4821
      %4823 = vmatmul.bf16.gmra.mxu0 %v1938
      %v4824 = vpop.f32.mrf.mxu0
      %v4825 = vadd.f32 %v4736, %v4824
      %v4826 = vpop.f32.mrf.mxu0
      %v4827 = vadd.f32 %v4738, %v4826
      %4828 = vmatmul.bf16.gmra.mxu0 %v1959
      %v4829 = vpop.f32.mrf.mxu0
      %v4830 = vadd.f32 %v4741, %v4829
      %v4831 = vpop.f32.mrf.mxu0
      %v4832 = vadd.f32 %v4743, %v4831
      %4833 = vmatmul.bf16.gmra.mxu0 %v1980
      %v4834 = vpop.f32.mrf.mxu0
      %v4835 = vadd.f32 %v4746, %v4834
      %v4836 = vpop.f32.mrf.mxu0
      %v4837 = vadd.f32 %v4748, %v4836
      %4838 = vmatmul.bf16.gmra.mxu0 %v2001
      %v4839 = vpop.f32.mrf.mxu0
      %v4840 = vadd.f32 %v4751, %v4839
      %v4841 = vpop.f32.mrf.mxu0
      %v4842 = vadd.f32 %v4753, %v4841
      %4843 = vmatmul.bf16.gmra.mxu0 %v2022
      %v4844 = vpop.f32.mrf.mxu0
      %v4845 = vadd.f32 %v4756, %v4844
      %v4846 = vpop.f32.mrf.mxu0
      %v4847 = vadd.f32 %v4758, %v4846
      %4848 = vmatmul.bf16.gmra.mxu0 %v2043
      %v4849 = vpop.f32.mrf.mxu0
      %v4850 = vadd.f32 %v4761, %v4849
      %v4851 = vpop.f32.mrf.mxu0
      %v4852 = vadd.f32 %v4763, %v4851
      %4853 = vmatmul.bf16.gmra.mxu0 %v2064
      %v4854 = vpop.f32.mrf.mxu0
      %v4855 = vadd.f32 %v4766, %v4854
      %v4856 = vpop.f32.mrf.mxu0
      %v4857 = vadd.f32 %v4768, %v4856
      %4858 = vmatmul.bf16.gmra.mxu0 %v2085
      %v4859 = vpop.f32.mrf.mxu0
      %v4860 = vadd.f32 %v4771, %v4859
      %v4861 = vpop.f32.mrf.mxu0
      %v4862 = vadd.f32 %v4773, %v4861
      %4863 = vmatmul.bf16.gmra.mxu0 %v2106
      %v4864 = vpop.f32.mrf.mxu0
      %v4865 = vadd.f32 %v4776, %v4864
      %v4866 = vpop.f32.mrf.mxu0
      %v4867 = vadd.f32 %v4778, %v4866
      %4868 = vmatmul.bf16.gmra.mxu0 %v2127
      %v4869 = vpop.f32.mrf.mxu0
      %v4870 = vadd.f32 %v4781, %v4869
      %v4871 = vpop.f32.mrf.mxu0
      %v4872 = vadd.f32 %v4783, %v4871
      %4873 = vmatmul.bf16.gmra.mxu0 %v2148
      %v4874 = vpop.f32.mrf.mxu0
      %v4875 = vadd.f32 %v4786, %v4874
      %v4876 = vpop.f32.mrf.mxu0
      %v4877 = vadd.f32 %v4788, %v4876
      %4878 = vmatmul.bf16.gmra.mxu0 %v2169
      %v4879 = vpop.f32.mrf.mxu0
      %v4880 = vadd.f32 %v4791, %v4879
      %v4881 = vpop.f32.mrf.mxu0
      %v4882 = vadd.f32 %v4793, %v4881
      %4883 = vmatmul.bf16.gmra.mxu0 %v2190
      %v4884 = vpop.f32.mrf.mxu0
      %v4885 = vadd.f32 %v4796, %v4884
      %v4886 = vpop.f32.mrf.mxu0
      %v4887 = vadd.f32 %v4798, %v4886
      %4888 = vmatmul.bf16.gmra.mxu0 %v2211
      %v4889 = vpop.f32.mrf.mxu0
      %v4890 = vadd.f32 %v4801, %v4889
      %v4891 = vpop.f32.mrf.mxu0
      %v4892 = vadd.f32 %v4803, %v4891
      %4893 = vdwg.mxu0
      %4894 = vmatpush.bf16.msra.mxu0 %v3313
      %4895 = vmatpush.bf16.msra.mxu0 %v3312
      %4896 = vmatpush.bf16.msra.mxu0 %v3311
      %4897 = vmatpush.bf16.msra.mxu0 %v3310
      %4898 = vmatpush.bf16.msra.mxu0 %v3309
      %4899 = vmatpush.bf16.msra.mxu0 %v3308
      %4900 = vmatpush.bf16.msra.mxu0 %v3307
      %4901 = vmatpush.bf16.msra.mxu0 %v3306
      %4902 = vmatmul.bf16.gmra.mxu0 %v1897
      %v4903 = vpop.f32.mrf.mxu0
      %v4904 = vadd.f32 %v4815, %v4903
      %v4905 = vpop.f32.mrf.mxu0
      %v4906 = vadd.f32 %v4817, %v4905
      %4907 = vmatmul.bf16.gmra.mxu0 %v1918
      %v4908 = vpop.f32.mrf.mxu0
      %v4909 = vadd.f32 %v4820, %v4908
      %v4910 = vpop.f32.mrf.mxu0
      %v4911 = vadd.f32 %v4822, %v4910
      %4912 = vmatmul.bf16.gmra.mxu0 %v1939
      %v4913 = vpop.f32.mrf.mxu0
      %v4914 = vadd.f32 %v4825, %v4913
      %v4915 = vpop.f32.mrf.mxu0
      %v4916 = vadd.f32 %v4827, %v4915
      %4917 = vmatmul.bf16.gmra.mxu0 %v1960
      %v4918 = vpop.f32.mrf.mxu0
      %v4919 = vadd.f32 %v4830, %v4918
      %v4920 = vpop.f32.mrf.mxu0
      %v4921 = vadd.f32 %v4832, %v4920
      %4922 = vmatmul.bf16.gmra.mxu0 %v1981
      %v4923 = vpop.f32.mrf.mxu0
      %v4924 = vadd.f32 %v4835, %v4923
      %v4925 = vpop.f32.mrf.mxu0
      %v4926 = vadd.f32 %v4837, %v4925
      %4927 = vmatmul.bf16.gmra.mxu0 %v2002
      %v4928 = vpop.f32.mrf.mxu0
      %v4929 = vadd.f32 %v4840, %v4928
      %v4930 = vpop.f32.mrf.mxu0
      %v4931 = vadd.f32 %v4842, %v4930
      %4932 = vmatmul.bf16.gmra.mxu0 %v2023
      %v4933 = vpop.f32.mrf.mxu0
      %v4934 = vadd.f32 %v4845, %v4933
      %v4935 = vpop.f32.mrf.mxu0
      %v4936 = vadd.f32 %v4847, %v4935
      %4937 = vmatmul.bf16.gmra.mxu0 %v2044
      %v4938 = vpop.f32.mrf.mxu0
      %v4939 = vadd.f32 %v4850, %v4938
      %v4940 = vpop.f32.mrf.mxu0
      %v4941 = vadd.f32 %v4852, %v4940
      %4942 = vmatmul.bf16.gmra.mxu0 %v2065
      %v4943 = vpop.f32.mrf.mxu0
      %v4944 = vadd.f32 %v4855, %v4943
      %v4945 = vpop.f32.mrf.mxu0
      %v4946 = vadd.f32 %v4857, %v4945
      %4947 = vmatmul.bf16.gmra.mxu0 %v2086
      %v4948 = vpop.f32.mrf.mxu0
      %v4949 = vadd.f32 %v4860, %v4948
      %v4950 = vpop.f32.mrf.mxu0
      %v4951 = vadd.f32 %v4862, %v4950
      %4952 = vmatmul.bf16.gmra.mxu0 %v2107
      %v4953 = vpop.f32.mrf.mxu0
      %v4954 = vadd.f32 %v4865, %v4953
      %v4955 = vpop.f32.mrf.mxu0
      %v4956 = vadd.f32 %v4867, %v4955
      %4957 = vmatmul.bf16.gmra.mxu0 %v2128
      %v4958 = vpop.f32.mrf.mxu0
      %v4959 = vadd.f32 %v4870, %v4958
      %v4960 = vpop.f32.mrf.mxu0
      %v4961 = vadd.f32 %v4872, %v4960
      %4962 = vmatmul.bf16.gmra.mxu0 %v2149
      %v4963 = vpop.f32.mrf.mxu0
      %v4964 = vadd.f32 %v4875, %v4963
      %v4965 = vpop.f32.mrf.mxu0
      %v4966 = vadd.f32 %v4877, %v4965
      %4967 = vmatmul.bf16.gmra.mxu0 %v2170
      %v4968 = vpop.f32.mrf.mxu0
      %v4969 = vadd.f32 %v4880, %v4968
      %v4970 = vpop.f32.mrf.mxu0
      %v4971 = vadd.f32 %v4882, %v4970
      %4972 = vmatmul.bf16.gmra.mxu0 %v2191
      %v4973 = vpop.f32.mrf.mxu0
      %v4974 = vadd.f32 %v4885, %v4973
      %v4975 = vpop.f32.mrf.mxu0
      %v4976 = vadd.f32 %v4887, %v4975
      %4977 = vmatmul.bf16.gmra.mxu0 %v2212
      %v4978 = vpop.f32.mrf.mxu0
      %v4979 = vadd.f32 %v4890, %v4978
      %v4980 = vpop.f32.mrf.mxu0
      %v4981 = vadd.f32 %v4892, %v4980
      %4982 = vdwg.mxu0
      %4983 = vmatpush.bf16.msra.mxu0 %v3321
      %4984 = vmatpush.bf16.msra.mxu0 %v3320
      %4985 = vmatpush.bf16.msra.mxu0 %v3319
      %4986 = vmatpush.bf16.msra.mxu0 %v3318
      %4987 = vmatpush.bf16.msra.mxu0 %v3317
      %4988 = vmatpush.bf16.msra.mxu0 %v3316
      %4989 = vmatpush.bf16.msra.mxu0 %v3315
      %4990 = vmatpush.bf16.msra.mxu0 %v3314
      %4991 = vmatmul.bf16.gmra.mxu0 %v1898
      %v4992 = vpop.f32.mrf.mxu0
      %v4993 = vadd.f32 %v4904, %v4992
      %v4994 = vpop.f32.mrf.mxu0
      %v4995 = vadd.f32 %v4906, %v4994
      %4996 = vmatmul.bf16.gmra.mxu0 %v1919
      %v4997 = vpop.f32.mrf.mxu0
      %v4998 = vadd.f32 %v4909, %v4997
      %v4999 = vpop.f32.mrf.mxu0
      %v5000 = vadd.f32 %v4911, %v4999
      %5001 = vmatmul.bf16.gmra.mxu0 %v1940
      %v5002 = vpop.f32.mrf.mxu0
      %v5003 = vadd.f32 %v4914, %v5002
      %v5004 = vpop.f32.mrf.mxu0
      %v5005 = vadd.f32 %v4916, %v5004
      %5006 = vmatmul.bf16.gmra.mxu0 %v1961
      %v5007 = vpop.f32.mrf.mxu0
      %v5008 = vadd.f32 %v4919, %v5007
      %v5009 = vpop.f32.mrf.mxu0
      %v5010 = vadd.f32 %v4921, %v5009
      %5011 = vmatmul.bf16.gmra.mxu0 %v1982
      %v5012 = vpop.f32.mrf.mxu0
      %v5013 = vadd.f32 %v4924, %v5012
      %v5014 = vpop.f32.mrf.mxu0
      %v5015 = vadd.f32 %v4926, %v5014
      %5016 = vmatmul.bf16.gmra.mxu0 %v2003
      %v5017 = vpop.f32.mrf.mxu0
      %v5018 = vadd.f32 %v4929, %v5017
      %v5019 = vpop.f32.mrf.mxu0
      %v5020 = vadd.f32 %v4931, %v5019
      %5021 = vmatmul.bf16.gmra.mxu0 %v2024
      %v5022 = vpop.f32.mrf.mxu0
      %v5023 = vadd.f32 %v4934, %v5022
      %v5024 = vpop.f32.mrf.mxu0
      %v5025 = vadd.f32 %v4936, %v5024
      %5026 = vmatmul.bf16.gmra.mxu0 %v2045
      %v5027 = vpop.f32.mrf.mxu0
      %v5028 = vadd.f32 %v4939, %v5027
      %v5029 = vpop.f32.mrf.mxu0
      %v5030 = vadd.f32 %v4941, %v5029
      %5031 = vmatmul.bf16.gmra.mxu0 %v2066
      %v5032 = vpop.f32.mrf.mxu0
      %v5033 = vadd.f32 %v4944, %v5032
      %v5034 = vpop.f32.mrf.mxu0
      %v5035 = vadd.f32 %v4946, %v5034
      %5036 = vmatmul.bf16.gmra.mxu0 %v2087
      %v5037 = vpop.f32.mrf.mxu0
      %v5038 = vadd.f32 %v4949, %v5037
      %v5039 = vpop.f32.mrf.mxu0
      %v5040 = vadd.f32 %v4951, %v5039
      %5041 = vmatmul.bf16.gmra.mxu0 %v2108
      %v5042 = vpop.f32.mrf.mxu0
      %v5043 = vadd.f32 %v4954, %v5042
      %v5044 = vpop.f32.mrf.mxu0
      %v5045 = vadd.f32 %v4956, %v5044
      %5046 = vmatmul.bf16.gmra.mxu0 %v2129
      %v5047 = vpop.f32.mrf.mxu0
      %v5048 = vadd.f32 %v4959, %v5047
      %v5049 = vpop.f32.mrf.mxu0
      %v5050 = vadd.f32 %v4961, %v5049
      %5051 = vmatmul.bf16.gmra.mxu0 %v2150
      %v5052 = vpop.f32.mrf.mxu0
      %v5053 = vadd.f32 %v4964, %v5052
      %v5054 = vpop.f32.mrf.mxu0
      %v5055 = vadd.f32 %v4966, %v5054
      %5056 = vmatmul.bf16.gmra.mxu0 %v2171
      %v5057 = vpop.f32.mrf.mxu0
      %v5058 = vadd.f32 %v4969, %v5057
      %v5059 = vpop.f32.mrf.mxu0
      %v5060 = vadd.f32 %v4971, %v5059
      %5061 = vmatmul.bf16.gmra.mxu0 %v2192
      %v5062 = vpop.f32.mrf.mxu0
      %v5063 = vadd.f32 %v4974, %v5062
      %v5064 = vpop.f32.mrf.mxu0
      %v5065 = vadd.f32 %v4976, %v5064
      %5066 = vmatmul.bf16.gmra.mxu0 %v2213
      %v5067 = vpop.f32.mrf.mxu0
      %v5068 = vadd.f32 %v4979, %v5067
      %v5069 = vpop.f32.mrf.mxu0
      %v5070 = vadd.f32 %v4981, %v5069
      %5071 = vdwg.mxu0
      %5072 = vmatpush.bf16.msra.mxu0 %v3329
      %5073 = vmatpush.bf16.msra.mxu0 %v3328
      %5074 = vmatpush.bf16.msra.mxu0 %v3327
      %5075 = vmatpush.bf16.msra.mxu0 %v3326
      %5076 = vmatpush.bf16.msra.mxu0 %v3325
      %5077 = vmatpush.bf16.msra.mxu0 %v3324
      %5078 = vmatpush.bf16.msra.mxu0 %v3323
      %5079 = vmatpush.bf16.msra.mxu0 %v3322
      %5080 = vmatmul.bf16.gmra.mxu0 %v1899
      %v5081 = vpop.f32.mrf.mxu0
      %v5082 = vadd.f32 %v4993, %v5081
      %v5083 = vpop.f32.mrf.mxu0
      %v5084 = vadd.f32 %v4995, %v5083
      %5085 = vmatmul.bf16.gmra.mxu0 %v1920
      %v5086 = vpop.f32.mrf.mxu0
      %v5087 = vadd.f32 %v4998, %v5086
      %v5088 = vpop.f32.mrf.mxu0
      %v5089 = vadd.f32 %v5000, %v5088
      %5090 = vmatmul.bf16.gmra.mxu0 %v1941
      %v5091 = vpop.f32.mrf.mxu0
      %v5092 = vadd.f32 %v5003, %v5091
      %v5093 = vpop.f32.mrf.mxu0
      %v5094 = vadd.f32 %v5005, %v5093
      %5095 = vmatmul.bf16.gmra.mxu0 %v1962
      %v5096 = vpop.f32.mrf.mxu0
      %v5097 = vadd.f32 %v5008, %v5096
      %v5098 = vpop.f32.mrf.mxu0
      %v5099 = vadd.f32 %v5010, %v5098
      %5100 = vmatmul.bf16.gmra.mxu0 %v1983
      %v5101 = vpop.f32.mrf.mxu0
      %v5102 = vadd.f32 %v5013, %v5101
      %v5103 = vpop.f32.mrf.mxu0
      %v5104 = vadd.f32 %v5015, %v5103
      %5105 = vmatmul.bf16.gmra.mxu0 %v2004
      %v5106 = vpop.f32.mrf.mxu0
      %v5107 = vadd.f32 %v5018, %v5106
      %v5108 = vpop.f32.mrf.mxu0
      %v5109 = vadd.f32 %v5020, %v5108
      %5110 = vmatmul.bf16.gmra.mxu0 %v2025
      %v5111 = vpop.f32.mrf.mxu0
      %v5112 = vadd.f32 %v5023, %v5111
      %v5113 = vpop.f32.mrf.mxu0
      %v5114 = vadd.f32 %v5025, %v5113
      %5115 = vmatmul.bf16.gmra.mxu0 %v2046
      %v5116 = vpop.f32.mrf.mxu0
      %v5117 = vadd.f32 %v5028, %v5116
      %v5118 = vpop.f32.mrf.mxu0
      %v5119 = vadd.f32 %v5030, %v5118
      %5120 = vmatmul.bf16.gmra.mxu0 %v2067
      %v5121 = vpop.f32.mrf.mxu0
      %v5122 = vadd.f32 %v5033, %v5121
      %v5123 = vpop.f32.mrf.mxu0
      %v5124 = vadd.f32 %v5035, %v5123
      %5125 = vmatmul.bf16.gmra.mxu0 %v2088
      %v5126 = vpop.f32.mrf.mxu0
      %v5127 = vadd.f32 %v5038, %v5126
      %v5128 = vpop.f32.mrf.mxu0
      %v5129 = vadd.f32 %v5040, %v5128
      %5130 = vmatmul.bf16.gmra.mxu0 %v2109
      %v5131 = vpop.f32.mrf.mxu0
      %v5132 = vadd.f32 %v5043, %v5131
      %v5133 = vpop.f32.mrf.mxu0
      %v5134 = vadd.f32 %v5045, %v5133
      %5135 = vmatmul.bf16.gmra.mxu0 %v2130
      %v5136 = vpop.f32.mrf.mxu0
      %v5137 = vadd.f32 %v5048, %v5136
      %v5138 = vpop.f32.mrf.mxu0
      %v5139 = vadd.f32 %v5050, %v5138
      %5140 = vmatmul.bf16.gmra.mxu0 %v2151
      %v5141 = vpop.f32.mrf.mxu0
      %v5142 = vadd.f32 %v5053, %v5141
      %v5143 = vpop.f32.mrf.mxu0
      %v5144 = vadd.f32 %v5055, %v5143
      %5145 = vmatmul.bf16.gmra.mxu0 %v2172
      %v5146 = vpop.f32.mrf.mxu0
      %v5147 = vadd.f32 %v5058, %v5146
      %v5148 = vpop.f32.mrf.mxu0
      %v5149 = vadd.f32 %v5060, %v5148
      %5150 = vmatmul.bf16.gmra.mxu0 %v2193
      %v5151 = vpop.f32.mrf.mxu0
      %v5152 = vadd.f32 %v5063, %v5151
      %v5153 = vpop.f32.mrf.mxu0
      %v5154 = vadd.f32 %v5065, %v5153
      %5155 = vmatmul.bf16.gmra.mxu0 %v2214
      %v5156 = vpop.f32.mrf.mxu0
      %v5157 = vadd.f32 %v5068, %v5156
      %v5158 = vpop.f32.mrf.mxu0
      %v5159 = vadd.f32 %v5070, %v5158
      %5160 = vdwg.mxu0
      %5161 = vmatpush.bf16.msra.mxu0 %v3337
      %5162 = vmatpush.bf16.msra.mxu0 %v3336
      %5163 = vmatpush.bf16.msra.mxu0 %v3335
      %5164 = vmatpush.bf16.msra.mxu0 %v3334
      %5165 = vmatpush.bf16.msra.mxu0 %v3333
      %5166 = vmatpush.bf16.msra.mxu0 %v3332
      %5167 = vmatpush.bf16.msra.mxu0 %v3331
      %5168 = vmatpush.bf16.msra.mxu0 %v3330
      %5169 = vmatmul.bf16.gmra.mxu0 %v1900
      %v5170 = vpop.f32.mrf.mxu0
      %v5171 = vadd.f32 %v5082, %v5170
      %v5172 = vpop.f32.mrf.mxu0
      %v5173 = vadd.f32 %v5084, %v5172
      %5174 = vmatmul.bf16.gmra.mxu0 %v1921
      %v5175 = vpop.f32.mrf.mxu0
      %v5176 = vadd.f32 %v5087, %v5175
      %v5177 = vpop.f32.mrf.mxu0
      %v5178 = vadd.f32 %v5089, %v5177
      %5179 = vmatmul.bf16.gmra.mxu0 %v1942
      %v5180 = vpop.f32.mrf.mxu0
      %v5181 = vadd.f32 %v5092, %v5180
      %v5182 = vpop.f32.mrf.mxu0
      %v5183 = vadd.f32 %v5094, %v5182
      %5184 = vmatmul.bf16.gmra.mxu0 %v1963
      %v5185 = vpop.f32.mrf.mxu0
      %v5186 = vadd.f32 %v5097, %v5185
      %v5187 = vpop.f32.mrf.mxu0
      %v5188 = vadd.f32 %v5099, %v5187
      %5189 = vmatmul.bf16.gmra.mxu0 %v1984
      %v5190 = vpop.f32.mrf.mxu0
      %v5191 = vadd.f32 %v5102, %v5190
      %v5192 = vpop.f32.mrf.mxu0
      %v5193 = vadd.f32 %v5104, %v5192
      %5194 = vmatmul.bf16.gmra.mxu0 %v2005
      %v5195 = vpop.f32.mrf.mxu0
      %v5196 = vadd.f32 %v5107, %v5195
      %v5197 = vpop.f32.mrf.mxu0
      %v5198 = vadd.f32 %v5109, %v5197
      %5199 = vmatmul.bf16.gmra.mxu0 %v2026
      %v5200 = vpop.f32.mrf.mxu0
      %v5201 = vadd.f32 %v5112, %v5200
      %v5202 = vpop.f32.mrf.mxu0
      %v5203 = vadd.f32 %v5114, %v5202
      %5204 = vmatmul.bf16.gmra.mxu0 %v2047
      %v5205 = vpop.f32.mrf.mxu0
      %v5206 = vadd.f32 %v5117, %v5205
      %v5207 = vpop.f32.mrf.mxu0
      %v5208 = vadd.f32 %v5119, %v5207
      %5209 = vmatmul.bf16.gmra.mxu0 %v2068
      %v5210 = vpop.f32.mrf.mxu0
      %v5211 = vadd.f32 %v5122, %v5210
      %v5212 = vpop.f32.mrf.mxu0
      %v5213 = vadd.f32 %v5124, %v5212
      %5214 = vmatmul.bf16.gmra.mxu0 %v2089
      %v5215 = vpop.f32.mrf.mxu0
      %v5216 = vadd.f32 %v5127, %v5215
      %v5217 = vpop.f32.mrf.mxu0
      %v5218 = vadd.f32 %v5129, %v5217
      %5219 = vmatmul.bf16.gmra.mxu0 %v2110
      %v5220 = vpop.f32.mrf.mxu0
      %v5221 = vadd.f32 %v5132, %v5220
      %v5222 = vpop.f32.mrf.mxu0
      %v5223 = vadd.f32 %v5134, %v5222
      %5224 = vmatmul.bf16.gmra.mxu0 %v2131
      %v5225 = vpop.f32.mrf.mxu0
      %v5226 = vadd.f32 %v5137, %v5225
      %v5227 = vpop.f32.mrf.mxu0
      %v5228 = vadd.f32 %v5139, %v5227
      %5229 = vmatmul.bf16.gmra.mxu0 %v2152
      %v5230 = vpop.f32.mrf.mxu0
      %v5231 = vadd.f32 %v5142, %v5230
      %v5232 = vpop.f32.mrf.mxu0
      %v5233 = vadd.f32 %v5144, %v5232
      %5234 = vmatmul.bf16.gmra.mxu0 %v2173
      %v5235 = vpop.f32.mrf.mxu0
      %v5236 = vadd.f32 %v5147, %v5235
      %v5237 = vpop.f32.mrf.mxu0
      %v5238 = vadd.f32 %v5149, %v5237
      %5239 = vmatmul.bf16.gmra.mxu0 %v2194
      %v5240 = vpop.f32.mrf.mxu0
      %v5241 = vadd.f32 %v5152, %v5240
      %v5242 = vpop.f32.mrf.mxu0
      %v5243 = vadd.f32 %v5154, %v5242
      %5244 = vmatmul.bf16.gmra.mxu0 %v2215
      %v5245 = vpop.f32.mrf.mxu0
      %v5246 = vadd.f32 %v5157, %v5245
      %v5247 = vpop.f32.mrf.mxu0
      %v5248 = vadd.f32 %v5159, %v5247
      %5249 = vdwg.mxu0
      %5250 = vmatpush.bf16.msra.mxu0 %v3345
      %5251 = vmatpush.bf16.msra.mxu0 %v3344
      %5252 = vmatpush.bf16.msra.mxu0 %v3343
      %5253 = vmatpush.bf16.msra.mxu0 %v3342
      %5254 = vmatpush.bf16.msra.mxu0 %v3341
      %5255 = vmatpush.bf16.msra.mxu0 %v3340
      %5256 = vmatpush.bf16.msra.mxu0 %v3339
      %5257 = vmatpush.bf16.msra.mxu0 %v3338
      %5258 = vmatmul.bf16.gmra.mxu0 %v1901
      %v5259 = vpop.f32.mrf.mxu0
      %v5260 = vadd.f32 %v5171, %v5259
      %v5261 = vpop.f32.mrf.mxu0
      %v5262 = vadd.f32 %v5173, %v5261
      %5263 = vmatmul.bf16.gmra.mxu0 %v1922
      %v5264 = vpop.f32.mrf.mxu0
      %v5265 = vadd.f32 %v5176, %v5264
      %v5266 = vpop.f32.mrf.mxu0
      %v5267 = vadd.f32 %v5178, %v5266
      %5268 = vmatmul.bf16.gmra.mxu0 %v1943
      %v5269 = vpop.f32.mrf.mxu0
      %v5270 = vadd.f32 %v5181, %v5269
      %v5271 = vpop.f32.mrf.mxu0
      %v5272 = vadd.f32 %v5183, %v5271
      %5273 = vmatmul.bf16.gmra.mxu0 %v1964
      %v5274 = vpop.f32.mrf.mxu0
      %v5275 = vadd.f32 %v5186, %v5274
      %v5276 = vpop.f32.mrf.mxu0
      %v5277 = vadd.f32 %v5188, %v5276
      %5278 = vmatmul.bf16.gmra.mxu0 %v1985
      %v5279 = vpop.f32.mrf.mxu0
      %v5280 = vadd.f32 %v5191, %v5279
      %v5281 = vpop.f32.mrf.mxu0
      %v5282 = vadd.f32 %v5193, %v5281
      %5283 = vmatmul.bf16.gmra.mxu0 %v2006
      %v5284 = vpop.f32.mrf.mxu0
      %v5285 = vadd.f32 %v5196, %v5284
      %v5286 = vpop.f32.mrf.mxu0
      %v5287 = vadd.f32 %v5198, %v5286
      %5288 = vmatmul.bf16.gmra.mxu0 %v2027
      %v5289 = vpop.f32.mrf.mxu0
      %v5290 = vadd.f32 %v5201, %v5289
      %v5291 = vpop.f32.mrf.mxu0
      %v5292 = vadd.f32 %v5203, %v5291
      %5293 = vmatmul.bf16.gmra.mxu0 %v2048
      %v5294 = vpop.f32.mrf.mxu0
      %v5295 = vadd.f32 %v5206, %v5294
      %v5296 = vpop.f32.mrf.mxu0
      %v5297 = vadd.f32 %v5208, %v5296
      %5298 = vmatmul.bf16.gmra.mxu0 %v2069
      %v5299 = vpop.f32.mrf.mxu0
      %v5300 = vadd.f32 %v5211, %v5299
      %v5301 = vpop.f32.mrf.mxu0
      %v5302 = vadd.f32 %v5213, %v5301
      %5303 = vmatmul.bf16.gmra.mxu0 %v2090
      %v5304 = vpop.f32.mrf.mxu0
      %v5305 = vadd.f32 %v5216, %v5304
      %v5306 = vpop.f32.mrf.mxu0
      %v5307 = vadd.f32 %v5218, %v5306
      %5308 = vmatmul.bf16.gmra.mxu0 %v2111
      %v5309 = vpop.f32.mrf.mxu0
      %v5310 = vadd.f32 %v5221, %v5309
      %v5311 = vpop.f32.mrf.mxu0
      %v5312 = vadd.f32 %v5223, %v5311
      %5313 = vmatmul.bf16.gmra.mxu0 %v2132
      %v5314 = vpop.f32.mrf.mxu0
      %v5315 = vadd.f32 %v5226, %v5314
      %v5316 = vpop.f32.mrf.mxu0
      %v5317 = vadd.f32 %v5228, %v5316
      %5318 = vmatmul.bf16.gmra.mxu0 %v2153
      %v5319 = vpop.f32.mrf.mxu0
      %v5320 = vadd.f32 %v5231, %v5319
      %v5321 = vpop.f32.mrf.mxu0
      %v5322 = vadd.f32 %v5233, %v5321
      %5323 = vmatmul.bf16.gmra.mxu0 %v2174
      %v5324 = vpop.f32.mrf.mxu0
      %v5325 = vadd.f32 %v5236, %v5324
      %v5326 = vpop.f32.mrf.mxu0
      %v5327 = vadd.f32 %v5238, %v5326
      %5328 = vmatmul.bf16.gmra.mxu0 %v2195
      %v5329 = vpop.f32.mrf.mxu0
      %v5330 = vadd.f32 %v5241, %v5329
      %v5331 = vpop.f32.mrf.mxu0
      %v5332 = vadd.f32 %v5243, %v5331
      %5333 = vmatmul.bf16.gmra.mxu0 %v2216
      %v5334 = vpop.f32.mrf.mxu0
      %v5335 = vadd.f32 %v5246, %v5334
      %v5336 = vpop.f32.mrf.mxu0
      %v5337 = vadd.f32 %v5248, %v5336
      %5338 = vdwg.mxu0
      %5339 = vmatpush.bf16.msra.mxu0 0
      %5340 = vmatpush.bf16.msra.mxu0 0
      %5341 = vmatpush.bf16.msra.mxu0 0
      %5342 = vmatpush.bf16.msra.mxu0 0
      %5343 = vmatpush.bf16.msra.mxu0 0
      %5344 = vmatpush.bf16.msra.mxu0 0
      %5345 = vmatpush.bf16.msra.mxu0 %v3347
      %5346 = vmatpush.bf16.msra.mxu0 %v3346
      %5347 = vmatmul.bf16.gmra.mxu0 %v3512
      %v5348 = vpop.f32.mrf.mxu0
      %v5349 = vadd.f32 %v5260, %v5348
      %v5350 = vpop.f32.mrf.mxu0
      %v5351 = vadd.f32 %v5262, %v5350
      %5352 = vmatmul.bf16.gmra.mxu0 %v3515
      %v5353 = vpop.f32.mrf.mxu0
      %v5354 = vadd.f32 %v5265, %v5353
      %v5355 = vpop.f32.mrf.mxu0
      %v5356 = vadd.f32 %v5267, %v5355
      %5357 = vmatmul.bf16.gmra.mxu0 %v3518
      %v5358 = vpop.f32.mrf.mxu0
      %v5359 = vadd.f32 %v5270, %v5358
      %v5360 = vpop.f32.mrf.mxu0
      %v5361 = vadd.f32 %v5272, %v5360
      %5362 = vmatmul.bf16.gmra.mxu0 %v3521
      %v5363 = vpop.f32.mrf.mxu0
      %v5364 = vadd.f32 %v5275, %v5363
      %v5365 = vpop.f32.mrf.mxu0
      %v5366 = vadd.f32 %v5277, %v5365
      %5367 = vmatmul.bf16.gmra.mxu0 %v3524
      %v5368 = vpop.f32.mrf.mxu0
      %v5369 = vadd.f32 %v5280, %v5368
      %v5370 = vpop.f32.mrf.mxu0
      %v5371 = vadd.f32 %v5282, %v5370
      %5372 = vmatmul.bf16.gmra.mxu0 %v3527
      %v5373 = vpop.f32.mrf.mxu0
      %v5374 = vadd.f32 %v5285, %v5373
      %v5375 = vpop.f32.mrf.mxu0
      %v5376 = vadd.f32 %v5287, %v5375
      %5377 = vmatmul.bf16.gmra.mxu0 %v3530
      %v5378 = vpop.f32.mrf.mxu0
      %v5379 = vadd.f32 %v5290, %v5378
      %v5380 = vpop.f32.mrf.mxu0
      %v5381 = vadd.f32 %v5292, %v5380
      %5382 = vmatmul.bf16.gmra.mxu0 %v3533
      %v5383 = vpop.f32.mrf.mxu0
      %v5384 = vadd.f32 %v5295, %v5383
      %v5385 = vpop.f32.mrf.mxu0
      %v5386 = vadd.f32 %v5297, %v5385
      %5387 = vmatmul.bf16.gmra.mxu0 %v3536
      %v5388 = vpop.f32.mrf.mxu0
      %v5389 = vadd.f32 %v5300, %v5388
      %v5390 = vpop.f32.mrf.mxu0
      %v5391 = vadd.f32 %v5302, %v5390
      %5392 = vmatmul.bf16.gmra.mxu0 %v3539
      %v5393 = vpop.f32.mrf.mxu0
      %v5394 = vadd.f32 %v5305, %v5393
      %v5395 = vpop.f32.mrf.mxu0
      %v5396 = vadd.f32 %v5307, %v5395
      %5397 = vmatmul.bf16.gmra.mxu0 %v3542
      %v5398 = vpop.f32.mrf.mxu0
      %v5399 = vadd.f32 %v5310, %v5398
      %v5400 = vpop.f32.mrf.mxu0
      %v5401 = vadd.f32 %v5312, %v5400
      %5402 = vmatmul.bf16.gmra.mxu0 %v3545
      %v5403 = vpop.f32.mrf.mxu0
      %v5404 = vadd.f32 %v5315, %v5403
      %v5405 = vpop.f32.mrf.mxu0
      %v5406 = vadd.f32 %v5317, %v5405
      %5407 = vmatmul.bf16.gmra.mxu0 %v3548
      %v5408 = vpop.f32.mrf.mxu0
      %v5409 = vadd.f32 %v5320, %v5408
      %v5410 = vpop.f32.mrf.mxu0
      %v5411 = vadd.f32 %v5322, %v5410
      %5412 = vmatmul.bf16.gmra.mxu0 %v3551
      %v5413 = vpop.f32.mrf.mxu0
      %v5414 = vadd.f32 %v5325, %v5413
      %v5415 = vpop.f32.mrf.mxu0
      %v5416 = vadd.f32 %v5327, %v5415
      %5417 = vmatmul.bf16.gmra.mxu0 %v3554
      %v5418 = vpop.f32.mrf.mxu0
      %v5419 = vadd.f32 %v5330, %v5418
      %v5420 = vpop.f32.mrf.mxu0
      %v5421 = vadd.f32 %v5332, %v5420
      %5422 = vmatmul.bf16.gmra.mxu0 %v3557
      %v5423 = vpop.f32.mrf.mxu0
      %v5424 = vadd.f32 %v5335, %v5423
      %v5425 = vpop.f32.mrf.mxu0
      %v5426 = vadd.f32 %v5337, %v5425
      %5427 = vdwg.mxu0
      %v5428 = vmax.f32 %v5349, 0.0
      %v5429 = vmax.f32 %v5351, 0.0
      %v5430 = vmax.f32 %v5354, 0.0
      %v5431 = vmax.f32 %v5356, 0.0
      %v5432 = vmax.f32 %v5359, 0.0
      %v5433 = vmax.f32 %v5361, 0.0
      %v5434 = vmax.f32 %v5364, 0.0
      %v5435 = vmax.f32 %v5366, 0.0
      %v5436 = vmax.f32 %v5369, 0.0
      %v5437 = vmax.f32 %v5371, 0.0
      %v5438 = vmax.f32 %v5374, 0.0
      %v5439 = vmax.f32 %v5376, 0.0
      %v5440 = vmax.f32 %v5379, 0.0
      %v5441 = vmax.f32 %v5381, 0.0
      %v5442 = vmax.f32 %v5384, 0.0
      %v5443 = vmax.f32 %v5386, 0.0
      %v5444 = vmax.f32 %v5389, 0.0
      %v5445 = vmax.f32 %v5391, 0.0
      %v5446 = vmax.f32 %v5394, 0.0
      %v5447 = vmax.f32 %v5396, 0.0
      %v5448 = vmax.f32 %v5399, 0.0
      %v5449 = vmax.f32 %v5401, 0.0
      %v5450 = vmax.f32 %v5404, 0.0
      %v5451 = vmax.f32 %v5406, 0.0
      %v5452 = vmax.f32 %v5409, 0.0
      %v5453 = vmax.f32 %v5411, 0.0
      %v5454 = vmax.f32 %v5414, 0.0
      %v5455 = vmax.f32 %v5416, 0.0
      %v5456 = vmax.f32 %v5419, 0.0
      %v5457 = vmax.f32 %v5421, 0.0
      %v5458 = vmax.f32 %v5424, 0.0
      %v5459 = vmax.f32 %v5426, 0.0
      %v5460 = vpack.c.bf16 %v5428, %v5428
      %v5461 = vpack.c.bf16 %v5429, %v5429
      %v5462 = vpack.c.bf16 %v5430, %v5430
      %v5463 = vpack.c.bf16 %v5431, %v5431
      %v5464 = vpack.c.bf16 %v5432, %v5432
      %v5465 = vpack.c.bf16 %v5433, %v5433
      %v5466 = vpack.c.bf16 %v5434, %v5434
      %v5467 = vpack.c.bf16 %v5435, %v5435
      %v5468 = vpack.c.bf16 %v5436, %v5436
      %v5469 = vpack.c.bf16 %v5437, %v5437
      %v5470 = vpack.c.bf16 %v5438, %v5438
      %v5471 = vpack.c.bf16 %v5439, %v5439
      %v5472 = vpack.c.bf16 %v5440, %v5440
      %v5473 = vpack.c.bf16 %v5441, %v5441
      %v5474 = vpack.c.bf16 %v5442, %v5442
      %v5475 = vpack.c.bf16 %v5443, %v5443
      %v5476 = vpack.c.bf16 %v5444, %v5444
      %v5477 = vpack.c.bf16 %v5445, %v5445
      %v5478 = vpack.c.bf16 %v5446, %v5446
      %v5479 = vpack.c.bf16 %v5447, %v5447
      %v5480 = vpack.c.bf16 %v5448, %v5448
      %v5481 = vpack.c.bf16 %v5449, %v5449
      %v5482 = vpack.c.bf16 %v5450, %v5450
      %v5483 = vpack.c.bf16 %v5451, %v5451
      %v5484 = vpack.c.bf16 %v5452, %v5452
      %v5485 = vpack.c.bf16 %v5453, %v5453
      %v5486 = vpack.c.bf16 %v5454, %v5454
      %v5487 = vpack.c.bf16 %v5455, %v5455
      %v5488 = vpack.c.bf16 %v5456, %v5456
      %v5489 = vpack.c.bf16 %v5457, %v5457
      %v5490 = vpack.c.bf16 %v5458, %v5458
      %v5491 = vpack.c.bf16 %v5459, %v5459
      %vm5492 = vcmask 519168
      %5493 = vst.msk [vmem:[%s175] sm:$0xf] %vm5492, %v5460
      %5494 = vst.msk [vmem:[%s175 + $0x4] sm:$0xf] %vm5492, %v5461
      %5495 = vst.msk [vmem:[%s175 + $0x8] sm:$0xf] %vm5492, %v5462
      %5496 = vst.msk [vmem:[%s175 + $0xc] sm:$0xf] %vm5492, %v5463
      %5497 = vst.msk [vmem:[%s175 + $0x10] sm:$0xf] %vm5492, %v5464
      %5498 = vst.msk [vmem:[%s175 + $0x14] sm:$0xf] %vm5492, %v5465
      %5499 = vst.msk [vmem:[%s175 + $0x18] sm:$0xf] %vm5492, %v5466
      %5500 = vst.msk [vmem:[%s175 + $0x1c] sm:$0xf] %vm5492, %v5467
      %5501 = vst.msk [vmem:[%s175 + $0x20] sm:$0xf] %vm5492, %v5468
      %5502 = vst.msk [vmem:[%s175 + $0x24] sm:$0xf] %vm5492, %v5469
      %5503 = vst.msk [vmem:[%s175 + $0x28] sm:$0xf] %vm5492, %v5470
      %5504 = vst.msk [vmem:[%s175 + $0x2c] sm:$0xf] %vm5492, %v5471
      %5505 = vst.msk [vmem:[%s175 + $0x30] sm:$0xf] %vm5492, %v5472
      %5506 = vst.msk [vmem:[%s175 + $0x34] sm:$0xf] %vm5492, %v5473
      %5507 = vst.msk [vmem:[%s175 + $0x38] sm:$0xf] %vm5492, %v5474
      %5508 = vst.msk [vmem:[%s175 + $0x3c] sm:$0xf] %vm5492, %v5475
      %5509 = vst.msk [vmem:[%s175 + $0x40] sm:$0xf] %vm5492, %v5476
      %5510 = vst.msk [vmem:[%s175 + $0x44] sm:$0xf] %vm5492, %v5477
      %5511 = vst.msk [vmem:[%s175 + $0x48] sm:$0xf] %vm5492, %v5478
      %5512 = vst.msk [vmem:[%s175 + $0x4c] sm:$0xf] %vm5492, %v5479
      %5513 = vst.msk [vmem:[%s175 + $0x50] sm:$0xf] %vm5492, %v5480
      %5514 = vst.msk [vmem:[%s175 + $0x54] sm:$0xf] %vm5492, %v5481
      %5515 = vst.msk [vmem:[%s175 + $0x58] sm:$0xf] %vm5492, %v5482
      %5516 = vst.msk [vmem:[%s175 + $0x5c] sm:$0xf] %vm5492, %v5483
      %5517 = vst.msk [vmem:[%s175 + $0x60] sm:$0xf] %vm5492, %v5484
      %5518 = vst.msk [vmem:[%s175 + $0x64] sm:$0xf] %vm5492, %v5485
      %5519 = vst.msk [vmem:[%s175 + $0x68] sm:$0xf] %vm5492, %v5486
      %5520 = vst.msk [vmem:[%s175 + $0x6c] sm:$0xf] %vm5492, %v5487
      %5521 = vst.msk [vmem:[%s175 + $0x70] sm:$0xf] %vm5492, %v5488
      %5522 = vst.msk [vmem:[%s175 + $0x74] sm:$0xf] %vm5492, %v5489
      %5523 = vst.msk [vmem:[%s175 + $0x78] sm:$0xf] %vm5492, %v5490
      %5524 = vst.msk [vmem:[%s175 + $0x7c] sm:$0xf] %vm5492, %v5491
      %s5525 = smul.u32 32, %s14
      %p5526 = scmp.lt.s32.totalorder %s5525, 127
      %s5527 = scalar_select %p5526, %s5525, 127
      %s5528 = smul.addr %s5527, 4
      %s5529 = scalar_lea.vmem %s3, %s5528
      // Predicated region
      $region33: #{tpu_custom_call.1} parent=31 // pred_check
        %p5530 = pneg %p100
      $region34: #{tpu_custom_call.1} parent=31 // pred_check_branch
        %5532 = sbr.rel (%p5530) target = $region36
      $region35: #{tpu_custom_call.1} parent=31 // pred_region
        %s5533 = smul.u32 32, %s14
      $region36: #{tpu_custom_call.1} parent=31 // pred_fallthru
        _
    $region32: #{tpu_custom_call.1} parent=5 // pred_fallthru
      _
    %p5534 = scmp.le.s32.totalorder 2, %s9
    // Predicated region
    $region37: #{tpu_custom_call.1} parent=5 // pred_check
      %p5535 = pneg %p5534
    $region38: #{tpu_custom_call.1} parent=5 // pred_check_branch
      %5537 = sbr.rel (%p5535) target = $region40
    $region39: #{tpu_custom_call.1} parent=5 // pred_region
      %s5538 = ssub.s32 %s9, 2
      // Predicated region
      $region41: #{tpu_custom_call.1} parent=39 // pred_check
        %p5539 = pneg %p106
      $region42: #{tpu_custom_call.1} parent=39 // pred_check_branch
        %5541 = sbr.rel (%p5539) target = $region44
      $region43: #{tpu_custom_call.1} parent=39 // pred_region
        %s5542 = smul.u32 32, %s15
        %p5543 = scmp.lt.s32.totalorder %s5542, 127
        %s5544 = scalar_select %p5543, %s5542, 127
        %s5545 = smul.addr %s5544, 4
        %s5546 = scalar_lea.vmem %s3, %s5545
      $region44: #{tpu_custom_call.1} parent=39 // pred_fallthru
        _
    $region40: #{tpu_custom_call.1} parent=5 // pred_fallthru
      _
  $region6: #{tpu_custom_call.1} parent=0 // loop_footer
    %s13 = sadd.s32 1, %s9
  $region7: #{tpu_custom_call.1} parent=0 // loop_footer_branch
    %8 = sbr.rel target = $region3
  $region8: #{tpu_custom_call.1} parent=0 // loop_exit
    _

</llo_original>
